<compile_context>
chip_gen: v7x
topology: tpu7x:2x2x1
jax: 0.10.0
libtpu: 0.0.40
codegen_flags: <defaults>
</compile_context>

<pallas_src>
import jax
import jax.numpy as jnp
from jax import lax
from jax.experimental import pallas as pl
from jax.experimental.pallas import tpu as pltpu


def _round_up(a, b):
    return -(-a // b) * b


def _make_conv_stats_kernel(shifts, tm, ci_p, co):
    """Conv tile: in-kernel im2col -> one fused MXU dot -> bf16 tile store,
    plus masked BN partial sums computed on the MXU."""

    def kernel(xa_ref, xb_ref, w_ref, mask_ref, y_ref, stats_ref, patch_ref):
        # (Ci_p, tm + halo) window: this tile + narrow halo (not a full tile).
        xwin = jnp.concatenate([xa_ref[...], xb_ref[...]],
                               axis=1).astype(jnp.float32)

        # In-kernel im2col: 27 statically shifted lane windows stacked along
        # sublanes in VMEM scratch (8-row aligned f32 stores, unrolled loop).
        for t, s in enumerate(shifts):
            patch_ref[pl.ds(t * ci_p, ci_p), :] = xwin[:, s:s + tm]

        # Single fused matmul, K = 27 * Ci_p (vs. 27 tiny K=Ci dots before).
        acc = jnp.dot(w_ref[...], patch_ref[...],
                      preferred_element_type=jnp.float32)        # (Co, tm) f32

        y_ref[...] = acc.astype(jnp.bfloat16)                    # lane-dense

        # BN partial statistics over valid voxels only.  The lane reduction is
        # a dot_general against the broadcast validity mask, so it runs on the
        # MXU (huge slack) instead of the XLU.  ssq uses the f32 accumulator.
        m8 = jnp.broadcast_to(mask_ref[...].astype(jnp.float32), (8, tm))
        dn = (((1,), (1,)), ((), ()))
        ssum = lax.dot_general(acc, m8, dn,
                               preferred_element_type=jnp.float32)   # (Co, 8)
        ssq = lax.dot_general(acc * acc, m8, dn,
                              preferred_element_type=jnp.float32)
        stats_ref[0, 0] = ssum[:, 0:1]
        stats_ref[0, 1] = ssq[:, 0:1]

    return kernel


def _bn_relu_kernel(y_ref, scale_ref, shift_ref, o_ref):
    """Fused affine batch-norm normalize + ReLU (lane-dense elementwise)."""
    y = y_ref[...].astype(jnp.float32)
    o_ref[...] = jnp.maximum(y * scale_ref[...] + shift_ref[...], 0.0)


def deconv3d_bn_relu(x, w, gamma, beta, *, eps=1e-5):
    """x: (N, C_in, D, H, W) f32;  w: (C_in, C_out, 3, 3, 3) f32 (torch layout)."""
    N, Ci, D, H, W = x.shape
    Ci2, Co, k0, k1, k2 = w.shape
    assert Ci == Ci2 and k0 == k1 == k2 == 3

    Do, Ho, Wo = D + 2, H + 2, W + 2          # ConvTranspose3d(k=3, s=1) output
    Dp, Hp, Wp = D + 4, H + 4, W + 4          # input zero-padded by k-1 = 2
    Mp = N * Dp * Hp * Wp                     # wide (padded-grid) voxel count
    M = N * Do * Ho * Wo                      # valid voxel count (BN population)

    # flat-index shift of each (kd, kh, kw) tap on the padded grid
    shifts = tuple((kd * Hp + kh) * Wp + kw
                   for kd in range(3) for kh in range(3) for kw in range(3))
    smax = shifts[-1]

    # Narrow halo instead of a full second tile.  tm is a multiple of halo so
    # the halo can be addressed with a plain BlockSpec; tm no longer has to
    # cover smax itself, and is capped small enough for v7x's 64 MiB VMEM.
    halo = _round_up(smax, 128)
    tm = halo * max(1, -(-1024 // halo))      # smallest multiple of halo >= 1024
    while tm < 2048 and Mp >= 16 * tm:        # grow toward ~2K lanes on big inputs
        tm *= 2
    G = -(-Mp // tm)                          # number of conv/stats blocks
    r = tm // halo                            # halo block stride (in halo units)

    Ci_p = _round_up(Ci, 8)                   # sublane alignment for patch stores

    # ---- glue: channels-on-sublane flat bf16 input slab, fused weights, mask --
    xp = jnp.pad(x, ((0, 0), (0, 0), (2, 2), (2, 2), (2, 2)))    # (N,Ci,Dp,Hp,Wp)
    x_t = jnp.transpose(xp, (1, 0, 2, 3, 4)).reshape(Ci, Mp)
    x_t = jnp.pad(x_t, ((0, Ci_p - Ci), (0, G * tm + halo - Mp)))
    x_t = x_t.astype(jnp.bfloat16)

    # transposed conv == direct conv with the spatially flipped kernel; fuse all
    # 27 taps into one (Co, 27*Ci_p) matrix matching the im2col row order.
    w_flip = w[:, :, ::-1, ::-1, ::-1]                           # (Ci,Co,3,3,3)
    w_fused = jnp.transpose(w_flip, (1, 2, 3, 4, 0))             # (Co,3,3,3,Ci)
    w_fused = jnp.pad(w_fused, ((0, 0), (0, 0), (0, 0), (0, 0), (0, Ci_p - Ci)))
    w_fused = w_fused.reshape(Co, 27 * Ci_p).astype(jnp.float32)

    valid = ((jnp.arange(Dp) < Do)[:, None, None]
             & (jnp.arange(Hp) < Ho)[None, :, None]
             & (jnp.arange(Wp) < Wo)[None, None, :])
    valid = jnp.broadcast_to(valid[None], (N, Dp, Hp, Wp)).reshape(1, Mp)
    mask = jnp.pad(valid.astype(jnp.bfloat16), ((0, 0), (0, G * tm - Mp)))

    cparams = pltpu.CompilerParams(
        dimension_semantics=("parallel",),    # per-block partials -> no carry,
        vmem_limit_bytes=40 * 1024 * 1024)    # v7x-safe (< 64 MiB physical)

    # ---- Pallas kernel 1: fused-K conv (in-kernel im2col) + BN partial sums --
    kernel1 = _make_conv_stats_kernel(shifts, tm, Ci_p, Co)
    y_wide, stats = pl.pallas_call(
        kernel1,
        out_shape=(jax.ShapeDtypeStruct((Co, G * tm), jnp.bfloat16),
                   jax.ShapeDtypeStruct((G, 2, Co, 1), jnp.float32)),
        grid=(G,),
        in_specs=[pl.BlockSpec((Ci_p, tm), lambda i: (0, i)),            # tile
                  pl.BlockSpec((Ci_p, halo), lambda i: (0, (i + 1) * r)),  # halo
                  pl.BlockSpec((Co, 27 * Ci_p), lambda i: (0, 0)),
                  pl.BlockSpec((1, tm), lambda i: (0, i))],
        out_specs=(pl.BlockSpec((Co, tm), lambda i: (0, i)),
                   pl.BlockSpec((1, 2, Co, 1), lambda i: (i, 0, 0, 0))),
        scratch_shapes=[pltpu.VMEM((27 * Ci_p, tm), jnp.float32)],
        compiler_params=cparams,
    )(x_t, x_t, w_fused, mask)

    # ---- tiny scalar glue: finalize training-mode BN statistics --------------
    ssum = jnp.sum(stats[:, 0, :, 0], axis=0)
    ssq = jnp.sum(stats[:, 1, :, 0], axis=0)
    mean = ssum / M
    var = jnp.maximum(ssq / M - mean * mean, 0.0)   # f32-acc ssq + clamp
    scale = gamma / jnp.sqrt(var + eps)
    shift = beta - mean * scale

    # ---- Pallas kernel 2: fused normalize + ReLU (mem-bound, bigger tile) ----
    f = 1
    for cand in (4, 2):
        if G % cand == 0 and tm * cand <= 8192:
            f = cand
            break
    tm2, G2 = tm * f, G // f
    out_wide = pl.pallas_call(
        _bn_relu_kernel,
        out_shape=jax.ShapeDtypeStruct((Co, G * tm), jnp.float32),
        grid=(G2,),
        in_specs=[pl.BlockSpec((Co, tm2), lambda i: (0, i)),
                  pl.BlockSpec((Co, 1), lambda i: (0, 0)),
                  pl.BlockSpec((Co, 1), lambda i: (0, 0))],
        out_specs=pl.BlockSpec((Co, tm2), lambda i: (0, i)),
        compiler_params=cparams,
    )(y_wide, scale.reshape(Co, 1), shift.reshape(Co, 1))

    # ---- glue: crop the wide grid back to the true output, go to NCDHW -------
    # TODO(synk): fuse this crop + NCDHW transpose into kernel 2's output spec
    # (index-mapped non-flat layout) to save one HBM round trip on the largest
    # tensor; largest relative win on v5e.
    out = out_wide[:, :Mp].reshape(Co, N, Dp, Hp, Wp)[:, :, :Do, :Ho, :Wo]
    return jnp.transpose(out, (1, 0, 2, 3, 4))

# TODO(synk): BatchNorm3d running_mean / running_var (momentum=0.1) buffer
# updates are training-side state only and do not affect the forward output.


# ---------------- pure-JAX reference (independent scatter formulation) -------
def _reference(x, w, gamma, beta, eps=1e-5):
    N, Ci, D, H, W = x.shape
    Co = w.shape[1]
    y = jnp.zeros((N, Co, D + 2, H + 2, W + 2), jnp.float32)
    for kd in range(3):
        for kh in range(3):
            for kw in range(3):
                contrib = jnp.einsum('nidhw,io->nodhw', x, w[:, :, kd, kh, kw])
                y = y.at[:, :, kd:kd + D, kh:kh + H, kw:kw + W].add(contrib)
    mean = jnp.mean(y, axis=(0, 2, 3, 4), keepdims=True)
    var = jnp.mean((y - mean) ** 2, axis=(0, 2, 3, 4), keepdims=True)
    yn = (y - mean) / jnp.sqrt(var + eps)
    yn = yn * gamma.reshape(1, Co, 1, 1, 1) + beta.reshape(1, Co, 1, 1, 1)
    return jnp.maximum(yn, 0.0)


if __name__ == "__main__":
    key = jax.random.PRNGKey(0)
    kx, kw_ = jax.random.split(key)

    N, C_in, C_out = 2, 4, 8
    D = H = W = 6                        # output spatial = 8

    x = jax.random.normal(kx, (N, C_in, D, H, W), dtype=jnp.float32)

    # deterministic xavier-uniform init of ConvTranspose3d weight (in, out, 3,3,3)
    recept = 3 * 3 * 3
    fan_in, fan_out = C_out * recept, C_in * recept
    bound = (6.0 / (fan_in + fan_out)) ** 0.5
    w = jax.random.uniform(kw_, (C_in, C_out, 3, 3, 3), dtype=jnp.float32,
                           minval=-bound, maxval=bound)
    # BatchNorm3d default / init_bn parameters; bn=True => conv has no bias and
    # BN runs in training mode (batch statistics), matching the module forward.
    gamma = jnp.ones((C_out,), jnp.float32)
    beta = jnp.zeros((C_out,), jnp.float32)

    fn = jax.jit(deconv3d_bn_relu)
    out = jax.block_until_ready(fn(x, w, gamma, beta))

    ref = _reference(x, w, gamma, beta)
    assert out.shape == (N, C_out, D + 2, H + 2, W + 2)
    max_err = jnp.max(jnp.abs(out - ref))
    # bf16 input slab + bf16 conv intermediate -> loosened tolerance vs f32 ref
    assert jnp.allclose(out, ref, atol=5e-2, rtol=5e-2), \
        f"max abs err = {max_err}"

    print("KERNEL_OK")
</pallas_src>

<mosaic_0001>
module attributes {stable_mosaic.version = 11 : i64} {
  func.func @kernel(%arg0: i32, %arg1: memref<8x1024xbf16, #tpu.memory_space<vmem>>, %arg2: memref<8x256xbf16, #tpu.memory_space<vmem>>, %arg3: memref<8x216xf32, #tpu.memory_space<vmem>>, %arg4: memref<1x1024xbf16, #tpu.memory_space<vmem>>, %arg5: memref<8x1024xbf16, #tpu.memory_space<vmem>>, %arg6: memref<1x2x8x1xf32, #tpu.memory_space<vmem>>, %arg7: memref<216x1024xf32, #tpu.memory_space<vmem>>) attributes {dimension_semantics = [#tpu.dimension_semantics<parallel>], iteration_bounds = array<i64: 2>, scalar_prefetch = 0 : i64, scratch_operands = 1 : i64, tpu.core_type = #tpu.core_type<tc>, window_params = [{transform_indices = @transform_0, window_bounds = array<i64: 8, 1024>}, {transform_indices = @transform_1, window_bounds = array<i64: 8, 256>}, {pipeline_mode = #tpu.pipeline_mode<synchronous>, transform_indices = @transform_2, window_bounds = array<i64: 8, 216>}, {transform_indices = @transform_3, window_bounds = array<i64: 1, 1024>}, {transform_indices = @transform_4, window_bounds = array<i64: 8, 1024>}, {transform_indices = @transform_5, window_bounds = array<i64: 1, 2, 8, 1>}]} {
    %c0 = arith.constant 0 : index
    %c0_0 = arith.constant 0 : index
    %0 = vector.load %arg1[%c0, %c0_0] : memref<8x1024xbf16, #tpu.memory_space<vmem>>, vector<8x1024xbf16>
    %c0_1 = arith.constant 0 : index
    %c0_2 = arith.constant 0 : index
    %1 = vector.load %arg2[%c0_1, %c0_2] : memref<8x256xbf16, #tpu.memory_space<vmem>>, vector<8x256xbf16>
    %2 = tpu.concatenate %0, %1 in 1 : vector<8x1024xbf16>, vector<8x256xbf16> -> vector<8x1280xbf16>
    %3 = arith.extf %2 : vector<8x1280xbf16> to vector<8x1280xf32>
    %4 = vector.extract_strided_slice %3 {offsets = [0, 0], sizes = [8, 1024], strides = [1, 1]} : vector<8x1280xf32> to vector<8x1024xf32>
    %c0_3 = arith.constant 0 : index
    %c0_4 = arith.constant 0 : index
    %5 = vector.load %arg7[%c0_3, %c0_4] : memref<216x1024xf32, #tpu.memory_space<vmem>>, vector<8x1024xf32>
    tpu.vector_store %arg7[%c0_3, %c0_4], %4 {strides = array<i32>} : memref<216x1024xf32, #tpu.memory_space<vmem>>, vector<8x1024xf32>,
    %6 = vector.extract_strided_slice %3 {offsets = [0, 1], sizes = [8, 1024], strides = [1, 1]} : vector<8x1280xf32> to vector<8x1024xf32>
    %c8 = arith.constant 8 : index
    %c0_5 = arith.constant 0 : index
    %7 = vector.load %arg7[%c8, %c0_5] : memref<216x1024xf32, #tpu.memory_space<vmem>>, vector<8x1024xf32>
    tpu.vector_store %arg7[%c8, %c0_5], %6 {strides = array<i32>} : memref<216x1024xf32, #tpu.memory_space<vmem>>, vector<8x1024xf32>,
    %8 = vector.extract_strided_slice %3 {offsets = [0, 2], sizes = [8, 1024], strides = [1, 1]} : vector<8x1280xf32> to vector<8x1024xf32>
    %c16 = arith.constant 16 : index
    %c0_6 = arith.constant 0 : index
    %9 = vector.load %arg7[%c16, %c0_6] : memref<216x1024xf32, #tpu.memory_space<vmem>>, vector<8x1024xf32>
    tpu.vector_store %arg7[%c16, %c0_6], %8 {strides = array<i32>} : memref<216x1024xf32, #tpu.memory_space<vmem>>, vector<8x1024xf32>,
    %10 = vector.extract_strided_slice %3 {offsets = [0, 10], sizes = [8, 1024], strides = [1, 1]} : vector<8x1280xf32> to vector<8x1024xf32>
    %c24 = arith.constant 24 : index
    %c0_7 = arith.constant 0 : index
    %11 = vector.load %arg7[%c24, %c0_7] : memref<216x1024xf32, #tpu.memory_space<vmem>>, vector<8x1024xf32>
    tpu.vector_store %arg7[%c24, %c0_7], %10 {strides = array<i32>} : memref<216x1024xf32, #tpu.memory_space<vmem>>, vector<8x1024xf32>,
    %12 = vector.extract_strided_slice %3 {offsets = [0, 11], sizes = [8, 1024], strides = [1, 1]} : vector<8x1280xf32> to vector<8x1024xf32>
    %c32 = arith.constant 32 : index
    %c0_8 = arith.constant 0 : index
    %13 = vector.load %arg7[%c32, %c0_8] : memref<216x1024xf32, #tpu.memory_space<vmem>>, vector<8x1024xf32>
    tpu.vector_store %arg7[%c32, %c0_8], %12 {strides = array<i32>} : memref<216x1024xf32, #tpu.memory_space<vmem>>, vector<8x1024xf32>,
    %14 = vector.extract_strided_slice %3 {offsets = [0, 12], sizes = [8, 1024], strides = [1, 1]} : vector<8x1280xf32> to vector<8x1024xf32>
    %c40 = arith.constant 40 : index
    %c0_9 = arith.constant 0 : index
    %15 = vector.load %arg7[%c40, %c0_9] : memref<216x1024xf32, #tpu.memory_space<vmem>>, vector<8x1024xf32>
    tpu.vector_store %arg7[%c40, %c0_9], %14 {strides = array<i32>} : memref<216x1024xf32, #tpu.memory_space<vmem>>, vector<8x1024xf32>,
    %16 = vector.extract_strided_slice %3 {offsets = [0, 20], sizes = [8, 1024], strides = [1, 1]} : vector<8x1280xf32> to vector<8x1024xf32>
    %c48 = arith.constant 48 : index
    %c0_10 = arith.constant 0 : index
    %17 = vector.load %arg7[%c48, %c0_10] : memref<216x1024xf32, #tpu.memory_space<vmem>>, vector<8x1024xf32>
    tpu.vector_store %arg7[%c48, %c0_10], %16 {strides = array<i32>} : memref<216x1024xf32, #tpu.memory_space<vmem>>, vector<8x1024xf32>,
    %18 = vector.extract_strided_slice %3 {offsets = [0, 21], sizes = [8, 1024], strides = [1, 1]} : vector<8x1280xf32> to vector<8x1024xf32>
    %c56 = arith.constant 56 : index
    %c0_11 = arith.constant 0 : index
    %19 = vector.load %arg7[%c56, %c0_11] : memref<216x1024xf32, #tpu.memory_space<vmem>>, vector<8x1024xf32>
    tpu.vector_store %arg7[%c56, %c0_11], %18 {strides = array<i32>} : memref<216x1024xf32, #tpu.memory_space<vmem>>, vector<8x1024xf32>,
    %20 = vector.extract_strided_slice %3 {offsets = [0, 22], sizes = [8, 1024], strides = [1, 1]} : vector<8x1280xf32> to vector<8x1024xf32>
    %c64 = arith.constant 64 : index
    %c0_12 = arith.constant 0 : index
    %21 = vector.load %arg7[%c64, %c0_12] : memref<216x1024xf32, #tpu.memory_space<vmem>>, vector<8x1024xf32>
    tpu.vector_store %arg7[%c64, %c0_12], %20 {strides = array<i32>} : memref<216x1024xf32, #tpu.memory_space<vmem>>, vector<8x1024xf32>,
    %22 = vector.extract_strided_slice %3 {offsets = [0, 100], sizes = [8, 1024], strides = [1, 1]} : vector<8x1280xf32> to vector<8x1024xf32>
    %c72 = arith.constant 72 : index
    %c0_13 = arith.constant 0 : index
    %23 = vector.load %arg7[%c72, %c0_13] : memref<216x1024xf32, #tpu.memory_space<vmem>>, vector<8x1024xf32>
    tpu.vector_store %arg7[%c72, %c0_13], %22 {strides = array<i32>} : memref<216x1024xf32, #tpu.memory_space<vmem>>, vector<8x1024xf32>,
    %24 = vector.extract_strided_slice %3 {offsets = [0, 101], sizes = [8, 1024], strides = [1, 1]} : vector<8x1280xf32> to vector<8x1024xf32>
    %c80 = arith.constant 80 : index
    %c0_14 = arith.constant 0 : index
    %25 = vector.load %arg7[%c80, %c0_14] : memref<216x1024xf32, #tpu.memory_space<vmem>>, vector<8x1024xf32>
    tpu.vector_store %arg7[%c80, %c0_14], %24 {strides = array<i32>} : memref<216x1024xf32, #tpu.memory_space<vmem>>, vector<8x1024xf32>,
    %26 = vector.extract_strided_slice %3 {offsets = [0, 102], sizes = [8, 1024], strides = [1, 1]} : vector<8x1280xf32> to vector<8x1024xf32>
    %c88 = arith.constant 88 : index
    %c0_15 = arith.constant 0 : index
    %27 = vector.load %arg7[%c88, %c0_15] : memref<216x1024xf32, #tpu.memory_space<vmem>>, vector<8x1024xf32>
    tpu.vector_store %arg7[%c88, %c0_15], %26 {strides = array<i32>} : memref<216x1024xf32, #tpu.memory_space<vmem>>, vector<8x1024xf32>,
    %28 = vector.extract_strided_slice %3 {offsets = [0, 110], sizes = [8, 1024], strides = [1, 1]} : vector<8x1280xf32> to vector<8x1024xf32>
    %c96 = arith.constant 96 : index
    %c0_16 = arith.constant 0 : index
    %29 = vector.load %arg7[%c96, %c0_16] : memref<216x1024xf32, #tpu.memory_space<vmem>>, vector<8x1024xf32>
    tpu.vector_store %arg7[%c96, %c0_16], %28 {strides = array<i32>} : memref<216x1024xf32, #tpu.memory_space<vmem>>, vector<8x1024xf32>,
    %30 = vector.extract_strided_slice %3 {offsets = [0, 111], sizes = [8, 1024], strides = [1, 1]} : vector<8x1280xf32> to vector<8x1024xf32>
    %c104 = arith.constant 104 : index
    %c0_17 = arith.constant 0 : index
    %31 = vector.load %arg7[%c104, %c0_17] : memref<216x1024xf32, #tpu.memory_space<vmem>>, vector<8x1024xf32>
    tpu.vector_store %arg7[%c104, %c0_17], %30 {strides = array<i32>} : memref<216x1024xf32, #tpu.memory_space<vmem>>, vector<8x1024xf32>,
    %32 = vector.extract_strided_slice %3 {offsets = [0, 112], sizes = [8, 1024], strides = [1, 1]} : vector<8x1280xf32> to vector<8x1024xf32>
    %c112 = arith.constant 112 : index
    %c0_18 = arith.constant 0 : index
    %33 = vector.load %arg7[%c112, %c0_18] : memref<216x1024xf32, #tpu.memory_space<vmem>>, vector<8x1024xf32>
    tpu.vector_store %arg7[%c112, %c0_18], %32 {strides = array<i32>} : memref<216x1024xf32, #tpu.memory_space<vmem>>, vector<8x1024xf32>,
    %34 = vector.extract_strided_slice %3 {offsets = [0, 120], sizes = [8, 1024], strides = [1, 1]} : vector<8x1280xf32> to vector<8x1024xf32>
    %c120 = arith.constant 120 : index
    %c0_19 = arith.constant 0 : index
    %35 = vector.load %arg7[%c120, %c0_19] : memref<216x1024xf32, #tpu.memory_space<vmem>>, vector<8x1024xf32>
    tpu.vector_store %arg7[%c120, %c0_19], %34 {strides = array<i32>} : memref<216x1024xf32, #tpu.memory_space<vmem>>, vector<8x1024xf32>,
    %36 = vector.extract_strided_slice %3 {offsets = [0, 121], sizes = [8, 1024], strides = [1, 1]} : vector<8x1280xf32> to vector<8x1024xf32>
    %c128 = arith.constant 128 : index
    %c0_20 = arith.constant 0 : index
    %37 = vector.load %arg7[%c128, %c0_20] : memref<216x1024xf32, #tpu.memory_space<vmem>>, vector<8x1024xf32>
    tpu.vector_store %arg7[%c128, %c0_20], %36 {strides = array<i32>} : memref<216x1024xf32, #tpu.memory_space<vmem>>, vector<8x1024xf32>,
    %38 = vector.extract_strided_slice %3 {offsets = [0, 122], sizes = [8, 1024], strides = [1, 1]} : vector<8x1280xf32> to vector<8x1024xf32>
    %c136 = arith.constant 136 : index
    %c0_21 = arith.constant 0 : index
    %39 = vector.load %arg7[%c136, %c0_21] : memref<216x1024xf32, #tpu.memory_space<vmem>>, vector<8x1024xf32>
    tpu.vector_store %arg7[%c136, %c0_21], %38 {strides = array<i32>} : memref<216x1024xf32, #tpu.memory_space<vmem>>, vector<8x1024xf32>,
    %40 = vector.extract_strided_slice %3 {offsets = [0, 200], sizes = [8, 1024], strides = [1, 1]} : vector<8x1280xf32> to vector<8x1024xf32>
    %c144 = arith.constant 144 : index
    %c0_22 = arith.constant 0 : index
    %41 = vector.load %arg7[%c144, %c0_22] : memref<216x1024xf32, #tpu.memory_space<vmem>>, vector<8x1024xf32>
    tpu.vector_store %arg7[%c144, %c0_22], %40 {strides = array<i32>} : memref<216x1024xf32, #tpu.memory_space<vmem>>, vector<8x1024xf32>,
    %42 = vector.extract_strided_slice %3 {offsets = [0, 201], sizes = [8, 1024], strides = [1, 1]} : vector<8x1280xf32> to vector<8x1024xf32>
    %c152 = arith.constant 152 : index
    %c0_23 = arith.constant 0 : index
    %43 = vector.load %arg7[%c152, %c0_23] : memref<216x1024xf32, #tpu.memory_space<vmem>>, vector<8x1024xf32>
    tpu.vector_store %arg7[%c152, %c0_23], %42 {strides = array<i32>} : memref<216x1024xf32, #tpu.memory_space<vmem>>, vector<8x1024xf32>,
    %44 = vector.extract_strided_slice %3 {offsets = [0, 202], sizes = [8, 1024], strides = [1, 1]} : vector<8x1280xf32> to vector<8x1024xf32>
    %c160 = arith.constant 160 : index
    %c0_24 = arith.constant 0 : index
    %45 = vector.load %arg7[%c160, %c0_24] : memref<216x1024xf32, #tpu.memory_space<vmem>>, vector<8x1024xf32>
    tpu.vector_store %arg7[%c160, %c0_24], %44 {strides = array<i32>} : memref<216x1024xf32, #tpu.memory_space<vmem>>, vector<8x1024xf32>,
    %46 = vector.extract_strided_slice %3 {offsets = [0, 210], sizes = [8, 1024], strides = [1, 1]} : vector<8x1280xf32> to vector<8x1024xf32>
    %c168 = arith.constant 168 : index
    %c0_25 = arith.constant 0 : index
    %47 = vector.load %arg7[%c168, %c0_25] : memref<216x1024xf32, #tpu.memory_space<vmem>>, vector<8x1024xf32>
    tpu.vector_store %arg7[%c168, %c0_25], %46 {strides = array<i32>} : memref<216x1024xf32, #tpu.memory_space<vmem>>, vector<8x1024xf32>,
    %48 = vector.extract_strided_slice %3 {offsets = [0, 211], sizes = [8, 1024], strides = [1, 1]} : vector<8x1280xf32> to vector<8x1024xf32>
    %c176 = arith.constant 176 : index
    %c0_26 = arith.constant 0 : index
    %49 = vector.load %arg7[%c176, %c0_26] : memref<216x1024xf32, #tpu.memory_space<vmem>>, vector<8x1024xf32>
    tpu.vector_store %arg7[%c176, %c0_26], %48 {strides = array<i32>} : memref<216x1024xf32, #tpu.memory_space<vmem>>, vector<8x1024xf32>,
    %50 = vector.extract_strided_slice %3 {offsets = [0, 212], sizes = [8, 1024], strides = [1, 1]} : vector<8x1280xf32> to vector<8x1024xf32>
    %c184 = arith.constant 184 : index
    %c0_27 = arith.constant 0 : index
    %51 = vector.load %arg7[%c184, %c0_27] : memref<216x1024xf32, #tpu.memory_space<vmem>>, vector<8x1024xf32>
    tpu.vector_store %arg7[%c184, %c0_27], %50 {strides = array<i32>} : memref<216x1024xf32, #tpu.memory_space<vmem>>, vector<8x1024xf32>,
    %52 = vector.extract_strided_slice %3 {offsets = [0, 220], sizes = [8, 1024], strides = [1, 1]} : vector<8x1280xf32> to vector<8x1024xf32>
    %c192 = arith.constant 192 : index
    %c0_28 = arith.constant 0 : index
    %53 = vector.load %arg7[%c192, %c0_28] : memref<216x1024xf32, #tpu.memory_space<vmem>>, vector<8x1024xf32>
    tpu.vector_store %arg7[%c192, %c0_28], %52 {strides = array<i32>} : memref<216x1024xf32, #tpu.memory_space<vmem>>, vector<8x1024xf32>,
    %54 = vector.extract_strided_slice %3 {offsets = [0, 221], sizes = [8, 1024], strides = [1, 1]} : vector<8x1280xf32> to vector<8x1024xf32>
    %c200 = arith.constant 200 : index
    %c0_29 = arith.constant 0 : index
    %55 = vector.load %arg7[%c200, %c0_29] : memref<216x1024xf32, #tpu.memory_space<vmem>>, vector<8x1024xf32>
    tpu.vector_store %arg7[%c200, %c0_29], %54 {strides = array<i32>} : memref<216x1024xf32, #tpu.memory_space<vmem>>, vector<8x1024xf32>,
    %56 = vector.extract_strided_slice %3 {offsets = [0, 222], sizes = [8, 1024], strides = [1, 1]} : vector<8x1280xf32> to vector<8x1024xf32>
    %c208 = arith.constant 208 : index
    %c0_30 = arith.constant 0 : index
    %57 = vector.load %arg7[%c208, %c0_30] : memref<216x1024xf32, #tpu.memory_space<vmem>>, vector<8x1024xf32>
    tpu.vector_store %arg7[%c208, %c0_30], %56 {strides = array<i32>} : memref<216x1024xf32, #tpu.memory_space<vmem>>, vector<8x1024xf32>,
    %c0_31 = arith.constant 0 : index
    %c0_32 = arith.constant 0 : index
    %58 = vector.load %arg3[%c0_31, %c0_32] : memref<8x216xf32, #tpu.memory_space<vmem>>, vector<8x216xf32>
    %c0_33 = arith.constant 0 : index
    %c0_34 = arith.constant 0 : index
    %59 = vector.load %arg7[%c0_33, %c0_34] : memref<216x1024xf32, #tpu.memory_space<vmem>>, vector<216x1024xf32>
    %cst = arith.constant dense<0.000000e+00> : vector<8x1024xf32>
    %60 = tpu.matmul %58, %59, %cst {dimension_numbers = #tpu.dot_dimension_numbers<[1], [0], [0], [1], [0, 0, 1, 1], [], []>} : vector<8x216xf32>, vector<216x1024xf32>, vector<8x1024xf32> -> vector<8x1024xf32>
    %61 = arith.truncf %60 : vector<8x1024xf32> to vector<8x1024xbf16>
    %c0_35 = arith.constant 0 : index
    %c0_36 = arith.constant 0 : index
    %62 = vector.load %arg5[%c0_35, %c0_36] : memref<8x1024xbf16, #tpu.memory_space<vmem>>, vector<8x1024xbf16>
    tpu.vector_store %arg5[%c0_35, %c0_36], %61 {strides = array<i32>} : memref<8x1024xbf16, #tpu.memory_space<vmem>>, vector<8x1024xbf16>,
    %c0_37 = arith.constant 0 : index
    %c0_38 = arith.constant 0 : index
    %63 = vector.load %arg4[%c0_37, %c0_38] : memref<1x1024xbf16, #tpu.memory_space<vmem>>, vector<1x1024xbf16>
    %64 = arith.extf %63 : vector<1x1024xbf16> to vector<1x1024xf32>
    %65 = vector.shape_cast %64 : vector<1x1024xf32> to vector<1x1024xf32>
    %66 = vector.broadcast %65 : vector<1x1024xf32> to vector<8x1024xf32>
    %cst_39 = arith.constant dense<0.000000e+00> : vector<8x8xf32>
    %67 = tpu.matmul %60, %66, %cst_39 {dimension_numbers = #tpu.dot_dimension_numbers<[1], [1], [0], [0], [0, 0, 1, 0], [], []>} : vector<8x1024xf32>, vector<8x1024xf32>, vector<8x8xf32> -> vector<8x8xf32>
    %68 = arith.mulf %60, %60 : vector<8x1024xf32>
    %cst_40 = arith.constant dense<0.000000e+00> : vector<8x8xf32>
    %69 = tpu.matmul %68, %66, %cst_40 {dimension_numbers = #tpu.dot_dimension_numbers<[1], [1], [0], [0], [0, 0, 1, 0], [], []>} : vector<8x1024xf32>, vector<8x1024xf32>, vector<8x8xf32> -> vector<8x8xf32>
    %70 = vector.extract_strided_slice %67 {offsets = [0, 0], sizes = [8, 1], strides = [1, 1]} : vector<8x8xf32> to vector<8x1xf32>
    %c0_41 = arith.constant 0 : index
    %c0_42 = arith.constant 0 : index
    %c0_43 = arith.constant 0 : index
    %c0_44 = arith.constant 0 : index
    %71 = vector.load %arg6[%c0_41, %c0_42, %c0_43, %c0_44] : memref<1x2x8x1xf32, #tpu.memory_space<vmem>>, vector<1x1x8x1xf32>
    %72 = vector.shape_cast %71 : vector<1x1x8x1xf32> to vector<8x1xf32>
    %73 = vector.shape_cast %70 : vector<8x1xf32> to vector<1x1x8x1xf32>
    tpu.vector_store %arg6[%c0_41, %c0_42, %c0_43, %c0_44], %73 {strides = array<i32>} : memref<1x2x8x1xf32, #tpu.memory_space<vmem>>, vector<1x1x8x1xf32>,
    %74 = vector.extract_strided_slice %69 {offsets = [0, 0], sizes = [8, 1], strides = [1, 1]} : vector<8x8xf32> to vector<8x1xf32>
    %c0_45 = arith.constant 0 : index
    %c1 = arith.constant 1 : index
    %c0_46 = arith.constant 0 : index
    %c0_47 = arith.constant 0 : index
    %75 = vector.load %arg6[%c0_45, %c1, %c0_46, %c0_47] : memref<1x2x8x1xf32, #tpu.memory_space<vmem>>, vector<1x1x8x1xf32>
    %76 = vector.shape_cast %75 : vector<1x1x8x1xf32> to vector<8x1xf32>
    %77 = vector.shape_cast %74 : vector<8x1xf32> to vector<1x1x8x1xf32>
    tpu.vector_store %arg6[%c0_45, %c1, %c0_46, %c0_47], %77 {strides = array<i32>} : memref<1x2x8x1xf32, #tpu.memory_space<vmem>>, vector<1x1x8x1xf32>,
    return
  }
  func.func @transform_0(%arg0: i32) -> (i32, i32) {
    %c0_i32 = arith.constant 0 : i32
    %c0_i32_0 = arith.constant 0 : i32
    return %c0_i32, %arg0 : i32, i32
  }
  func.func @transform_1(%arg0: i32) -> (i32, i32) {
    %c1_i32 = arith.constant 1 : i32
    %0 = arith.addi %arg0, %c1_i32 : i32
    %c4_i32 = arith.constant 4 : i32
    %1 = arith.muli %0, %c4_i32 : i32
    %c0_i32 = arith.constant 0 : i32
    %c0_i32_0 = arith.constant 0 : i32
    return %c0_i32, %1 : i32, i32
  }
  func.func @transform_2(%arg0: i32) -> (i32, i32) {
    %c0_i32 = arith.constant 0 : i32
    %c0_i32_0 = arith.constant 0 : i32
    %c0_i32_1 = arith.constant 0 : i32
    return %c0_i32, %c0_i32_0 : i32, i32
  }
  func.func @transform_3(%arg0: i32) -> (i32, i32) {
    %c0_i32 = arith.constant 0 : i32
    %c0_i32_0 = arith.constant 0 : i32
    return %c0_i32, %arg0 : i32, i32
  }
  func.func @transform_4(%arg0: i32) -> (i32, i32) {
    %c0_i32 = arith.constant 0 : i32
    %c0_i32_0 = arith.constant 0 : i32
    return %c0_i32, %arg0 : i32, i32
  }
  func.func @transform_5(%arg0: i32) -> (i32, i32, i32, i32) {
    %c0_i32 = arith.constant 0 : i32
    %c0_i32_0 = arith.constant 0 : i32
    %c0_i32_1 = arith.constant 0 : i32
    %c0_i32_2 = arith.constant 0 : i32
    return %arg0, %c0_i32, %c0_i32_0, %c0_i32_1 : i32, i32, i32, i32
  }
}

module attributes {stable_mosaic.version = 11 : i64} {
  func.func @_bn_relu_kernel(%arg0: i32, %arg1: memref<8x2048xbf16, #tpu.memory_space<vmem>>, %arg2: memref<8x1xf32, #tpu.memory_space<vmem>>, %arg3: memref<8x1xf32, #tpu.memory_space<vmem>>, %arg4: memref<8x2048xf32, #tpu.memory_space<vmem>>) attributes {dimension_semantics = [#tpu.dimension_semantics<parallel>], iteration_bounds = array<i64: 1>, scalar_prefetch = 0 : i64, scratch_operands = 0 : i64, tpu.core_type = #tpu.core_type<tc>, window_params = [{transform_indices = @transform_0, window_bounds = array<i64: 8, 2048>}, {pipeline_mode = #tpu.pipeline_mode<synchronous>, transform_indices = @transform_1, window_bounds = array<i64: 8, 1>}, {pipeline_mode = #tpu.pipeline_mode<synchronous>, transform_indices = @transform_2, window_bounds = array<i64: 8, 1>}, {transform_indices = @transform_3, window_bounds = array<i64: 8, 2048>}]} {
    %c0 = arith.constant 0 : index
    %c0_0 = arith.constant 0 : index
    %0 = vector.load %arg1[%c0, %c0_0] : memref<8x2048xbf16, #tpu.memory_space<vmem>>, vector<8x2048xbf16>
    %1 = arith.extf %0 : vector<8x2048xbf16> to vector<8x2048xf32>
    %c0_1 = arith.constant 0 : index
    %c0_2 = arith.constant 0 : index
    %2 = vector.load %arg2[%c0_1, %c0_2] : memref<8x1xf32, #tpu.memory_space<vmem>>, vector<8x1xf32>
    %3 = vector.broadcast %2 : vector<8x1xf32> to vector<8x2048xf32>
    %4 = arith.mulf %1, %3 : vector<8x2048xf32>
    %c0_3 = arith.constant 0 : index
    %c0_4 = arith.constant 0 : index
    %5 = vector.load %arg3[%c0_3, %c0_4] : memref<8x1xf32, #tpu.memory_space<vmem>>, vector<8x1xf32>
    %6 = vector.broadcast %5 : vector<8x1xf32> to vector<8x2048xf32>
    %7 = arith.addf %4, %6 : vector<8x2048xf32>
    %cst = arith.constant 0.000000e+00 : f32
    %8 = vector.broadcast %cst : f32 to vector<8x2048xf32>
    %9 = arith.maximumf %7, %8 : vector<8x2048xf32>
    %c0_5 = arith.constant 0 : index
    %c0_6 = arith.constant 0 : index
    %10 = vector.load %arg4[%c0_5, %c0_6] : memref<8x2048xf32, #tpu.memory_space<vmem>>, vector<8x2048xf32>
    tpu.vector_store %arg4[%c0_5, %c0_6], %9 {strides = array<i32>} : memref<8x2048xf32, #tpu.memory_space<vmem>>, vector<8x2048xf32>,
    return
  }
  func.func @transform_0(%arg0: i32) -> (i32, i32) {
    %c0_i32 = arith.constant 0 : i32
    %c0_i32_0 = arith.constant 0 : i32
    return %c0_i32, %arg0 : i32, i32
  }
  func.func @transform_1(%arg0: i32) -> (i32, i32) {
    %c0_i32 = arith.constant 0 : i32
    %c0_i32_0 = arith.constant 0 : i32
    %c0_i32_1 = arith.constant 0 : i32
    return %c0_i32, %c0_i32_0 : i32, i32
  }
  func.func @transform_2(%arg0: i32) -> (i32, i32) {
    %c0_i32 = arith.constant 0 : i32
    %c0_i32_0 = arith.constant 0 : i32
    %c0_i32_1 = arith.constant 0 : i32
    return %c0_i32, %c0_i32_0 : i32, i32
  }
  func.func @transform_3(%arg0: i32) -> (i32, i32) {
    %c0_i32 = arith.constant 0 : i32
    %c0_i32_0 = arith.constant 0 : i32
    return %c0_i32, %arg0 : i32, i32
  }
}

</mosaic_0001>

<llo_original>
// kernel: deconv3d_bn_relu.3
$region0: #{deconv3d_bn_relu.3}
  #allocation0 [shape = 'u32[]', space=smem, size = 0x4, offset = 0x4, fixed_abs, tag = 'smem constant byte address 0x4 - core index']
  #allocation1 [shape = 'u32[144,128]{1,0:T(1,128)}', space=vmem, size = 0x12000, scoped, tag = 'internal scratch']
  %s0 = inlined_call_operand.vmem [shape: bf16[8,2048], index: 0, kind: input, shape index: {}]
  %s1 = inlined_call_operand.vmem [shape: f32[8,1], index: 1, kind: input, shape index: {}]
  %s2 = inlined_call_operand.vmem [shape: f32[8,1], index: 2, kind: input, shape index: {}]
  %s3 = inlined_call_operand.vmem [shape: f32[8,2048], index: 3, kind: output, shape index: {}]
  %s4 = sld [smem:[#allocation0]]
  $region22: #{deconv3d_bn_relu.3} parent=0
    _
  %s6 = ssub.s32 1, %s4
  %s7 = scalar_select 0, %s6, %s4
  // Predicated region
  $region2: #{deconv3d_bn_relu.3} parent=0 // pred_check
    _
  $region3: #{deconv3d_bn_relu.3} parent=0 // pred_check_branch
    %9 = sbr.rel (0) target = $region5
  $region4: #{deconv3d_bn_relu.3} parent=0 // pred_region
    _
  $region5: #{deconv3d_bn_relu.3} parent=0 // pred_fallthru
    _
  // Predicated region
  $region6: #{deconv3d_bn_relu.3} parent=0 // pred_check
    _
  $region7: #{deconv3d_bn_relu.3} parent=0 // pred_check_branch
    %11 = sbr.rel (0) target = $region9
  $region8: #{deconv3d_bn_relu.3} parent=0 // pred_region
    _
  $region9: #{deconv3d_bn_relu.3} parent=0 // pred_fallthru
    _
  // Predicated region
  $region10: #{deconv3d_bn_relu.3} parent=0 // pred_check
    _
  $region11: #{deconv3d_bn_relu.3} parent=0 // pred_check_branch
    %13 = sbr.rel (0) target = $region13
  $region12: #{deconv3d_bn_relu.3} parent=0 // pred_region
    _
  $region13: #{deconv3d_bn_relu.3} parent=0 // pred_fallthru
    _
  %v14 = vld [vmem:[%s0] sm:$0xff]
  %v15 = vld [vmem:[%s0 + $0x8] sm:$0xff]
  %v16 = vld [vmem:[%s0 + $0x10] sm:$0xff]
  %v17 = vld [vmem:[%s0 + $0x18] sm:$0xff]
  %v18 = vld [vmem:[%s0 + $0x20] sm:$0xff]
  %v19 = vld [vmem:[%s0 + $0x28] sm:$0xff]
  %v20 = vld [vmem:[%s0 + $0x30] sm:$0xff]
  %v21 = vld [vmem:[%s0 + $0x38] sm:$0xff]
  %v22 = vunpack.c.l.bf16 %v14
  %v23 = vunpack.c.h.bf16 %v14
  %v24 = vunpack.c.l.bf16 %v15
  %v25 = vunpack.c.h.bf16 %v15
  %v26 = vunpack.c.l.bf16 %v16
  %v27 = vunpack.c.h.bf16 %v16
  %v28 = vunpack.c.l.bf16 %v17
  %v29 = vunpack.c.h.bf16 %v17
  %v30 = vunpack.c.l.bf16 %v18
  %v31 = vunpack.c.h.bf16 %v18
  %v32 = vunpack.c.l.bf16 %v19
  %v33 = vunpack.c.h.bf16 %v19
  %v34 = vunpack.c.l.bf16 %v20
  %v35 = vunpack.c.h.bf16 %v20
  %v36 = vunpack.c.l.bf16 %v21
  %v37 = vunpack.c.h.bf16 %v21
  %v38 = vld [vmem:[%s1] sm:$0xff]
  %40 = vset.pattern.permute.xlu0 0
  %41 = vperm.xlu0 %40, %v38
  %v42 = vpop.permute.xlu0 %41
  %v44 = vmul.f32 %v22, %v42
  %v45 = vmul.f32 %v23, %v42
  %v46 = vmul.f32 %v24, %v42
  %v47 = vmul.f32 %v25, %v42
  %v48 = vmul.f32 %v26, %v42
  %v49 = vmul.f32 %v27, %v42
  %v50 = vmul.f32 %v28, %v42
  %v51 = vmul.f32 %v29, %v42
  %v52 = vmul.f32 %v30, %v42
  %v53 = vmul.f32 %v31, %v42
  %v54 = vmul.f32 %v32, %v42
  %v55 = vmul.f32 %v33, %v42
  %v56 = vmul.f32 %v34, %v42
  %v57 = vmul.f32 %v35, %v42
  %v58 = vmul.f32 %v36, %v42
  %v59 = vmul.f32 %v37, %v42
  %v60 = vld [vmem:[%s2] sm:$0xff]
  %62 = vset.pattern.permute.xlu0 0
  %63 = vperm.xlu0 %62, %v60
  %v64 = vpop.permute.xlu0 %63
  %v66 = vadd.f32 %v44, %v64
  %v67 = vadd.f32 %v45, %v64
  %v68 = vadd.f32 %v46, %v64
  %v69 = vadd.f32 %v47, %v64
  %v70 = vadd.f32 %v48, %v64
  %v71 = vadd.f32 %v49, %v64
  %v72 = vadd.f32 %v50, %v64
  %v73 = vadd.f32 %v51, %v64
  %v74 = vadd.f32 %v52, %v64
  %v75 = vadd.f32 %v53, %v64
  %v76 = vadd.f32 %v54, %v64
  %v77 = vadd.f32 %v55, %v64
  %v78 = vadd.f32 %v56, %v64
  %v79 = vadd.f32 %v57, %v64
  %v80 = vadd.f32 %v58, %v64
  %v81 = vadd.f32 %v59, %v64
  %v82 = vmax.f32 %v66, 0.0
  %v83 = vmax.f32 %v67, 0.0
  %v84 = vmax.f32 %v68, 0.0
  %v85 = vmax.f32 %v69, 0.0
  %v86 = vmax.f32 %v70, 0.0
  %v87 = vmax.f32 %v71, 0.0
  %v88 = vmax.f32 %v72, 0.0
  %v89 = vmax.f32 %v73, 0.0
  %v90 = vmax.f32 %v74, 0.0
  %v91 = vmax.f32 %v75, 0.0
  %v92 = vmax.f32 %v76, 0.0
  %v93 = vmax.f32 %v77, 0.0
  %v94 = vmax.f32 %v78, 0.0
  %v95 = vmax.f32 %v79, 0.0
  %v96 = vmax.f32 %v80, 0.0
  %v97 = vmax.f32 %v81, 0.0
  %98 = vst [vmem:[%s3] sm:$0xff] %v82
  %99 = vst [vmem:[%s3 + $0x8] sm:$0xff] %v83
  %100 = vst [vmem:[%s3 + $0x10] sm:$0xff] %v84
  %101 = vst [vmem:[%s3 + $0x18] sm:$0xff] %v85
  %102 = vst [vmem:[%s3 + $0x20] sm:$0xff] %v86
  %103 = vst [vmem:[%s3 + $0x28] sm:$0xff] %v87
  %104 = vst [vmem:[%s3 + $0x30] sm:$0xff] %v88
  %105 = vst [vmem:[%s3 + $0x38] sm:$0xff] %v89
  %106 = vst [vmem:[%s3 + $0x40] sm:$0xff] %v90
  %107 = vst [vmem:[%s3 + $0x48] sm:$0xff] %v91
  %108 = vst [vmem:[%s3 + $0x50] sm:$0xff] %v92
  %109 = vst [vmem:[%s3 + $0x58] sm:$0xff] %v93
  %110 = vst [vmem:[%s3 + $0x60] sm:$0xff] %v94
  %111 = vst [vmem:[%s3 + $0x68] sm:$0xff] %v95
  %112 = vst [vmem:[%s3 + $0x70] sm:$0xff] %v96
  %113 = vst [vmem:[%s3 + $0x78] sm:$0xff] %v97
  // Predicated region
  $region14: #{deconv3d_bn_relu.3} parent=0 // pred_check
    _
  $region15: #{deconv3d_bn_relu.3} parent=0 // pred_check_branch
    %115 = sbr.rel (0) target = $region17
  $region16: #{deconv3d_bn_relu.3} parent=0 // pred_region
    _
  $region17: #{deconv3d_bn_relu.3} parent=0 // pred_fallthru
    _
  // Predicated region
  $region18: #{deconv3d_bn_relu.3} parent=0 // pred_check
    _
  $region19: #{deconv3d_bn_relu.3} parent=0 // pred_check_branch
    %117 = sbr.rel (0) target = $region21
  $region20: #{deconv3d_bn_relu.3} parent=0 // pred_region
    _
  $region21: #{deconv3d_bn_relu.3} parent=0 // pred_fallthru
    _

// kernel: deconv3d_bn_relu.2
$region0: #{deconv3d_bn_relu.2}
  #allocation0 [shape = 'u32[]', space=smem, size = 0x4, offset = 0x4, fixed_abs, tag = 'smem constant byte address 0x4 - core index']
  #allocation1 [shape = 'u32[144,128]{1,0:T(1,128)}', space=vmem, size = 0x12000, scoped, tag = 'internal scratch']
  #allocation2 [shape = 'f32[216,1024]{1,0:T(8,128)}', space=vmem, size = 0xd8000, scoped, tag = 'scratch operand']
  %s0 = inlined_call_operand.vmem [shape: bf16[8,2304], index: 0, kind: input, shape index: {}, may-alias: {0,1}]
  %s1 = inlined_call_operand.vmem [shape: bf16[8,2304], index: 1, kind: input, shape index: {}, may-alias: {0,1}]
  %s2 = inlined_call_operand.vmem [shape: f32[8,216], index: 2, kind: input, shape index: {}]
  %s3 = inlined_call_operand.vmem [shape: bf16[1,2048], index: 3, kind: input, shape index: {}]
  %s4 = inlined_call_operand.vmem [shape: bf16[8,2048], index: 4, kind: output, shape index: {0}]
  %s5 = inlined_call_operand.vmem [shape: f32[2,2,8,1], index: 5, kind: output, shape index: {1}]
  %6 = xla_tuple %s4, %s5
  %s7 = sld [smem:[#allocation0]]
  $region57: #{deconv3d_bn_relu.2} parent=0
    _
  %s9 = ssub.s32 1, %s7
  %s10 = scalar_select 0, %s9, %s7
  loop: start=0, step=1, limit=4
  $region2: #{deconv3d_bn_relu.2} parent=0 // loop_pre_header
    _
  $region3: #{deconv3d_bn_relu.2} parent=0 // loop_header
    %s12 = sphi 0, %s16
    %p13 = scmp.ge.s32.totalorder %s12, 4
    %s22 = sphi 0, %s24
    %s25 = sphi 0, %s22
    %s26 = sphi 0, %s25
    %s42 = sphi 0, %s26
    %s52 = sphi 0, %s54
    %s55 = sphi 0, %s52
    %s56 = sphi 0, %s55
    %s72 = sphi 0, %s56
    %s76 = sphi 0, %s76
    %s78 = sphi 0, %s76
    %s79 = sphi 0, %s78
    %s93 = sphi 0, %s79
    %s99 = sphi 0, %s101
    %s102 = sphi 0, %s99
    %s103 = sphi 0, %s102
    %s119 = sphi 0, %s103
    %s125 = sphi 0, %s127
    %s128 = sphi 0, %s125
    %s129 = sphi 0, %s128
    %s145 = sphi 0, %s129
    %s151 = sphi 0, %s153
    %s154 = sphi 0, %s151
    %s155 = sphi 0, %s154
    %s171 = sphi 0, %s155
  $region4: #{deconv3d_bn_relu.2} parent=0 // loop_header_branch
    %15 = sbr.rel (%p13) target = $region8
  $region5: #{deconv3d_bn_relu.2} parent=0 // loop_body
    %s17 = ssub.s32 %s12, 1
    %s18 = ssub.s32 %s12, 2
    %s19 = sadd.s32 %s12, 1
    %s20 = ssub.s32 %s12, %s19
    %p21 = scmp.eq.s32.totalorder %s20, 0
    %s23 = sadd.s32 %s22, 1
    %s24 = scalar_select %p21, %s22, %s23
    %p27 = pneg %p21
    %p28 = scmp.eq.s32.totalorder %s12, 1
    %p29 = por %p27, %p28
    %p30 = scmp.ne.s32.totalorder %s22, %s25
    %p31 = scmp.eq.s32.totalorder %s12, 0
    %p32 = por %p30, %p31
    %p33 = scmp.ne.s32.totalorder %s22, %s25
    %p34 = scmp.eq.s32.totalorder %s17, 1
    %p35 = por %p33, %p34
    %p36 = scmp.ne.s32.totalorder %s25, %s26
    %p37 = scmp.eq.s32.totalorder %s17, 0
    %p38 = por %p36, %p37
    %p39 = scmp.ne.s32.totalorder %s25, %s26
    %p40 = scmp.eq.s32.totalorder %s18, 1
    %p41 = por %p39, %p40
    %p43 = scmp.ne.s32.totalorder %s26, %s42
    %p44 = scmp.eq.s32.totalorder %s18, 0
    %p45 = por %p43, %p44
    %s46 = sadd.s32 %s12, 1
    %s47 = smul.u32 %s46, 4
    %s48 = sadd.s32 %s19, 1
    %s49 = smul.u32 %s48, 4
    %s50 = ssub.s32 %s47, %s49
    %p51 = scmp.eq.s32.totalorder %s50, 0
    %s53 = sadd.s32 %s52, 1
    %s54 = scalar_select %p51, %s52, %s53
    %p57 = pneg %p51
    %p58 = scmp.eq.s32.totalorder %s12, 1
    %p59 = por %p57, %p58
    %p60 = scmp.ne.s32.totalorder %s52, %s55
    %p61 = scmp.eq.s32.totalorder %s12, 0
    %p62 = por %p60, %p61
    %p63 = scmp.ne.s32.totalorder %s52, %s55
    %p64 = scmp.eq.s32.totalorder %s17, 1
    %p65 = por %p63, %p64
    %p66 = scmp.ne.s32.totalorder %s55, %s56
    %p67 = scmp.eq.s32.totalorder %s17, 0
    %p68 = por %p66, %p67
    %p69 = scmp.ne.s32.totalorder %s55, %s56
    %p70 = scmp.eq.s32.totalorder %s18, 1
    %p71 = por %p69, %p70
    %p73 = scmp.ne.s32.totalorder %s56, %s72
    %p74 = scmp.eq.s32.totalorder %s18, 0
    %p75 = por %p73, %p74
    %s77 = sadd.s32 %s76, 1
    %p80 = scmp.eq.s32.totalorder %s12, 1
    %p81 = scmp.ne.s32.totalorder %s76, %s78
    %p82 = scmp.eq.s32.totalorder %s12, 0
    %p83 = por %p81, %p82
    %p84 = scmp.ne.s32.totalorder %s76, %s78
    %p85 = scmp.eq.s32.totalorder %s17, 1
    %p86 = por %p84, %p85
    %p87 = scmp.ne.s32.totalorder %s78, %s79
    %p88 = scmp.eq.s32.totalorder %s17, 0
    %p89 = por %p87, %p88
    %p90 = scmp.ne.s32.totalorder %s78, %s79
    %p91 = scmp.eq.s32.totalorder %s18, 1
    %p92 = por %p90, %p91
    %p94 = scmp.ne.s32.totalorder %s79, %s93
    %p95 = scmp.eq.s32.totalorder %s18, 0
    %p96 = por %p94, %p95
    %s97 = ssub.s32 %s12, %s19
    %p98 = scmp.eq.s32.totalorder %s97, 0
    %s100 = sadd.s32 %s99, 1
    %s101 = scalar_select %p98, %s99, %s100
    %p104 = pneg %p98
    %p105 = scmp.eq.s32.totalorder %s12, 1
    %p106 = por %p104, %p105
    %p107 = scmp.ne.s32.totalorder %s99, %s102
    %p108 = scmp.eq.s32.totalorder %s12, 0
    %p109 = por %p107, %p108
    %p110 = scmp.ne.s32.totalorder %s99, %s102
    %p111 = scmp.eq.s32.totalorder %s17, 1
    %p112 = por %p110, %p111
    %p113 = scmp.ne.s32.totalorder %s102, %s103
    %p114 = scmp.eq.s32.totalorder %s17, 0
    %p115 = por %p113, %p114
    %p116 = scmp.ne.s32.totalorder %s102, %s103
    %p117 = scmp.eq.s32.totalorder %s18, 1
    %p118 = por %p116, %p117
    %p120 = scmp.ne.s32.totalorder %s103, %s119
    %p121 = scmp.eq.s32.totalorder %s18, 0
    %p122 = por %p120, %p121
    %s123 = ssub.s32 %s12, %s19
    %p124 = scmp.eq.s32.totalorder %s123, 0
    %s126 = sadd.s32 %s125, 1
    %s127 = scalar_select %p124, %s125, %s126
    %p130 = pneg %p124
    %p131 = scmp.eq.s32.totalorder %s12, 1
    %p132 = por %p130, %p131
    %p133 = scmp.ne.s32.totalorder %s125, %s128
    %p134 = scmp.eq.s32.totalorder %s12, 0
    %p135 = por %p133, %p134
    %p136 = scmp.ne.s32.totalorder %s125, %s128
    %p137 = scmp.eq.s32.totalorder %s17, 1
    %p138 = por %p136, %p137
    %p139 = scmp.ne.s32.totalorder %s128, %s129
    %p140 = scmp.eq.s32.totalorder %s17, 0
    %p141 = por %p139, %p140
    %p142 = scmp.ne.s32.totalorder %s128, %s129
    %p143 = scmp.eq.s32.totalorder %s18, 1
    %p144 = por %p142, %p143
    %p146 = scmp.ne.s32.totalorder %s129, %s145
    %p147 = scmp.eq.s32.totalorder %s18, 0
    %p148 = por %p146, %p147
    %s149 = ssub.s32 %s12, %s19
    %p150 = scmp.eq.s32.totalorder %s149, 0
    %s152 = sadd.s32 %s151, 1
    %s153 = scalar_select %p150, %s151, %s152
    %p156 = pneg %p150
    %p157 = scmp.eq.s32.totalorder %s12, 1
    %p158 = por %p156, %p157
    %p159 = scmp.ne.s32.totalorder %s151, %s154
    %p160 = scmp.eq.s32.totalorder %s12, 0
    %p161 = por %p159, %p160
    %p162 = scmp.ne.s32.totalorder %s151, %s154
    %p163 = scmp.eq.s32.totalorder %s17, 1
    %p164 = por %p162, %p163
    %p165 = scmp.ne.s32.totalorder %s154, %s155
    %p166 = scmp.eq.s32.totalorder %s17, 0
    %p167 = por %p165, %p166
    %p168 = scmp.ne.s32.totalorder %s154, %s155
    %p169 = scmp.eq.s32.totalorder %s18, 1
    %p170 = por %p168, %p169
    %p172 = scmp.ne.s32.totalorder %s155, %s171
    %p173 = scmp.eq.s32.totalorder %s18, 0
    %p174 = por %p172, %p173
    %p175 = scmp.le.s32.totalorder 1, %s12
    %p176 = scmp.lt.s32.totalorder %s12, 3
    %p177 = pnand %p175, %p176
    %p178 = pneg %p177
    // Predicated region
    $region9: #{deconv3d_bn_relu.2} parent=5 // pred_check
      _
    $region10: #{deconv3d_bn_relu.2} parent=5 // pred_check_branch
      %180 = sbr.rel (%p177) target = $region12
    $region11: #{deconv3d_bn_relu.2} parent=5 // pred_region
      %s181 = ssub.s32 %s12, 1
      // Predicated region
      $region13: #{deconv3d_bn_relu.2} parent=11 // pred_check
        %p182 = pneg %p89
      $region14: #{deconv3d_bn_relu.2} parent=11 // pred_check_branch
        %184 = sbr.rel (%p182) target = $region16
      $region15: #{deconv3d_bn_relu.2} parent=11 // pred_region
        _
      $region16: #{deconv3d_bn_relu.2} parent=11 // pred_fallthru
        _
    $region12: #{deconv3d_bn_relu.2} parent=5 // pred_fallthru
      _
    %p185 = scmp.lt.s32.totalorder %s12, 2
    // Predicated region
    $region17: #{deconv3d_bn_relu.2} parent=5 // pred_check
      %p186 = pneg %p185
    $region18: #{deconv3d_bn_relu.2} parent=5 // pred_check_branch
      %188 = sbr.rel (%p186) target = $region20
    $region19: #{deconv3d_bn_relu.2} parent=5 // pred_region
      // Predicated region
      $region21: #{deconv3d_bn_relu.2} parent=19 // pred_check
        %p189 = pneg %p32
      $region22: #{deconv3d_bn_relu.2} parent=19 // pred_check_branch
        %191 = sbr.rel (%p189) target = $region24
      $region23: #{deconv3d_bn_relu.2} parent=19 // pred_region
        %s192 = smul.u32 8, %s12
        %s193 = ssub.s32 18, %s192
        %p194 = scmp.lt.s32.totalorder %s193, 8
        %s195 = scalar_select %p194, %s193, 8
        %s196 = smul.u32 64, %s195
        %p197 = scmp.lt.s32.totalorder %s192, 17
        %s198 = scalar_select %p197, %s192, 17
        %s199 = smul.addr %s198, 4
        %s200 = scalar_lea.vmem %s0, %s199
        %s201 = smul.u32 8, %s12
        %s202 = ssub.s32 18, %s201
        %p203 = scmp.lt.s32.totalorder %s202, 8
        %s204 = scalar_select %p203, %s202, 8
        %s205 = smul.u32 64, %s204
      $region24: #{deconv3d_bn_relu.2} parent=19 // pred_fallthru
        _
      // Predicated region
      $region25: #{deconv3d_bn_relu.2} parent=19 // pred_check
        %p206 = pneg %p62
      $region26: #{deconv3d_bn_relu.2} parent=19 // pred_check_branch
        %208 = sbr.rel (%p206) target = $region28
      $region27: #{deconv3d_bn_relu.2} parent=19 // pred_region
        %s209 = sadd.s32 %s12, 1
        %s210 = smul.u32 %s209, 4
        %s211 = smul.u32 2, %s210
        %p212 = scmp.lt.s32.totalorder %s211, 17
        %s213 = scalar_select %p212, %s211, 17
        %s214 = smul.addr %s213, 4
        %s215 = scalar_lea.vmem %s1, %s214
        %s216 = sadd.s32 %s12, 1
        %s217 = smul.u32 %s216, 4
        %s218 = smul.u32 2, %s217
      $region28: #{deconv3d_bn_relu.2} parent=19 // pred_fallthru
        _
      // Predicated region
      $region29: #{deconv3d_bn_relu.2} parent=19 // pred_check
        %p219 = pneg %p109
      $region30: #{deconv3d_bn_relu.2} parent=19 // pred_check_branch
        %221 = sbr.rel (%p219) target = $region32
      $region31: #{deconv3d_bn_relu.2} parent=19 // pred_region
        %s222 = smul.u32 8, %s12
        %p223 = scmp.lt.s32.totalorder %s222, 15
        %s224 = scalar_select %p223, %s222, 15
        %s225 = scalar_lea.vmem %s3, %s224
        %s226 = smul.u32 8, %s12
      $region32: #{deconv3d_bn_relu.2} parent=19 // pred_fallthru
        _
    $region20: #{deconv3d_bn_relu.2} parent=5 // pred_fallthru
      _
    %p227 = scmp.le.s32.totalorder 1, %s12
    %p228 = scmp.lt.s32.totalorder %s12, 3
    %p229 = pnand %p227, %p228
    %p230 = pneg %p229
    // Predicated region
    $region33: #{deconv3d_bn_relu.2} parent=5 // pred_check
      _
    $region34: #{deconv3d_bn_relu.2} parent=5 // pred_check_branch
      %232 = sbr.rel (%p229) target = $region36
    $region35: #{deconv3d_bn_relu.2} parent=5 // pred_region
      %s233 = ssub.s32 %s12, 1
      %s234 = smul.u32 8, %s17
      %s235 = ssub.s32 18, %s234
      %p236 = scmp.lt.s32.totalorder %s235, 8
      %s237 = scalar_select %p236, %s235, 8
      %s238 = smul.u32 64, %s237
      %p239 = scmp.lt.s32.totalorder %s234, 17
      %s240 = scalar_select %p239, %s234, 17
      %s241 = smul.addr %s240, 4
      %s242 = scalar_lea.vmem %s0, %s241
      %p243 = pneg %p38
      %p244 = pneg %p35
      %s245 = sadd.s32 %s17, 1
      %s246 = smul.u32 %s245, 4
      %s247 = smul.u32 2, %s246
      %p248 = scmp.lt.s32.totalorder %s247, 17
      %s249 = scalar_select %p248, %s247, 17
      %s250 = smul.addr %s249, 4
      %s251 = scalar_lea.vmem %s1, %s250
      %p252 = pneg %p68
      %p253 = pneg %p65
      %p254 = pneg %p89
      %p255 = pneg %p86
      %s256 = smul.u32 8, %s17
      %p257 = scmp.lt.s32.totalorder %s256, 15
      %s258 = scalar_select %p257, %s256, 15
      %s259 = scalar_lea.vmem %s3, %s258
      %p260 = pneg %p115
      %p261 = pneg %p112
      %p262 = pneg %p141
      %p263 = pneg %p138
      %s264 = smul.u32 8, %s17
      %p265 = scmp.lt.s32.totalorder %s264, 15
      %s266 = scalar_select %p265, %s264, 15
      %s267 = smul.addr %s266, 4
      %s268 = scalar_lea.vmem %s4, %s267
      %p269 = pneg %p167
      %p270 = pneg %p164
      %p271 = scmp.lt.s32.totalorder %s17, 1
      %s272 = scalar_select %p271, %s17, 1
      %s273 = smul.addr %s272, 2
      %s274 = smul.addr %s273, 8
      %s275 = scalar_lea.vmem %s5, %s274
      %s276 = smul.u32 8, %s17
      %s277 = ssub.s32 18, %s276
      %p278 = scmp.lt.s32.totalorder %s277, 8
      %s279 = scalar_select %p278, %s277, 8
      %s280 = smul.u32 64, %s279
      %p281 = scmp.lt.s32.totalorder %s276, 17
      %s282 = scalar_select %p281, %s276, 17
      %s283 = smul.addr %s282, 4
      %s284 = scalar_lea.vmem %s0, %s283
      %s285 = smul.u32 8, %s17
      %s286 = ssub.s32 18, %s285
      %p287 = scmp.lt.s32.totalorder %s286, 8
      %s288 = scalar_select %p287, %s286, 8
      %s289 = smul.u32 64, %s288
      %s290 = sadd.s32 %s17, 1
      %s291 = smul.u32 %s290, 4
      %s292 = smul.u32 2, %s291
      %p293 = scmp.lt.s32.totalorder %s292, 17
      %s294 = scalar_select %p293, %s292, 17
      %s295 = smul.addr %s294, 4
      %s296 = scalar_lea.vmem %s1, %s295
      %s297 = sadd.s32 %s17, 1
      %s298 = smul.u32 %s297, 4
      %s299 = smul.u32 2, %s298
      %s300 = smul.u32 8, %s17
      %p301 = scmp.lt.s32.totalorder %s300, 15
      %s302 = scalar_select %p301, %s300, 15
      %s303 = scalar_lea.vmem %s3, %s302
      %s304 = smul.u32 8, %s17
      %s305 = smul.u32 8, %s17
      %p306 = scmp.lt.s32.totalorder %s305, 15
      %s307 = scalar_select %p306, %s305, 15
      %s308 = smul.addr %s307, 4
      %s309 = scalar_lea.vmem %s4, %s308
      %s310 = smul.u32 8, %s17
      %p311 = scmp.lt.s32.totalorder %s17, 1
      %s312 = scalar_select %p311, %s17, 1
      %s313 = smul.addr %s312, 2
      %s314 = smul.addr %s313, 8
      %s315 = scalar_lea.vmem %s5, %s314
      %v316 = vld [vmem:[%s284] sm:$0xff]
      %v317 = vld [vmem:[%s284 + $0x8] sm:$0xff]
      %v318 = vld [vmem:[%s284 + $0x10] sm:$0xff]
      %v319 = vld [vmem:[%s284 + $0x18] sm:$0xff]
      %v320 = vld [vmem:[%s296] sm:$0xff]
      %v325 = vunpack.c.l.b16 %v316
      %v326 = vunpack.c.h.b16 %v316
      %v327 = vunpack.c.l.b16 %v317
      %v328 = vunpack.c.h.b16 %v317
      %v329 = vunpack.c.l.b16 %v318
      %v330 = vunpack.c.h.b16 %v318
      %v331 = vunpack.c.l.b16 %v319
      %v332 = vunpack.c.h.b16 %v319
      %v333 = vpack.c.b16 %v325, %v325
      %v334 = vpack.c.b16 %v326, %v326
      %v335 = vpack.c.b16 %v327, %v327
      %v336 = vpack.c.b16 %v328, %v328
      %v337 = vpack.c.b16 %v329, %v329
      %v338 = vpack.c.b16 %v330, %v330
      %v339 = vpack.c.b16 %v331, %v331
      %v340 = vpack.c.b16 %v332, %v332
      %v350 = vunpack.c.l.b16 %v320
      %v351 = vunpack.c.h.b16 %v320
      %v352 = vpack.c.b16 %v350, %v350
      %v353 = vpack.c.b16 %v351, %v351
      %v356 = vunpack.c.l.bf16 %v333
      %v357 = vunpack.c.l.bf16 %v334
      %v358 = vunpack.c.l.bf16 %v335
      %v359 = vunpack.c.l.bf16 %v336
      %v360 = vunpack.c.l.bf16 %v337
      %v361 = vunpack.c.l.bf16 %v338
      %v362 = vunpack.c.l.bf16 %v339
      %v363 = vunpack.c.l.bf16 %v340
      %v364 = vunpack.c.l.bf16 %v352
      %v365 = vunpack.c.l.bf16 %v353
      %366 = vst [vmem:[#allocation2] sm:$0xff] %v356
      %367 = vst [vmem:[#allocation2 + $0x8] sm:$0xff] %v357
      %368 = vst [vmem:[#allocation2 + $0x10] sm:$0xff] %v358
      %369 = vst [vmem:[#allocation2 + $0x18] sm:$0xff] %v359
      %370 = vst [vmem:[#allocation2 + $0x20] sm:$0xff] %v360
      %371 = vst [vmem:[#allocation2 + $0x28] sm:$0xff] %v361
      %372 = vst [vmem:[#allocation2 + $0x30] sm:$0xff] %v362
      %373 = vst [vmem:[#allocation2 + $0x38] sm:$0xff] %v363
      %383 = vrot.lane.b32.xlu0 %v356, 127
      %v384 = vpop.permute.xlu0 %383
      %385 = vrot.lane.b32.xlu0 %v357, 127
      %v386 = vpop.permute.xlu0 %385
      %387 = vrot.lane.b32.xlu0 %v358, 127
      %v388 = vpop.permute.xlu0 %387
      %389 = vrot.lane.b32.xlu0 %v359, 127
      %v390 = vpop.permute.xlu0 %389
      %391 = vrot.lane.b32.xlu0 %v360, 127
      %v392 = vpop.permute.xlu0 %391
      %393 = vrot.lane.b32.xlu0 %v361, 127
      %v394 = vpop.permute.xlu0 %393
      %395 = vrot.lane.b32.xlu0 %v362, 127
      %v396 = vpop.permute.xlu0 %395
      %397 = vrot.lane.b32.xlu0 %v363, 127
      %v398 = vpop.permute.xlu0 %397
      %399 = vrot.lane.b32.xlu0 %v364, 127
      %v400 = vpop.permute.xlu0 %399
      %vm401 = vcmask 1039360
      %v402 = vsel %vm401, %v384, %v386
      %v403 = vsel %vm401, %v386, %v388
      %v404 = vsel %vm401, %v388, %v390
      %v405 = vsel %vm401, %v390, %v392
      %v406 = vsel %vm401, %v392, %v394
      %v407 = vsel %vm401, %v394, %v396
      %v408 = vsel %vm401, %v396, %v398
      %v409 = vsel %vm401, %v398, %v400
      %418 = vst [vmem:[#allocation2 + $0x40] sm:$0xff] %v402
      %419 = vst [vmem:[#allocation2 + $0x48] sm:$0xff] %v403
      %420 = vst [vmem:[#allocation2 + $0x50] sm:$0xff] %v404
      %421 = vst [vmem:[#allocation2 + $0x58] sm:$0xff] %v405
      %422 = vst [vmem:[#allocation2 + $0x60] sm:$0xff] %v406
      %423 = vst [vmem:[#allocation2 + $0x68] sm:$0xff] %v407
      %424 = vst [vmem:[#allocation2 + $0x70] sm:$0xff] %v408
      %425 = vst [vmem:[#allocation2 + $0x78] sm:$0xff] %v409
      %426 = vrot.lane.b32.xlu0 %v356, 126
      %v427 = vpop.permute.xlu0 %426
      %428 = vrot.lane.b32.xlu0 %v357, 126
      %v429 = vpop.permute.xlu0 %428
      %430 = vrot.lane.b32.xlu0 %v358, 126
      %v431 = vpop.permute.xlu0 %430
      %432 = vrot.lane.b32.xlu0 %v359, 126
      %v433 = vpop.permute.xlu0 %432
      %434 = vrot.lane.b32.xlu0 %v360, 126
      %v435 = vpop.permute.xlu0 %434
      %436 = vrot.lane.b32.xlu0 %v361, 126
      %v437 = vpop.permute.xlu0 %436
      %438 = vrot.lane.b32.xlu0 %v362, 126
      %v439 = vpop.permute.xlu0 %438
      %440 = vrot.lane.b32.xlu0 %v363, 126
      %v441 = vpop.permute.xlu0 %440
      %442 = vrot.lane.b32.xlu0 %v364, 126
      %v443 = vpop.permute.xlu0 %442
      %vm444 = vcmask 1031168
      %v445 = vsel %vm444, %v427, %v429
      %v446 = vsel %vm444, %v429, %v431
      %v447 = vsel %vm444, %v431, %v433
      %v448 = vsel %vm444, %v433, %v435
      %v449 = vsel %vm444, %v435, %v437
      %v450 = vsel %vm444, %v437, %v439
      %v451 = vsel %vm444, %v439, %v441
      %v452 = vsel %vm444, %v441, %v443
      %461 = vst [vmem:[#allocation2 + $0x80] sm:$0xff] %v445
      %462 = vst [vmem:[#allocation2 + $0x88] sm:$0xff] %v446
      %463 = vst [vmem:[#allocation2 + $0x90] sm:$0xff] %v447
      %464 = vst [vmem:[#allocation2 + $0x98] sm:$0xff] %v448
      %465 = vst [vmem:[#allocation2 + $0xa0] sm:$0xff] %v449
      %466 = vst [vmem:[#allocation2 + $0xa8] sm:$0xff] %v450
      %467 = vst [vmem:[#allocation2 + $0xb0] sm:$0xff] %v451
      %468 = vst [vmem:[#allocation2 + $0xb8] sm:$0xff] %v452
      %469 = vrot.lane.b32.xlu0 %v356, 118
      %v470 = vpop.permute.xlu0 %469
      %471 = vrot.lane.b32.xlu0 %v357, 118
      %v472 = vpop.permute.xlu0 %471
      %473 = vrot.lane.b32.xlu0 %v358, 118
      %v474 = vpop.permute.xlu0 %473
      %475 = vrot.lane.b32.xlu0 %v359, 118
      %v476 = vpop.permute.xlu0 %475
      %477 = vrot.lane.b32.xlu0 %v360, 118
      %v478 = vpop.permute.xlu0 %477
      %479 = vrot.lane.b32.xlu0 %v361, 118
      %v480 = vpop.permute.xlu0 %479
      %481 = vrot.lane.b32.xlu0 %v362, 118
      %v482 = vpop.permute.xlu0 %481
      %483 = vrot.lane.b32.xlu0 %v363, 118
      %v484 = vpop.permute.xlu0 %483
      %485 = vrot.lane.b32.xlu0 %v364, 118
      %v486 = vpop.permute.xlu0 %485
      %vm487 = vcmask 965632
      %v488 = vsel %vm487, %v470, %v472
      %v489 = vsel %vm487, %v472, %v474
      %v490 = vsel %vm487, %v474, %v476
      %v491 = vsel %vm487, %v476, %v478
      %v492 = vsel %vm487, %v478, %v480
      %v493 = vsel %vm487, %v480, %v482
      %v494 = vsel %vm487, %v482, %v484
      %v495 = vsel %vm487, %v484, %v486
      %504 = vst [vmem:[#allocation2 + $0xc0] sm:$0xff] %v488
      %505 = vst [vmem:[#allocation2 + $0xc8] sm:$0xff] %v489
      %506 = vst [vmem:[#allocation2 + $0xd0] sm:$0xff] %v490
      %507 = vst [vmem:[#allocation2 + $0xd8] sm:$0xff] %v491
      %508 = vst [vmem:[#allocation2 + $0xe0] sm:$0xff] %v492
      %509 = vst [vmem:[#allocation2 + $0xe8] sm:$0xff] %v493
      %510 = vst [vmem:[#allocation2 + $0xf0] sm:$0xff] %v494
      %511 = vst [vmem:[#allocation2 + $0xf8] sm:$0xff] %v495
      %512 = vrot.lane.b32.xlu0 %v356, 117
      %v513 = vpop.permute.xlu0 %512
      %514 = vrot.lane.b32.xlu0 %v357, 117
      %v515 = vpop.permute.xlu0 %514
      %516 = vrot.lane.b32.xlu0 %v358, 117
      %v517 = vpop.permute.xlu0 %516
      %518 = vrot.lane.b32.xlu0 %v359, 117
      %v519 = vpop.permute.xlu0 %518
      %520 = vrot.lane.b32.xlu0 %v360, 117
      %v521 = vpop.permute.xlu0 %520
      %522 = vrot.lane.b32.xlu0 %v361, 117
      %v523 = vpop.permute.xlu0 %522
      %524 = vrot.lane.b32.xlu0 %v362, 117
      %v525 = vpop.permute.xlu0 %524
      %526 = vrot.lane.b32.xlu0 %v363, 117
      %v527 = vpop.permute.xlu0 %526
      %528 = vrot.lane.b32.xlu0 %v364, 117
      %v529 = vpop.permute.xlu0 %528
      %vm530 = vcmask 957440
      %v531 = vsel %vm530, %v513, %v515
      %v532 = vsel %vm530, %v515, %v517
      %v533 = vsel %vm530, %v517, %v519
      %v534 = vsel %vm530, %v519, %v521
      %v535 = vsel %vm530, %v521, %v523
      %v536 = vsel %vm530, %v523, %v525
      %v537 = vsel %vm530, %v525, %v527
      %v538 = vsel %vm530, %v527, %v529
      %547 = vst [vmem:[#allocation2 + $0x100] sm:$0xff] %v531
      %548 = vst [vmem:[#allocation2 + $0x108] sm:$0xff] %v532
      %549 = vst [vmem:[#allocation2 + $0x110] sm:$0xff] %v533
      %550 = vst [vmem:[#allocation2 + $0x118] sm:$0xff] %v534
      %551 = vst [vmem:[#allocation2 + $0x120] sm:$0xff] %v535
      %552 = vst [vmem:[#allocation2 + $0x128] sm:$0xff] %v536
      %553 = vst [vmem:[#allocation2 + $0x130] sm:$0xff] %v537
      %554 = vst [vmem:[#allocation2 + $0x138] sm:$0xff] %v538
      %555 = vrot.lane.b32.xlu0 %v356, 116
      %v556 = vpop.permute.xlu0 %555
      %557 = vrot.lane.b32.xlu0 %v357, 116
      %v558 = vpop.permute.xlu0 %557
      %559 = vrot.lane.b32.xlu0 %v358, 116
      %v560 = vpop.permute.xlu0 %559
      %561 = vrot.lane.b32.xlu0 %v359, 116
      %v562 = vpop.permute.xlu0 %561
      %563 = vrot.lane.b32.xlu0 %v360, 116
      %v564 = vpop.permute.xlu0 %563
      %565 = vrot.lane.b32.xlu0 %v361, 116
      %v566 = vpop.permute.xlu0 %565
      %567 = vrot.lane.b32.xlu0 %v362, 116
      %v568 = vpop.permute.xlu0 %567
      %569 = vrot.lane.b32.xlu0 %v363, 116
      %v570 = vpop.permute.xlu0 %569
      %571 = vrot.lane.b32.xlu0 %v364, 116
      %v572 = vpop.permute.xlu0 %571
      %vm573 = vcmask 949248
      %v574 = vsel %vm573, %v556, %v558
      %v575 = vsel %vm573, %v558, %v560
      %v576 = vsel %vm573, %v560, %v562
      %v577 = vsel %vm573, %v562, %v564
      %v578 = vsel %vm573, %v564, %v566
      %v579 = vsel %vm573, %v566, %v568
      %v580 = vsel %vm573, %v568, %v570
      %v581 = vsel %vm573, %v570, %v572
      %590 = vst [vmem:[#allocation2 + $0x140] sm:$0xff] %v574
      %591 = vst [vmem:[#allocation2 + $0x148] sm:$0xff] %v575
      %592 = vst [vmem:[#allocation2 + $0x150] sm:$0xff] %v576
      %593 = vst [vmem:[#allocation2 + $0x158] sm:$0xff] %v577
      %594 = vst [vmem:[#allocation2 + $0x160] sm:$0xff] %v578
      %595 = vst [vmem:[#allocation2 + $0x168] sm:$0xff] %v579
      %596 = vst [vmem:[#allocation2 + $0x170] sm:$0xff] %v580
      %597 = vst [vmem:[#allocation2 + $0x178] sm:$0xff] %v581
      %598 = vrot.lane.b32.xlu0 %v356, 108
      %v599 = vpop.permute.xlu0 %598
      %600 = vrot.lane.b32.xlu0 %v357, 108
      %v601 = vpop.permute.xlu0 %600
      %602 = vrot.lane.b32.xlu0 %v358, 108
      %v603 = vpop.permute.xlu0 %602
      %604 = vrot.lane.b32.xlu0 %v359, 108
      %v605 = vpop.permute.xlu0 %604
      %606 = vrot.lane.b32.xlu0 %v360, 108
      %v607 = vpop.permute.xlu0 %606
      %608 = vrot.lane.b32.xlu0 %v361, 108
      %v609 = vpop.permute.xlu0 %608
      %610 = vrot.lane.b32.xlu0 %v362, 108
      %v611 = vpop.permute.xlu0 %610
      %612 = vrot.lane.b32.xlu0 %v363, 108
      %v613 = vpop.permute.xlu0 %612
      %614 = vrot.lane.b32.xlu0 %v364, 108
      %v615 = vpop.permute.xlu0 %614
      %vm616 = vcmask 883712
      %v617 = vsel %vm616, %v599, %v601
      %v618 = vsel %vm616, %v601, %v603
      %v619 = vsel %vm616, %v603, %v605
      %v620 = vsel %vm616, %v605, %v607
      %v621 = vsel %vm616, %v607, %v609
      %v622 = vsel %vm616, %v609, %v611
      %v623 = vsel %vm616, %v611, %v613
      %v624 = vsel %vm616, %v613, %v615
      %633 = vst [vmem:[#allocation2 + $0x180] sm:$0xff] %v617
      %634 = vst [vmem:[#allocation2 + $0x188] sm:$0xff] %v618
      %635 = vst [vmem:[#allocation2 + $0x190] sm:$0xff] %v619
      %636 = vst [vmem:[#allocation2 + $0x198] sm:$0xff] %v620
      %637 = vst [vmem:[#allocation2 + $0x1a0] sm:$0xff] %v621
      %638 = vst [vmem:[#allocation2 + $0x1a8] sm:$0xff] %v622
      %639 = vst [vmem:[#allocation2 + $0x1b0] sm:$0xff] %v623
      %640 = vst [vmem:[#allocation2 + $0x1b8] sm:$0xff] %v624
      %641 = vrot.lane.b32.xlu0 %v356, 107
      %v642 = vpop.permute.xlu0 %641
      %643 = vrot.lane.b32.xlu0 %v357, 107
      %v644 = vpop.permute.xlu0 %643
      %645 = vrot.lane.b32.xlu0 %v358, 107
      %v646 = vpop.permute.xlu0 %645
      %647 = vrot.lane.b32.xlu0 %v359, 107
      %v648 = vpop.permute.xlu0 %647
      %649 = vrot.lane.b32.xlu0 %v360, 107
      %v650 = vpop.permute.xlu0 %649
      %651 = vrot.lane.b32.xlu0 %v361, 107
      %v652 = vpop.permute.xlu0 %651
      %653 = vrot.lane.b32.xlu0 %v362, 107
      %v654 = vpop.permute.xlu0 %653
      %655 = vrot.lane.b32.xlu0 %v363, 107
      %v656 = vpop.permute.xlu0 %655
      %657 = vrot.lane.b32.xlu0 %v364, 107
      %v658 = vpop.permute.xlu0 %657
      %vm659 = vcmask 875520
      %v660 = vsel %vm659, %v642, %v644
      %v661 = vsel %vm659, %v644, %v646
      %v662 = vsel %vm659, %v646, %v648
      %v663 = vsel %vm659, %v648, %v650
      %v664 = vsel %vm659, %v650, %v652
      %v665 = vsel %vm659, %v652, %v654
      %v666 = vsel %vm659, %v654, %v656
      %v667 = vsel %vm659, %v656, %v658
      %676 = vst [vmem:[#allocation2 + $0x1c0] sm:$0xff] %v660
      %677 = vst [vmem:[#allocation2 + $0x1c8] sm:$0xff] %v661
      %678 = vst [vmem:[#allocation2 + $0x1d0] sm:$0xff] %v662
      %679 = vst [vmem:[#allocation2 + $0x1d8] sm:$0xff] %v663
      %680 = vst [vmem:[#allocation2 + $0x1e0] sm:$0xff] %v664
      %681 = vst [vmem:[#allocation2 + $0x1e8] sm:$0xff] %v665
      %682 = vst [vmem:[#allocation2 + $0x1f0] sm:$0xff] %v666
      %683 = vst [vmem:[#allocation2 + $0x1f8] sm:$0xff] %v667
      %684 = vrot.lane.b32.xlu0 %v356, 106
      %v685 = vpop.permute.xlu0 %684
      %686 = vrot.lane.b32.xlu0 %v357, 106
      %v687 = vpop.permute.xlu0 %686
      %688 = vrot.lane.b32.xlu0 %v358, 106
      %v689 = vpop.permute.xlu0 %688
      %690 = vrot.lane.b32.xlu0 %v359, 106
      %v691 = vpop.permute.xlu0 %690
      %692 = vrot.lane.b32.xlu0 %v360, 106
      %v693 = vpop.permute.xlu0 %692
      %694 = vrot.lane.b32.xlu0 %v361, 106
      %v695 = vpop.permute.xlu0 %694
      %696 = vrot.lane.b32.xlu0 %v362, 106
      %v697 = vpop.permute.xlu0 %696
      %698 = vrot.lane.b32.xlu0 %v363, 106
      %v699 = vpop.permute.xlu0 %698
      %700 = vrot.lane.b32.xlu0 %v364, 106
      %v701 = vpop.permute.xlu0 %700
      %vm702 = vcmask 867328
      %v703 = vsel %vm702, %v685, %v687
      %v704 = vsel %vm702, %v687, %v689
      %v705 = vsel %vm702, %v689, %v691
      %v706 = vsel %vm702, %v691, %v693
      %v707 = vsel %vm702, %v693, %v695
      %v708 = vsel %vm702, %v695, %v697
      %v709 = vsel %vm702, %v697, %v699
      %v710 = vsel %vm702, %v699, %v701
      %719 = vst [vmem:[#allocation2 + $0x200] sm:$0xff] %v703
      %720 = vst [vmem:[#allocation2 + $0x208] sm:$0xff] %v704
      %721 = vst [vmem:[#allocation2 + $0x210] sm:$0xff] %v705
      %722 = vst [vmem:[#allocation2 + $0x218] sm:$0xff] %v706
      %723 = vst [vmem:[#allocation2 + $0x220] sm:$0xff] %v707
      %724 = vst [vmem:[#allocation2 + $0x228] sm:$0xff] %v708
      %725 = vst [vmem:[#allocation2 + $0x230] sm:$0xff] %v709
      %726 = vst [vmem:[#allocation2 + $0x238] sm:$0xff] %v710
      %727 = vrot.lane.b32.xlu0 %v356, 28
      %v728 = vpop.permute.xlu0 %727
      %729 = vrot.lane.b32.xlu0 %v357, 28
      %v730 = vpop.permute.xlu0 %729
      %731 = vrot.lane.b32.xlu0 %v358, 28
      %v732 = vpop.permute.xlu0 %731
      %733 = vrot.lane.b32.xlu0 %v359, 28
      %v734 = vpop.permute.xlu0 %733
      %735 = vrot.lane.b32.xlu0 %v360, 28
      %v736 = vpop.permute.xlu0 %735
      %737 = vrot.lane.b32.xlu0 %v361, 28
      %v738 = vpop.permute.xlu0 %737
      %739 = vrot.lane.b32.xlu0 %v362, 28
      %v740 = vpop.permute.xlu0 %739
      %741 = vrot.lane.b32.xlu0 %v363, 28
      %v742 = vpop.permute.xlu0 %741
      %743 = vrot.lane.b32.xlu0 %v364, 28
      %v744 = vpop.permute.xlu0 %743
      %vm745 = vcmask 228352
      %v746 = vsel %vm745, %v728, %v730
      %v747 = vsel %vm745, %v730, %v732
      %v748 = vsel %vm745, %v732, %v734
      %v749 = vsel %vm745, %v734, %v736
      %v750 = vsel %vm745, %v736, %v738
      %v751 = vsel %vm745, %v738, %v740
      %v752 = vsel %vm745, %v740, %v742
      %v753 = vsel %vm745, %v742, %v744
      %762 = vst [vmem:[#allocation2 + $0x240] sm:$0xff] %v746
      %763 = vst [vmem:[#allocation2 + $0x248] sm:$0xff] %v747
      %764 = vst [vmem:[#allocation2 + $0x250] sm:$0xff] %v748
      %765 = vst [vmem:[#allocation2 + $0x258] sm:$0xff] %v749
      %766 = vst [vmem:[#allocation2 + $0x260] sm:$0xff] %v750
      %767 = vst [vmem:[#allocation2 + $0x268] sm:$0xff] %v751
      %768 = vst [vmem:[#allocation2 + $0x270] sm:$0xff] %v752
      %769 = vst [vmem:[#allocation2 + $0x278] sm:$0xff] %v753
      %770 = vrot.lane.b32.xlu0 %v356, 27
      %v771 = vpop.permute.xlu0 %770
      %772 = vrot.lane.b32.xlu0 %v357, 27
      %v773 = vpop.permute.xlu0 %772
      %774 = vrot.lane.b32.xlu0 %v358, 27
      %v775 = vpop.permute.xlu0 %774
      %776 = vrot.lane.b32.xlu0 %v359, 27
      %v777 = vpop.permute.xlu0 %776
      %778 = vrot.lane.b32.xlu0 %v360, 27
      %v779 = vpop.permute.xlu0 %778
      %780 = vrot.lane.b32.xlu0 %v361, 27
      %v781 = vpop.permute.xlu0 %780
      %782 = vrot.lane.b32.xlu0 %v362, 27
      %v783 = vpop.permute.xlu0 %782
      %784 = vrot.lane.b32.xlu0 %v363, 27
      %v785 = vpop.permute.xlu0 %784
      %786 = vrot.lane.b32.xlu0 %v364, 27
      %v787 = vpop.permute.xlu0 %786
      %vm788 = vcmask 220160
      %v789 = vsel %vm788, %v771, %v773
      %v790 = vsel %vm788, %v773, %v775
      %v791 = vsel %vm788, %v775, %v777
      %v792 = vsel %vm788, %v777, %v779
      %v793 = vsel %vm788, %v779, %v781
      %v794 = vsel %vm788, %v781, %v783
      %v795 = vsel %vm788, %v783, %v785
      %v796 = vsel %vm788, %v785, %v787
      %805 = vst [vmem:[#allocation2 + $0x280] sm:$0xff] %v789
      %806 = vst [vmem:[#allocation2 + $0x288] sm:$0xff] %v790
      %807 = vst [vmem:[#allocation2 + $0x290] sm:$0xff] %v791
      %808 = vst [vmem:[#allocation2 + $0x298] sm:$0xff] %v792
      %809 = vst [vmem:[#allocation2 + $0x2a0] sm:$0xff] %v793
      %810 = vst [vmem:[#allocation2 + $0x2a8] sm:$0xff] %v794
      %811 = vst [vmem:[#allocation2 + $0x2b0] sm:$0xff] %v795
      %812 = vst [vmem:[#allocation2 + $0x2b8] sm:$0xff] %v796
      %813 = vrot.lane.b32.xlu0 %v356, 26
      %v814 = vpop.permute.xlu0 %813
      %815 = vrot.lane.b32.xlu0 %v357, 26
      %v816 = vpop.permute.xlu0 %815
      %817 = vrot.lane.b32.xlu0 %v358, 26
      %v818 = vpop.permute.xlu0 %817
      %819 = vrot.lane.b32.xlu0 %v359, 26
      %v820 = vpop.permute.xlu0 %819
      %821 = vrot.lane.b32.xlu0 %v360, 26
      %v822 = vpop.permute.xlu0 %821
      %823 = vrot.lane.b32.xlu0 %v361, 26
      %v824 = vpop.permute.xlu0 %823
      %825 = vrot.lane.b32.xlu0 %v362, 26
      %v826 = vpop.permute.xlu0 %825
      %827 = vrot.lane.b32.xlu0 %v363, 26
      %v828 = vpop.permute.xlu0 %827
      %829 = vrot.lane.b32.xlu0 %v364, 26
      %v830 = vpop.permute.xlu0 %829
      %vm831 = vcmask 211968
      %v832 = vsel %vm831, %v814, %v816
      %v833 = vsel %vm831, %v816, %v818
      %v834 = vsel %vm831, %v818, %v820
      %v835 = vsel %vm831, %v820, %v822
      %v836 = vsel %vm831, %v822, %v824
      %v837 = vsel %vm831, %v824, %v826
      %v838 = vsel %vm831, %v826, %v828
      %v839 = vsel %vm831, %v828, %v830
      %848 = vst [vmem:[#allocation2 + $0x2c0] sm:$0xff] %v832
      %849 = vst [vmem:[#allocation2 + $0x2c8] sm:$0xff] %v833
      %850 = vst [vmem:[#allocation2 + $0x2d0] sm:$0xff] %v834
      %851 = vst [vmem:[#allocation2 + $0x2d8] sm:$0xff] %v835
      %852 = vst [vmem:[#allocation2 + $0x2e0] sm:$0xff] %v836
      %853 = vst [vmem:[#allocation2 + $0x2e8] sm:$0xff] %v837
      %854 = vst [vmem:[#allocation2 + $0x2f0] sm:$0xff] %v838
      %855 = vst [vmem:[#allocation2 + $0x2f8] sm:$0xff] %v839
      %856 = vrot.lane.b32.xlu0 %v356, 18
      %v857 = vpop.permute.xlu0 %856
      %858 = vrot.lane.b32.xlu0 %v357, 18
      %v859 = vpop.permute.xlu0 %858
      %860 = vrot.lane.b32.xlu0 %v358, 18
      %v861 = vpop.permute.xlu0 %860
      %862 = vrot.lane.b32.xlu0 %v359, 18
      %v863 = vpop.permute.xlu0 %862
      %864 = vrot.lane.b32.xlu0 %v360, 18
      %v865 = vpop.permute.xlu0 %864
      %866 = vrot.lane.b32.xlu0 %v361, 18
      %v867 = vpop.permute.xlu0 %866
      %868 = vrot.lane.b32.xlu0 %v362, 18
      %v869 = vpop.permute.xlu0 %868
      %870 = vrot.lane.b32.xlu0 %v363, 18
      %v871 = vpop.permute.xlu0 %870
      %872 = vrot.lane.b32.xlu0 %v364, 18
      %v873 = vpop.permute.xlu0 %872
      %vm874 = vcmask 146432
      %v875 = vsel %vm874, %v857, %v859
      %v876 = vsel %vm874, %v859, %v861
      %v877 = vsel %vm874, %v861, %v863
      %v878 = vsel %vm874, %v863, %v865
      %v879 = vsel %vm874, %v865, %v867
      %v880 = vsel %vm874, %v867, %v869
      %v881 = vsel %vm874, %v869, %v871
      %v882 = vsel %vm874, %v871, %v873
      %891 = vst [vmem:[#allocation2 + $0x300] sm:$0xff] %v875
      %892 = vst [vmem:[#allocation2 + $0x308] sm:$0xff] %v876
      %893 = vst [vmem:[#allocation2 + $0x310] sm:$0xff] %v877
      %894 = vst [vmem:[#allocation2 + $0x318] sm:$0xff] %v878
      %895 = vst [vmem:[#allocation2 + $0x320] sm:$0xff] %v879
      %896 = vst [vmem:[#allocation2 + $0x328] sm:$0xff] %v880
      %897 = vst [vmem:[#allocation2 + $0x330] sm:$0xff] %v881
      %898 = vst [vmem:[#allocation2 + $0x338] sm:$0xff] %v882
      %899 = vrot.lane.b32.xlu0 %v356, 17
      %v900 = vpop.permute.xlu0 %899
      %901 = vrot.lane.b32.xlu0 %v357, 17
      %v902 = vpop.permute.xlu0 %901
      %903 = vrot.lane.b32.xlu0 %v358, 17
      %v904 = vpop.permute.xlu0 %903
      %905 = vrot.lane.b32.xlu0 %v359, 17
      %v906 = vpop.permute.xlu0 %905
      %907 = vrot.lane.b32.xlu0 %v360, 17
      %v908 = vpop.permute.xlu0 %907
      %909 = vrot.lane.b32.xlu0 %v361, 17
      %v910 = vpop.permute.xlu0 %909
      %911 = vrot.lane.b32.xlu0 %v362, 17
      %v912 = vpop.permute.xlu0 %911
      %913 = vrot.lane.b32.xlu0 %v363, 17
      %v914 = vpop.permute.xlu0 %913
      %915 = vrot.lane.b32.xlu0 %v364, 17
      %v916 = vpop.permute.xlu0 %915
      %vm917 = vcmask 138240
      %v918 = vsel %vm917, %v900, %v902
      %v919 = vsel %vm917, %v902, %v904
      %v920 = vsel %vm917, %v904, %v906
      %v921 = vsel %vm917, %v906, %v908
      %v922 = vsel %vm917, %v908, %v910
      %v923 = vsel %vm917, %v910, %v912
      %v924 = vsel %vm917, %v912, %v914
      %v925 = vsel %vm917, %v914, %v916
      %934 = vst [vmem:[#allocation2 + $0x340] sm:$0xff] %v918
      %935 = vst [vmem:[#allocation2 + $0x348] sm:$0xff] %v919
      %936 = vst [vmem:[#allocation2 + $0x350] sm:$0xff] %v920
      %937 = vst [vmem:[#allocation2 + $0x358] sm:$0xff] %v921
      %938 = vst [vmem:[#allocation2 + $0x360] sm:$0xff] %v922
      %939 = vst [vmem:[#allocation2 + $0x368] sm:$0xff] %v923
      %940 = vst [vmem:[#allocation2 + $0x370] sm:$0xff] %v924
      %941 = vst [vmem:[#allocation2 + $0x378] sm:$0xff] %v925
      %942 = vrot.lane.b32.xlu0 %v356, 16
      %v943 = vpop.permute.xlu0 %942
      %944 = vrot.lane.b32.xlu0 %v357, 16
      %v945 = vpop.permute.xlu0 %944
      %946 = vrot.lane.b32.xlu0 %v358, 16
      %v947 = vpop.permute.xlu0 %946
      %948 = vrot.lane.b32.xlu0 %v359, 16
      %v949 = vpop.permute.xlu0 %948
      %950 = vrot.lane.b32.xlu0 %v360, 16
      %v951 = vpop.permute.xlu0 %950
      %952 = vrot.lane.b32.xlu0 %v361, 16
      %v953 = vpop.permute.xlu0 %952
      %954 = vrot.lane.b32.xlu0 %v362, 16
      %v955 = vpop.permute.xlu0 %954
      %956 = vrot.lane.b32.xlu0 %v363, 16
      %v957 = vpop.permute.xlu0 %956
      %958 = vrot.lane.b32.xlu0 %v364, 16
      %v959 = vpop.permute.xlu0 %958
      %vm960 = vcmask 130048
      %v961 = vsel %vm960, %v943, %v945
      %v962 = vsel %vm960, %v945, %v947
      %v963 = vsel %vm960, %v947, %v949
      %v964 = vsel %vm960, %v949, %v951
      %v965 = vsel %vm960, %v951, %v953
      %v966 = vsel %vm960, %v953, %v955
      %v967 = vsel %vm960, %v955, %v957
      %v968 = vsel %vm960, %v957, %v959
      %977 = vst [vmem:[#allocation2 + $0x380] sm:$0xff] %v961
      %978 = vst [vmem:[#allocation2 + $0x388] sm:$0xff] %v962
      %979 = vst [vmem:[#allocation2 + $0x390] sm:$0xff] %v963
      %980 = vst [vmem:[#allocation2 + $0x398] sm:$0xff] %v964
      %981 = vst [vmem:[#allocation2 + $0x3a0] sm:$0xff] %v965
      %982 = vst [vmem:[#allocation2 + $0x3a8] sm:$0xff] %v966
      %983 = vst [vmem:[#allocation2 + $0x3b0] sm:$0xff] %v967
      %984 = vst [vmem:[#allocation2 + $0x3b8] sm:$0xff] %v968
      %985 = vrot.lane.b32.xlu0 %v356, 8
      %v986 = vpop.permute.xlu0 %985
      %987 = vrot.lane.b32.xlu0 %v357, 8
      %v988 = vpop.permute.xlu0 %987
      %989 = vrot.lane.b32.xlu0 %v358, 8
      %v990 = vpop.permute.xlu0 %989
      %991 = vrot.lane.b32.xlu0 %v359, 8
      %v992 = vpop.permute.xlu0 %991
      %993 = vrot.lane.b32.xlu0 %v360, 8
      %v994 = vpop.permute.xlu0 %993
      %995 = vrot.lane.b32.xlu0 %v361, 8
      %v996 = vpop.permute.xlu0 %995
      %997 = vrot.lane.b32.xlu0 %v362, 8
      %v998 = vpop.permute.xlu0 %997
      %999 = vrot.lane.b32.xlu0 %v363, 8
      %v1000 = vpop.permute.xlu0 %999
      %1001 = vrot.lane.b32.xlu0 %v364, 8
      %v1002 = vpop.permute.xlu0 %1001
      %vm1003 = vcmask 64512
      %v1004 = vsel %vm1003, %v986, %v988
      %v1005 = vsel %vm1003, %v988, %v990
      %v1006 = vsel %vm1003, %v990, %v992
      %v1007 = vsel %vm1003, %v992, %v994
      %v1008 = vsel %vm1003, %v994, %v996
      %v1009 = vsel %vm1003, %v996, %v998
      %v1010 = vsel %vm1003, %v998, %v1000
      %v1011 = vsel %vm1003, %v1000, %v1002
      %1020 = vst [vmem:[#allocation2 + $0x3c0] sm:$0xff] %v1004
      %1021 = vst [vmem:[#allocation2 + $0x3c8] sm:$0xff] %v1005
      %1022 = vst [vmem:[#allocation2 + $0x3d0] sm:$0xff] %v1006
      %1023 = vst [vmem:[#allocation2 + $0x3d8] sm:$0xff] %v1007
      %1024 = vst [vmem:[#allocation2 + $0x3e0] sm:$0xff] %v1008
      %1025 = vst [vmem:[#allocation2 + $0x3e8] sm:$0xff] %v1009
      %1026 = vst [vmem:[#allocation2 + $0x3f0] sm:$0xff] %v1010
      %1027 = vst [vmem:[#allocation2 + $0x3f8] sm:$0xff] %v1011
      %1028 = vrot.lane.b32.xlu0 %v356, 7
      %v1029 = vpop.permute.xlu0 %1028
      %1030 = vrot.lane.b32.xlu0 %v357, 7
      %v1031 = vpop.permute.xlu0 %1030
      %1032 = vrot.lane.b32.xlu0 %v358, 7
      %v1033 = vpop.permute.xlu0 %1032
      %1034 = vrot.lane.b32.xlu0 %v359, 7
      %v1035 = vpop.permute.xlu0 %1034
      %1036 = vrot.lane.b32.xlu0 %v360, 7
      %v1037 = vpop.permute.xlu0 %1036
      %1038 = vrot.lane.b32.xlu0 %v361, 7
      %v1039 = vpop.permute.xlu0 %1038
      %1040 = vrot.lane.b32.xlu0 %v362, 7
      %v1041 = vpop.permute.xlu0 %1040
      %1042 = vrot.lane.b32.xlu0 %v363, 7
      %v1043 = vpop.permute.xlu0 %1042
      %1044 = vrot.lane.b32.xlu0 %v364, 7
      %v1045 = vpop.permute.xlu0 %1044
      %vm1046 = vcmask 56320
      %v1047 = vsel %vm1046, %v1029, %v1031
      %v1048 = vsel %vm1046, %v1031, %v1033
      %v1049 = vsel %vm1046, %v1033, %v1035
      %v1050 = vsel %vm1046, %v1035, %v1037
      %v1051 = vsel %vm1046, %v1037, %v1039
      %v1052 = vsel %vm1046, %v1039, %v1041
      %v1053 = vsel %vm1046, %v1041, %v1043
      %v1054 = vsel %vm1046, %v1043, %v1045
      %1063 = vst [vmem:[#allocation2 + $0x400] sm:$0xff] %v1047
      %1064 = vst [vmem:[#allocation2 + $0x408] sm:$0xff] %v1048
      %1065 = vst [vmem:[#allocation2 + $0x410] sm:$0xff] %v1049
      %1066 = vst [vmem:[#allocation2 + $0x418] sm:$0xff] %v1050
      %1067 = vst [vmem:[#allocation2 + $0x420] sm:$0xff] %v1051
      %1068 = vst [vmem:[#allocation2 + $0x428] sm:$0xff] %v1052
      %1069 = vst [vmem:[#allocation2 + $0x430] sm:$0xff] %v1053
      %1070 = vst [vmem:[#allocation2 + $0x438] sm:$0xff] %v1054
      %1071 = vrot.lane.b32.xlu0 %v356, 6
      %v1072 = vpop.permute.xlu0 %1071
      %1073 = vrot.lane.b32.xlu0 %v357, 6
      %v1074 = vpop.permute.xlu0 %1073
      %1075 = vrot.lane.b32.xlu0 %v358, 6
      %v1076 = vpop.permute.xlu0 %1075
      %1077 = vrot.lane.b32.xlu0 %v359, 6
      %v1078 = vpop.permute.xlu0 %1077
      %1079 = vrot.lane.b32.xlu0 %v360, 6
      %v1080 = vpop.permute.xlu0 %1079
      %1081 = vrot.lane.b32.xlu0 %v361, 6
      %v1082 = vpop.permute.xlu0 %1081
      %1083 = vrot.lane.b32.xlu0 %v362, 6
      %v1084 = vpop.permute.xlu0 %1083
      %1085 = vrot.lane.b32.xlu0 %v363, 6
      %v1086 = vpop.permute.xlu0 %1085
      %1087 = vrot.lane.b32.xlu0 %v364, 6
      %v1088 = vpop.permute.xlu0 %1087
      %vm1089 = vcmask 48128
      %v1090 = vsel %vm1089, %v1072, %v1074
      %v1091 = vsel %vm1089, %v1074, %v1076
      %v1092 = vsel %vm1089, %v1076, %v1078
      %v1093 = vsel %vm1089, %v1078, %v1080
      %v1094 = vsel %vm1089, %v1080, %v1082
      %v1095 = vsel %vm1089, %v1082, %v1084
      %v1096 = vsel %vm1089, %v1084, %v1086
      %v1097 = vsel %vm1089, %v1086, %v1088
      %1106 = vst [vmem:[#allocation2 + $0x440] sm:$0xff] %v1090
      %1107 = vst [vmem:[#allocation2 + $0x448] sm:$0xff] %v1091
      %1108 = vst [vmem:[#allocation2 + $0x450] sm:$0xff] %v1092
      %1109 = vst [vmem:[#allocation2 + $0x458] sm:$0xff] %v1093
      %1110 = vst [vmem:[#allocation2 + $0x460] sm:$0xff] %v1094
      %1111 = vst [vmem:[#allocation2 + $0x468] sm:$0xff] %v1095
      %1112 = vst [vmem:[#allocation2 + $0x470] sm:$0xff] %v1096
      %1113 = vst [vmem:[#allocation2 + $0x478] sm:$0xff] %v1097
      %1115 = vrot.lane.b32.xlu0 %v357, 56
      %v1116 = vpop.permute.xlu0 %1115
      %1117 = vrot.lane.b32.xlu0 %v358, 56
      %v1118 = vpop.permute.xlu0 %1117
      %1119 = vrot.lane.b32.xlu0 %v359, 56
      %v1120 = vpop.permute.xlu0 %1119
      %1121 = vrot.lane.b32.xlu0 %v360, 56
      %v1122 = vpop.permute.xlu0 %1121
      %1123 = vrot.lane.b32.xlu0 %v361, 56
      %v1124 = vpop.permute.xlu0 %1123
      %1125 = vrot.lane.b32.xlu0 %v362, 56
      %v1126 = vpop.permute.xlu0 %1125
      %1127 = vrot.lane.b32.xlu0 %v363, 56
      %v1128 = vpop.permute.xlu0 %1127
      %1129 = vrot.lane.b32.xlu0 %v364, 56
      %v1130 = vpop.permute.xlu0 %1129
      %1131 = vrot.lane.b32.xlu0 %v365, 56
      %v1132 = vpop.permute.xlu0 %1131
      %vm1133 = vcmask 457728
      %v1134 = vsel %vm1133, %v1116, %v1118
      %v1135 = vsel %vm1133, %v1118, %v1120
      %v1136 = vsel %vm1133, %v1120, %v1122
      %v1137 = vsel %vm1133, %v1122, %v1124
      %v1138 = vsel %vm1133, %v1124, %v1126
      %v1139 = vsel %vm1133, %v1126, %v1128
      %v1140 = vsel %vm1133, %v1128, %v1130
      %v1141 = vsel %vm1133, %v1130, %v1132
      %1150 = vst [vmem:[#allocation2 + $0x480] sm:$0xff] %v1134
      %1151 = vst [vmem:[#allocation2 + $0x488] sm:$0xff] %v1135
      %1152 = vst [vmem:[#allocation2 + $0x490] sm:$0xff] %v1136
      %1153 = vst [vmem:[#allocation2 + $0x498] sm:$0xff] %v1137
      %1154 = vst [vmem:[#allocation2 + $0x4a0] sm:$0xff] %v1138
      %1155 = vst [vmem:[#allocation2 + $0x4a8] sm:$0xff] %v1139
      %1156 = vst [vmem:[#allocation2 + $0x4b0] sm:$0xff] %v1140
      %1157 = vst [vmem:[#allocation2 + $0x4b8] sm:$0xff] %v1141
      %1158 = vrot.lane.b32.xlu0 %v357, 55
      %v1159 = vpop.permute.xlu0 %1158
      %1160 = vrot.lane.b32.xlu0 %v358, 55
      %v1161 = vpop.permute.xlu0 %1160
      %1162 = vrot.lane.b32.xlu0 %v359, 55
      %v1163 = vpop.permute.xlu0 %1162
      %1164 = vrot.lane.b32.xlu0 %v360, 55
      %v1165 = vpop.permute.xlu0 %1164
      %1166 = vrot.lane.b32.xlu0 %v361, 55
      %v1167 = vpop.permute.xlu0 %1166
      %1168 = vrot.lane.b32.xlu0 %v362, 55
      %v1169 = vpop.permute.xlu0 %1168
      %1170 = vrot.lane.b32.xlu0 %v363, 55
      %v1171 = vpop.permute.xlu0 %1170
      %1172 = vrot.lane.b32.xlu0 %v364, 55
      %v1173 = vpop.permute.xlu0 %1172
      %1174 = vrot.lane.b32.xlu0 %v365, 55
      %v1175 = vpop.permute.xlu0 %1174
      %vm1176 = vcmask 449536
      %v1177 = vsel %vm1176, %v1159, %v1161
      %v1178 = vsel %vm1176, %v1161, %v1163
      %v1179 = vsel %vm1176, %v1163, %v1165
      %v1180 = vsel %vm1176, %v1165, %v1167
      %v1181 = vsel %vm1176, %v1167, %v1169
      %v1182 = vsel %vm1176, %v1169, %v1171
      %v1183 = vsel %vm1176, %v1171, %v1173
      %v1184 = vsel %vm1176, %v1173, %v1175
      %1193 = vst [vmem:[#allocation2 + $0x4c0] sm:$0xff] %v1177
      %1194 = vst [vmem:[#allocation2 + $0x4c8] sm:$0xff] %v1178
      %1195 = vst [vmem:[#allocation2 + $0x4d0] sm:$0xff] %v1179
      %1196 = vst [vmem:[#allocation2 + $0x4d8] sm:$0xff] %v1180
      %1197 = vst [vmem:[#allocation2 + $0x4e0] sm:$0xff] %v1181
      %1198 = vst [vmem:[#allocation2 + $0x4e8] sm:$0xff] %v1182
      %1199 = vst [vmem:[#allocation2 + $0x4f0] sm:$0xff] %v1183
      %1200 = vst [vmem:[#allocation2 + $0x4f8] sm:$0xff] %v1184
      %1201 = vrot.lane.b32.xlu0 %v357, 54
      %v1202 = vpop.permute.xlu0 %1201
      %1203 = vrot.lane.b32.xlu0 %v358, 54
      %v1204 = vpop.permute.xlu0 %1203
      %1205 = vrot.lane.b32.xlu0 %v359, 54
      %v1206 = vpop.permute.xlu0 %1205
      %1207 = vrot.lane.b32.xlu0 %v360, 54
      %v1208 = vpop.permute.xlu0 %1207
      %1209 = vrot.lane.b32.xlu0 %v361, 54
      %v1210 = vpop.permute.xlu0 %1209
      %1211 = vrot.lane.b32.xlu0 %v362, 54
      %v1212 = vpop.permute.xlu0 %1211
      %1213 = vrot.lane.b32.xlu0 %v363, 54
      %v1214 = vpop.permute.xlu0 %1213
      %1215 = vrot.lane.b32.xlu0 %v364, 54
      %v1216 = vpop.permute.xlu0 %1215
      %1217 = vrot.lane.b32.xlu0 %v365, 54
      %v1218 = vpop.permute.xlu0 %1217
      %vm1219 = vcmask 441344
      %v1220 = vsel %vm1219, %v1202, %v1204
      %v1221 = vsel %vm1219, %v1204, %v1206
      %v1222 = vsel %vm1219, %v1206, %v1208
      %v1223 = vsel %vm1219, %v1208, %v1210
      %v1224 = vsel %vm1219, %v1210, %v1212
      %v1225 = vsel %vm1219, %v1212, %v1214
      %v1226 = vsel %vm1219, %v1214, %v1216
      %v1227 = vsel %vm1219, %v1216, %v1218
      %1236 = vst [vmem:[#allocation2 + $0x500] sm:$0xff] %v1220
      %1237 = vst [vmem:[#allocation2 + $0x508] sm:$0xff] %v1221
      %1238 = vst [vmem:[#allocation2 + $0x510] sm:$0xff] %v1222
      %1239 = vst [vmem:[#allocation2 + $0x518] sm:$0xff] %v1223
      %1240 = vst [vmem:[#allocation2 + $0x520] sm:$0xff] %v1224
      %1241 = vst [vmem:[#allocation2 + $0x528] sm:$0xff] %v1225
      %1242 = vst [vmem:[#allocation2 + $0x530] sm:$0xff] %v1226
      %1243 = vst [vmem:[#allocation2 + $0x538] sm:$0xff] %v1227
      %1244 = vrot.lane.b32.xlu0 %v357, 46
      %v1245 = vpop.permute.xlu0 %1244
      %1246 = vrot.lane.b32.xlu0 %v358, 46
      %v1247 = vpop.permute.xlu0 %1246
      %1248 = vrot.lane.b32.xlu0 %v359, 46
      %v1249 = vpop.permute.xlu0 %1248
      %1250 = vrot.lane.b32.xlu0 %v360, 46
      %v1251 = vpop.permute.xlu0 %1250
      %1252 = vrot.lane.b32.xlu0 %v361, 46
      %v1253 = vpop.permute.xlu0 %1252
      %1254 = vrot.lane.b32.xlu0 %v362, 46
      %v1255 = vpop.permute.xlu0 %1254
      %1256 = vrot.lane.b32.xlu0 %v363, 46
      %v1257 = vpop.permute.xlu0 %1256
      %1258 = vrot.lane.b32.xlu0 %v364, 46
      %v1259 = vpop.permute.xlu0 %1258
      %1260 = vrot.lane.b32.xlu0 %v365, 46
      %v1261 = vpop.permute.xlu0 %1260
      %vm1262 = vcmask 375808
      %v1263 = vsel %vm1262, %v1245, %v1247
      %v1264 = vsel %vm1262, %v1247, %v1249
      %v1265 = vsel %vm1262, %v1249, %v1251
      %v1266 = vsel %vm1262, %v1251, %v1253
      %v1267 = vsel %vm1262, %v1253, %v1255
      %v1268 = vsel %vm1262, %v1255, %v1257
      %v1269 = vsel %vm1262, %v1257, %v1259
      %v1270 = vsel %vm1262, %v1259, %v1261
      %1279 = vst [vmem:[#allocation2 + $0x540] sm:$0xff] %v1263
      %1280 = vst [vmem:[#allocation2 + $0x548] sm:$0xff] %v1264
      %1281 = vst [vmem:[#allocation2 + $0x550] sm:$0xff] %v1265
      %1282 = vst [vmem:[#allocation2 + $0x558] sm:$0xff] %v1266
      %1283 = vst [vmem:[#allocation2 + $0x560] sm:$0xff] %v1267
      %1284 = vst [vmem:[#allocation2 + $0x568] sm:$0xff] %v1268
      %1285 = vst [vmem:[#allocation2 + $0x570] sm:$0xff] %v1269
      %1286 = vst [vmem:[#allocation2 + $0x578] sm:$0xff] %v1270
      %1287 = vrot.lane.b32.xlu0 %v357, 45
      %v1288 = vpop.permute.xlu0 %1287
      %1289 = vrot.lane.b32.xlu0 %v358, 45
      %v1290 = vpop.permute.xlu0 %1289
      %1291 = vrot.lane.b32.xlu0 %v359, 45
      %v1292 = vpop.permute.xlu0 %1291
      %1293 = vrot.lane.b32.xlu0 %v360, 45
      %v1294 = vpop.permute.xlu0 %1293
      %1295 = vrot.lane.b32.xlu0 %v361, 45
      %v1296 = vpop.permute.xlu0 %1295
      %1297 = vrot.lane.b32.xlu0 %v362, 45
      %v1298 = vpop.permute.xlu0 %1297
      %1299 = vrot.lane.b32.xlu0 %v363, 45
      %v1300 = vpop.permute.xlu0 %1299
      %1301 = vrot.lane.b32.xlu0 %v364, 45
      %v1302 = vpop.permute.xlu0 %1301
      %1303 = vrot.lane.b32.xlu0 %v365, 45
      %v1304 = vpop.permute.xlu0 %1303
      %vm1305 = vcmask 367616
      %v1306 = vsel %vm1305, %v1288, %v1290
      %v1307 = vsel %vm1305, %v1290, %v1292
      %v1308 = vsel %vm1305, %v1292, %v1294
      %v1309 = vsel %vm1305, %v1294, %v1296
      %v1310 = vsel %vm1305, %v1296, %v1298
      %v1311 = vsel %vm1305, %v1298, %v1300
      %v1312 = vsel %vm1305, %v1300, %v1302
      %v1313 = vsel %vm1305, %v1302, %v1304
      %1322 = vst [vmem:[#allocation2 + $0x580] sm:$0xff] %v1306
      %1323 = vst [vmem:[#allocation2 + $0x588] sm:$0xff] %v1307
      %1324 = vst [vmem:[#allocation2 + $0x590] sm:$0xff] %v1308
      %1325 = vst [vmem:[#allocation2 + $0x598] sm:$0xff] %v1309
      %1326 = vst [vmem:[#allocation2 + $0x5a0] sm:$0xff] %v1310
      %1327 = vst [vmem:[#allocation2 + $0x5a8] sm:$0xff] %v1311
      %1328 = vst [vmem:[#allocation2 + $0x5b0] sm:$0xff] %v1312
      %1329 = vst [vmem:[#allocation2 + $0x5b8] sm:$0xff] %v1313
      %1330 = vrot.lane.b32.xlu0 %v357, 44
      %v1331 = vpop.permute.xlu0 %1330
      %1332 = vrot.lane.b32.xlu0 %v358, 44
      %v1333 = vpop.permute.xlu0 %1332
      %1334 = vrot.lane.b32.xlu0 %v359, 44
      %v1335 = vpop.permute.xlu0 %1334
      %1336 = vrot.lane.b32.xlu0 %v360, 44
      %v1337 = vpop.permute.xlu0 %1336
      %1338 = vrot.lane.b32.xlu0 %v361, 44
      %v1339 = vpop.permute.xlu0 %1338
      %1340 = vrot.lane.b32.xlu0 %v362, 44
      %v1341 = vpop.permute.xlu0 %1340
      %1342 = vrot.lane.b32.xlu0 %v363, 44
      %v1343 = vpop.permute.xlu0 %1342
      %1344 = vrot.lane.b32.xlu0 %v364, 44
      %v1345 = vpop.permute.xlu0 %1344
      %1346 = vrot.lane.b32.xlu0 %v365, 44
      %v1347 = vpop.permute.xlu0 %1346
      %vm1348 = vcmask 359424
      %v1349 = vsel %vm1348, %v1331, %v1333
      %v1350 = vsel %vm1348, %v1333, %v1335
      %v1351 = vsel %vm1348, %v1335, %v1337
      %v1352 = vsel %vm1348, %v1337, %v1339
      %v1353 = vsel %vm1348, %v1339, %v1341
      %v1354 = vsel %vm1348, %v1341, %v1343
      %v1355 = vsel %vm1348, %v1343, %v1345
      %v1356 = vsel %vm1348, %v1345, %v1347
      %1365 = vst [vmem:[#allocation2 + $0x5c0] sm:$0xff] %v1349
      %1366 = vst [vmem:[#allocation2 + $0x5c8] sm:$0xff] %v1350
      %1367 = vst [vmem:[#allocation2 + $0x5d0] sm:$0xff] %v1351
      %1368 = vst [vmem:[#allocation2 + $0x5d8] sm:$0xff] %v1352
      %1369 = vst [vmem:[#allocation2 + $0x5e0] sm:$0xff] %v1353
      %1370 = vst [vmem:[#allocation2 + $0x5e8] sm:$0xff] %v1354
      %1371 = vst [vmem:[#allocation2 + $0x5f0] sm:$0xff] %v1355
      %1372 = vst [vmem:[#allocation2 + $0x5f8] sm:$0xff] %v1356
      %1373 = vrot.lane.b32.xlu0 %v357, 36
      %v1374 = vpop.permute.xlu0 %1373
      %1375 = vrot.lane.b32.xlu0 %v358, 36
      %v1376 = vpop.permute.xlu0 %1375
      %1377 = vrot.lane.b32.xlu0 %v359, 36
      %v1378 = vpop.permute.xlu0 %1377
      %1379 = vrot.lane.b32.xlu0 %v360, 36
      %v1380 = vpop.permute.xlu0 %1379
      %1381 = vrot.lane.b32.xlu0 %v361, 36
      %v1382 = vpop.permute.xlu0 %1381
      %1383 = vrot.lane.b32.xlu0 %v362, 36
      %v1384 = vpop.permute.xlu0 %1383
      %1385 = vrot.lane.b32.xlu0 %v363, 36
      %v1386 = vpop.permute.xlu0 %1385
      %1387 = vrot.lane.b32.xlu0 %v364, 36
      %v1388 = vpop.permute.xlu0 %1387
      %1389 = vrot.lane.b32.xlu0 %v365, 36
      %v1390 = vpop.permute.xlu0 %1389
      %vm1391 = vcmask 293888
      %v1392 = vsel %vm1391, %v1374, %v1376
      %v1393 = vsel %vm1391, %v1376, %v1378
      %v1394 = vsel %vm1391, %v1378, %v1380
      %v1395 = vsel %vm1391, %v1380, %v1382
      %v1396 = vsel %vm1391, %v1382, %v1384
      %v1397 = vsel %vm1391, %v1384, %v1386
      %v1398 = vsel %vm1391, %v1386, %v1388
      %v1399 = vsel %vm1391, %v1388, %v1390
      %1408 = vst [vmem:[#allocation2 + $0x600] sm:$0xff] %v1392
      %1409 = vst [vmem:[#allocation2 + $0x608] sm:$0xff] %v1393
      %1410 = vst [vmem:[#allocation2 + $0x610] sm:$0xff] %v1394
      %1411 = vst [vmem:[#allocation2 + $0x618] sm:$0xff] %v1395
      %1412 = vst [vmem:[#allocation2 + $0x620] sm:$0xff] %v1396
      %1413 = vst [vmem:[#allocation2 + $0x628] sm:$0xff] %v1397
      %1414 = vst [vmem:[#allocation2 + $0x630] sm:$0xff] %v1398
      %1415 = vst [vmem:[#allocation2 + $0x638] sm:$0xff] %v1399
      %1416 = vrot.lane.b32.xlu0 %v357, 35
      %v1417 = vpop.permute.xlu0 %1416
      %1418 = vrot.lane.b32.xlu0 %v358, 35
      %v1419 = vpop.permute.xlu0 %1418
      %1420 = vrot.lane.b32.xlu0 %v359, 35
      %v1421 = vpop.permute.xlu0 %1420
      %1422 = vrot.lane.b32.xlu0 %v360, 35
      %v1423 = vpop.permute.xlu0 %1422
      %1424 = vrot.lane.b32.xlu0 %v361, 35
      %v1425 = vpop.permute.xlu0 %1424
      %1426 = vrot.lane.b32.xlu0 %v362, 35
      %v1427 = vpop.permute.xlu0 %1426
      %1428 = vrot.lane.b32.xlu0 %v363, 35
      %v1429 = vpop.permute.xlu0 %1428
      %1430 = vrot.lane.b32.xlu0 %v364, 35
      %v1431 = vpop.permute.xlu0 %1430
      %1432 = vrot.lane.b32.xlu0 %v365, 35
      %v1433 = vpop.permute.xlu0 %1432
      %vm1434 = vcmask 285696
      %v1435 = vsel %vm1434, %v1417, %v1419
      %v1436 = vsel %vm1434, %v1419, %v1421
      %v1437 = vsel %vm1434, %v1421, %v1423
      %v1438 = vsel %vm1434, %v1423, %v1425
      %v1439 = vsel %vm1434, %v1425, %v1427
      %v1440 = vsel %vm1434, %v1427, %v1429
      %v1441 = vsel %vm1434, %v1429, %v1431
      %v1442 = vsel %vm1434, %v1431, %v1433
      %1451 = vst [vmem:[#allocation2 + $0x640] sm:$0xff] %v1435
      %1452 = vst [vmem:[#allocation2 + $0x648] sm:$0xff] %v1436
      %1453 = vst [vmem:[#allocation2 + $0x650] sm:$0xff] %v1437
      %1454 = vst [vmem:[#allocation2 + $0x658] sm:$0xff] %v1438
      %1455 = vst [vmem:[#allocation2 + $0x660] sm:$0xff] %v1439
      %1456 = vst [vmem:[#allocation2 + $0x668] sm:$0xff] %v1440
      %1457 = vst [vmem:[#allocation2 + $0x670] sm:$0xff] %v1441
      %1458 = vst [vmem:[#allocation2 + $0x678] sm:$0xff] %v1442
      %1459 = vrot.lane.b32.xlu0 %v357, 34
      %v1460 = vpop.permute.xlu0 %1459
      %1461 = vrot.lane.b32.xlu0 %v358, 34
      %v1462 = vpop.permute.xlu0 %1461
      %1463 = vrot.lane.b32.xlu0 %v359, 34
      %v1464 = vpop.permute.xlu0 %1463
      %1465 = vrot.lane.b32.xlu0 %v360, 34
      %v1466 = vpop.permute.xlu0 %1465
      %1467 = vrot.lane.b32.xlu0 %v361, 34
      %v1468 = vpop.permute.xlu0 %1467
      %1469 = vrot.lane.b32.xlu0 %v362, 34
      %v1470 = vpop.permute.xlu0 %1469
      %1471 = vrot.lane.b32.xlu0 %v363, 34
      %v1472 = vpop.permute.xlu0 %1471
      %1473 = vrot.lane.b32.xlu0 %v364, 34
      %v1474 = vpop.permute.xlu0 %1473
      %1475 = vrot.lane.b32.xlu0 %v365, 34
      %v1476 = vpop.permute.xlu0 %1475
      %vm1477 = vcmask 277504
      %v1478 = vsel %vm1477, %v1460, %v1462
      %v1479 = vsel %vm1477, %v1462, %v1464
      %v1480 = vsel %vm1477, %v1464, %v1466
      %v1481 = vsel %vm1477, %v1466, %v1468
      %v1482 = vsel %vm1477, %v1468, %v1470
      %v1483 = vsel %vm1477, %v1470, %v1472
      %v1484 = vsel %vm1477, %v1472, %v1474
      %v1485 = vsel %vm1477, %v1474, %v1476
      %1494 = vst [vmem:[#allocation2 + $0x680] sm:$0xff] %v1478
      %1495 = vst [vmem:[#allocation2 + $0x688] sm:$0xff] %v1479
      %1496 = vst [vmem:[#allocation2 + $0x690] sm:$0xff] %v1480
      %1497 = vst [vmem:[#allocation2 + $0x698] sm:$0xff] %v1481
      %1498 = vst [vmem:[#allocation2 + $0x6a0] sm:$0xff] %v1482
      %1499 = vst [vmem:[#allocation2 + $0x6a8] sm:$0xff] %v1483
      %1500 = vst [vmem:[#allocation2 + $0x6b0] sm:$0xff] %v1484
      %1501 = vst [vmem:[#allocation2 + $0x6b8] sm:$0xff] %v1485
      %v1502 = vld [vmem:[%s2] sm:$0xff]
      %v1503 = vld [vmem:[%s2 + $0x8] sm:$0xff]
      %v1504 = vld [vmem:[#allocation2] sm:$0xff]
      %v1505 = vld [vmem:[#allocation2 + $0x8] sm:$0xff]
      %v1506 = vld [vmem:[#allocation2 + $0x10] sm:$0xff]
      %v1507 = vld [vmem:[#allocation2 + $0x18] sm:$0xff]
      %v1508 = vld [vmem:[#allocation2 + $0x20] sm:$0xff]
      %v1509 = vld [vmem:[#allocation2 + $0x28] sm:$0xff]
      %v1510 = vld [vmem:[#allocation2 + $0x30] sm:$0xff]
      %v1511 = vld [vmem:[#allocation2 + $0x38] sm:$0xff]
      %v1512 = vld [vmem:[#allocation2 + $0x40] sm:$0xff]
      %v1513 = vld [vmem:[#allocation2 + $0x48] sm:$0xff]
      %v1514 = vld [vmem:[#allocation2 + $0x50] sm:$0xff]
      %v1515 = vld [vmem:[#allocation2 + $0x58] sm:$0xff]
      %v1516 = vld [vmem:[#allocation2 + $0x60] sm:$0xff]
      %v1517 = vld [vmem:[#allocation2 + $0x68] sm:$0xff]
      %v1518 = vld [vmem:[#allocation2 + $0x70] sm:$0xff]
      %v1519 = vld [vmem:[#allocation2 + $0x78] sm:$0xff]
      %v1520 = vld [vmem:[#allocation2 + $0x80] sm:$0xff]
      %v1521 = vld [vmem:[#allocation2 + $0x88] sm:$0xff]
      %v1522 = vld [vmem:[#allocation2 + $0x90] sm:$0xff]
      %v1523 = vld [vmem:[#allocation2 + $0x98] sm:$0xff]
      %v1524 = vld [vmem:[#allocation2 + $0xa0] sm:$0xff]
      %v1525 = vld [vmem:[#allocation2 + $0xa8] sm:$0xff]
      %v1526 = vld [vmem:[#allocation2 + $0xb0] sm:$0xff]
      %v1527 = vld [vmem:[#allocation2 + $0xb8] sm:$0xff]
      %v1528 = vld [vmem:[#allocation2 + $0xc0] sm:$0xff]
      %v1529 = vld [vmem:[#allocation2 + $0xc8] sm:$0xff]
      %v1530 = vld [vmem:[#allocation2 + $0xd0] sm:$0xff]
      %v1531 = vld [vmem:[#allocation2 + $0xd8] sm:$0xff]
      %v1532 = vld [vmem:[#allocation2 + $0xe0] sm:$0xff]
      %v1533 = vld [vmem:[#allocation2 + $0xe8] sm:$0xff]
      %v1534 = vld [vmem:[#allocation2 + $0xf0] sm:$0xff]
      %v1535 = vld [vmem:[#allocation2 + $0xf8] sm:$0xff]
      %v1536 = vld [vmem:[#allocation2 + $0x100] sm:$0xff]
      %v1537 = vld [vmem:[#allocation2 + $0x108] sm:$0xff]
      %v1538 = vld [vmem:[#allocation2 + $0x110] sm:$0xff]
      %v1539 = vld [vmem:[#allocation2 + $0x118] sm:$0xff]
      %v1540 = vld [vmem:[#allocation2 + $0x120] sm:$0xff]
      %v1541 = vld [vmem:[#allocation2 + $0x128] sm:$0xff]
      %v1542 = vld [vmem:[#allocation2 + $0x130] sm:$0xff]
      %v1543 = vld [vmem:[#allocation2 + $0x138] sm:$0xff]
      %v1544 = vld [vmem:[#allocation2 + $0x140] sm:$0xff]
      %v1545 = vld [vmem:[#allocation2 + $0x148] sm:$0xff]
      %v1546 = vld [vmem:[#allocation2 + $0x150] sm:$0xff]
      %v1547 = vld [vmem:[#allocation2 + $0x158] sm:$0xff]
      %v1548 = vld [vmem:[#allocation2 + $0x160] sm:$0xff]
      %v1549 = vld [vmem:[#allocation2 + $0x168] sm:$0xff]
      %v1550 = vld [vmem:[#allocation2 + $0x170] sm:$0xff]
      %v1551 = vld [vmem:[#allocation2 + $0x178] sm:$0xff]
      %v1552 = vld [vmem:[#allocation2 + $0x180] sm:$0xff]
      %v1553 = vld [vmem:[#allocation2 + $0x188] sm:$0xff]
      %v1554 = vld [vmem:[#allocation2 + $0x190] sm:$0xff]
      %v1555 = vld [vmem:[#allocation2 + $0x198] sm:$0xff]
      %v1556 = vld [vmem:[#allocation2 + $0x1a0] sm:$0xff]
      %v1557 = vld [vmem:[#allocation2 + $0x1a8] sm:$0xff]
      %v1558 = vld [vmem:[#allocation2 + $0x1b0] sm:$0xff]
      %v1559 = vld [vmem:[#allocation2 + $0x1b8] sm:$0xff]
      %v1560 = vld [vmem:[#allocation2 + $0x1c0] sm:$0xff]
      %v1561 = vld [vmem:[#allocation2 + $0x1c8] sm:$0xff]
      %v1562 = vld [vmem:[#allocation2 + $0x1d0] sm:$0xff]
      %v1563 = vld [vmem:[#allocation2 + $0x1d8] sm:$0xff]
      %v1564 = vld [vmem:[#allocation2 + $0x1e0] sm:$0xff]
      %v1565 = vld [vmem:[#allocation2 + $0x1e8] sm:$0xff]
      %v1566 = vld [vmem:[#allocation2 + $0x1f0] sm:$0xff]
      %v1567 = vld [vmem:[#allocation2 + $0x1f8] sm:$0xff]
      %v1568 = vld [vmem:[#allocation2 + $0x200] sm:$0xff]
      %v1569 = vld [vmem:[#allocation2 + $0x208] sm:$0xff]
      %v1570 = vld [vmem:[#allocation2 + $0x210] sm:$0xff]
      %v1571 = vld [vmem:[#allocation2 + $0x218] sm:$0xff]
      %v1572 = vld [vmem:[#allocation2 + $0x220] sm:$0xff]
      %v1573 = vld [vmem:[#allocation2 + $0x228] sm:$0xff]
      %v1574 = vld [vmem:[#allocation2 + $0x230] sm:$0xff]
      %v1575 = vld [vmem:[#allocation2 + $0x238] sm:$0xff]
      %v1576 = vld [vmem:[#allocation2 + $0x240] sm:$0xff]
      %v1577 = vld [vmem:[#allocation2 + $0x248] sm:$0xff]
      %v1578 = vld [vmem:[#allocation2 + $0x250] sm:$0xff]
      %v1579 = vld [vmem:[#allocation2 + $0x258] sm:$0xff]
      %v1580 = vld [vmem:[#allocation2 + $0x260] sm:$0xff]
      %v1581 = vld [vmem:[#allocation2 + $0x268] sm:$0xff]
      %v1582 = vld [vmem:[#allocation2 + $0x270] sm:$0xff]
      %v1583 = vld [vmem:[#allocation2 + $0x278] sm:$0xff]
      %v1584 = vld [vmem:[#allocation2 + $0x280] sm:$0xff]
      %v1585 = vld [vmem:[#allocation2 + $0x288] sm:$0xff]
      %v1586 = vld [vmem:[#allocation2 + $0x290] sm:$0xff]
      %v1587 = vld [vmem:[#allocation2 + $0x298] sm:$0xff]
      %v1588 = vld [vmem:[#allocation2 + $0x2a0] sm:$0xff]
      %v1589 = vld [vmem:[#allocation2 + $0x2a8] sm:$0xff]
      %v1590 = vld [vmem:[#allocation2 + $0x2b0] sm:$0xff]
      %v1591 = vld [vmem:[#allocation2 + $0x2b8] sm:$0xff]
      %v1592 = vld [vmem:[#allocation2 + $0x2c0] sm:$0xff]
      %v1593 = vld [vmem:[#allocation2 + $0x2c8] sm:$0xff]
      %v1594 = vld [vmem:[#allocation2 + $0x2d0] sm:$0xff]
      %v1595 = vld [vmem:[#allocation2 + $0x2d8] sm:$0xff]
      %v1596 = vld [vmem:[#allocation2 + $0x2e0] sm:$0xff]
      %v1597 = vld [vmem:[#allocation2 + $0x2e8] sm:$0xff]
      %v1598 = vld [vmem:[#allocation2 + $0x2f0] sm:$0xff]
      %v1599 = vld [vmem:[#allocation2 + $0x2f8] sm:$0xff]
      %v1600 = vld [vmem:[#allocation2 + $0x300] sm:$0xff]
      %v1601 = vld [vmem:[#allocation2 + $0x308] sm:$0xff]
      %v1602 = vld [vmem:[#allocation2 + $0x310] sm:$0xff]
      %v1603 = vld [vmem:[#allocation2 + $0x318] sm:$0xff]
      %v1604 = vld [vmem:[#allocation2 + $0x320] sm:$0xff]
      %v1605 = vld [vmem:[#allocation2 + $0x328] sm:$0xff]
      %v1606 = vld [vmem:[#allocation2 + $0x330] sm:$0xff]
      %v1607 = vld [vmem:[#allocation2 + $0x338] sm:$0xff]
      %v1608 = vld [vmem:[#allocation2 + $0x340] sm:$0xff]
      %v1609 = vld [vmem:[#allocation2 + $0x348] sm:$0xff]
      %v1610 = vld [vmem:[#allocation2 + $0x350] sm:$0xff]
      %v1611 = vld [vmem:[#allocation2 + $0x358] sm:$0xff]
      %v1612 = vld [vmem:[#allocation2 + $0x360] sm:$0xff]
      %v1613 = vld [vmem:[#allocation2 + $0x368] sm:$0xff]
      %v1614 = vld [vmem:[#allocation2 + $0x370] sm:$0xff]
      %v1615 = vld [vmem:[#allocation2 + $0x378] sm:$0xff]
      %v1616 = vld [vmem:[#allocation2 + $0x380] sm:$0xff]
      %v1617 = vld [vmem:[#allocation2 + $0x388] sm:$0xff]
      %v1618 = vld [vmem:[#allocation2 + $0x390] sm:$0xff]
      %v1619 = vld [vmem:[#allocation2 + $0x398] sm:$0xff]
      %v1620 = vld [vmem:[#allocation2 + $0x3a0] sm:$0xff]
      %v1621 = vld [vmem:[#allocation2 + $0x3a8] sm:$0xff]
      %v1622 = vld [vmem:[#allocation2 + $0x3b0] sm:$0xff]
      %v1623 = vld [vmem:[#allocation2 + $0x3b8] sm:$0xff]
      %v1624 = vld [vmem:[#allocation2 + $0x3c0] sm:$0xff]
      %v1625 = vld [vmem:[#allocation2 + $0x3c8] sm:$0xff]
      %v1626 = vld [vmem:[#allocation2 + $0x3d0] sm:$0xff]
      %v1627 = vld [vmem:[#allocation2 + $0x3d8] sm:$0xff]
      %v1628 = vld [vmem:[#allocation2 + $0x3e0] sm:$0xff]
      %v1629 = vld [vmem:[#allocation2 + $0x3e8] sm:$0xff]
      %v1630 = vld [vmem:[#allocation2 + $0x3f0] sm:$0xff]
      %v1631 = vld [vmem:[#allocation2 + $0x3f8] sm:$0xff]
      %v1632 = vld [vmem:[#allocation2 + $0x400] sm:$0xff]
      %v1633 = vld [vmem:[#allocation2 + $0x408] sm:$0xff]
      %v1634 = vld [vmem:[#allocation2 + $0x410] sm:$0xff]
      %v1635 = vld [vmem:[#allocation2 + $0x418] sm:$0xff]
      %v1636 = vld [vmem:[#allocation2 + $0x420] sm:$0xff]
      %v1637 = vld [vmem:[#allocation2 + $0x428] sm:$0xff]
      %v1638 = vld [vmem:[#allocation2 + $0x430] sm:$0xff]
      %v1639 = vld [vmem:[#allocation2 + $0x438] sm:$0xff]
      %v1640 = vld [vmem:[#allocation2 + $0x440] sm:$0xff]
      %v1641 = vld [vmem:[#allocation2 + $0x448] sm:$0xff]
      %v1642 = vld [vmem:[#allocation2 + $0x450] sm:$0xff]
      %v1643 = vld [vmem:[#allocation2 + $0x458] sm:$0xff]
      %v1644 = vld [vmem:[#allocation2 + $0x460] sm:$0xff]
      %v1645 = vld [vmem:[#allocation2 + $0x468] sm:$0xff]
      %v1646 = vld [vmem:[#allocation2 + $0x470] sm:$0xff]
      %v1647 = vld [vmem:[#allocation2 + $0x478] sm:$0xff]
      %v1648 = vld [vmem:[#allocation2 + $0x480] sm:$0xff]
      %v1649 = vld [vmem:[#allocation2 + $0x488] sm:$0xff]
      %v1650 = vld [vmem:[#allocation2 + $0x490] sm:$0xff]
      %v1651 = vld [vmem:[#allocation2 + $0x498] sm:$0xff]
      %v1652 = vld [vmem:[#allocation2 + $0x4a0] sm:$0xff]
      %v1653 = vld [vmem:[#allocation2 + $0x4a8] sm:$0xff]
      %v1654 = vld [vmem:[#allocation2 + $0x4b0] sm:$0xff]
      %v1655 = vld [vmem:[#allocation2 + $0x4b8] sm:$0xff]
      %v1656 = vld [vmem:[#allocation2 + $0x4c0] sm:$0xff]
      %v1657 = vld [vmem:[#allocation2 + $0x4c8] sm:$0xff]
      %v1658 = vld [vmem:[#allocation2 + $0x4d0] sm:$0xff]
      %v1659 = vld [vmem:[#allocation2 + $0x4d8] sm:$0xff]
      %v1660 = vld [vmem:[#allocation2 + $0x4e0] sm:$0xff]
      %v1661 = vld [vmem:[#allocation2 + $0x4e8] sm:$0xff]
      %v1662 = vld [vmem:[#allocation2 + $0x4f0] sm:$0xff]
      %v1663 = vld [vmem:[#allocation2 + $0x4f8] sm:$0xff]
      %v1664 = vld [vmem:[#allocation2 + $0x500] sm:$0xff]
      %v1665 = vld [vmem:[#allocation2 + $0x508] sm:$0xff]
      %v1666 = vld [vmem:[#allocation2 + $0x510] sm:$0xff]
      %v1667 = vld [vmem:[#allocation2 + $0x518] sm:$0xff]
      %v1668 = vld [vmem:[#allocation2 + $0x520] sm:$0xff]
      %v1669 = vld [vmem:[#allocation2 + $0x528] sm:$0xff]
      %v1670 = vld [vmem:[#allocation2 + $0x530] sm:$0xff]
      %v1671 = vld [vmem:[#allocation2 + $0x538] sm:$0xff]
      %v1672 = vld [vmem:[#allocation2 + $0x540] sm:$0xff]
      %v1673 = vld [vmem:[#allocation2 + $0x548] sm:$0xff]
      %v1674 = vld [vmem:[#allocation2 + $0x550] sm:$0xff]
      %v1675 = vld [vmem:[#allocation2 + $0x558] sm:$0xff]
      %v1676 = vld [vmem:[#allocation2 + $0x560] sm:$0xff]
      %v1677 = vld [vmem:[#allocation2 + $0x568] sm:$0xff]
      %v1678 = vld [vmem:[#allocation2 + $0x570] sm:$0xff]
      %v1679 = vld [vmem:[#allocation2 + $0x578] sm:$0xff]
      %v1680 = vld [vmem:[#allocation2 + $0x580] sm:$0xff]
      %v1681 = vld [vmem:[#allocation2 + $0x588] sm:$0xff]
      %v1682 = vld [vmem:[#allocation2 + $0x590] sm:$0xff]
      %v1683 = vld [vmem:[#allocation2 + $0x598] sm:$0xff]
      %v1684 = vld [vmem:[#allocation2 + $0x5a0] sm:$0xff]
      %v1685 = vld [vmem:[#allocation2 + $0x5a8] sm:$0xff]
      %v1686 = vld [vmem:[#allocation2 + $0x5b0] sm:$0xff]
      %v1687 = vld [vmem:[#allocation2 + $0x5b8] sm:$0xff]
      %v1688 = vld [vmem:[#allocation2 + $0x5c0] sm:$0xff]
      %v1689 = vld [vmem:[#allocation2 + $0x5c8] sm:$0xff]
      %v1690 = vld [vmem:[#allocation2 + $0x5d0] sm:$0xff]
      %v1691 = vld [vmem:[#allocation2 + $0x5d8] sm:$0xff]
      %v1692 = vld [vmem:[#allocation2 + $0x5e0] sm:$0xff]
      %v1693 = vld [vmem:[#allocation2 + $0x5e8] sm:$0xff]
      %v1694 = vld [vmem:[#allocation2 + $0x5f0] sm:$0xff]
      %v1695 = vld [vmem:[#allocation2 + $0x5f8] sm:$0xff]
      %v1696 = vld [vmem:[#allocation2 + $0x600] sm:$0xff]
      %v1697 = vld [vmem:[#allocation2 + $0x608] sm:$0xff]
      %v1698 = vld [vmem:[#allocation2 + $0x610] sm:$0xff]
      %v1699 = vld [vmem:[#allocation2 + $0x618] sm:$0xff]
      %v1700 = vld [vmem:[#allocation2 + $0x620] sm:$0xff]
      %v1701 = vld [vmem:[#allocation2 + $0x628] sm:$0xff]
      %v1702 = vld [vmem:[#allocation2 + $0x630] sm:$0xff]
      %v1703 = vld [vmem:[#allocation2 + $0x638] sm:$0xff]
      %v1704 = vld [vmem:[#allocation2 + $0x640] sm:$0xff]
      %v1705 = vld [vmem:[#allocation2 + $0x648] sm:$0xff]
      %v1706 = vld [vmem:[#allocation2 + $0x650] sm:$0xff]
      %v1707 = vld [vmem:[#allocation2 + $0x658] sm:$0xff]
      %v1708 = vld [vmem:[#allocation2 + $0x660] sm:$0xff]
      %v1709 = vld [vmem:[#allocation2 + $0x668] sm:$0xff]
      %v1710 = vld [vmem:[#allocation2 + $0x670] sm:$0xff]
      %v1711 = vld [vmem:[#allocation2 + $0x678] sm:$0xff]
      %v1712 = vld [vmem:[#allocation2 + $0x680] sm:$0xff]
      %v1713 = vld [vmem:[#allocation2 + $0x688] sm:$0xff]
      %v1714 = vld [vmem:[#allocation2 + $0x690] sm:$0xff]
      %v1715 = vld [vmem:[#allocation2 + $0x698] sm:$0xff]
      %v1716 = vld [vmem:[#allocation2 + $0x6a0] sm:$0xff]
      %v1717 = vld [vmem:[#allocation2 + $0x6a8] sm:$0xff]
      %v1718 = vld [vmem:[#allocation2 + $0x6b0] sm:$0xff]
      %v1719 = vld [vmem:[#allocation2 + $0x6b8] sm:$0xff]
      %vm1720 = vcmask 719872
      %v1722 = vsel %vm1720, %v1503, 0
      %1724 = vmatprep.subr.mxu0 %v1505
      %1725 = vmatpush1.msra.mxu0 %v1504
      %1726 = vmatprep.subr.mxu0 %v1513
      %1727 = vmatpush1.msra.mxu0 %v1512
      %1728 = vmatprep.subr.mxu0 %v1521
      %1729 = vmatpush1.msra.mxu0 %v1520
      %1730 = vmatprep.subr.mxu0 %v1529
      %1731 = vmatpush1.msra.mxu0 %v1528
      %1732 = vmatprep.subr.mxu0 %v1537
      %1733 = vmatpush1.msra.mxu0 %v1536
      %1734 = vmatprep.subr.mxu0 %v1545
      %1735 = vmatpush1.msra.mxu0 %v1544
      %1736 = vmatprep.subr.mxu0 %v1553
      %1737 = vmatpush1.msra.mxu0 %v1552
      %1738 = vmatprep.subr.mxu0 %v1561
      %1739 = vmatpush1.msra.mxu0 %v1560
      %1740 = vmatprep.subr.mxu0 %v1569
      %1741 = vmatpush1.msra.mxu0 %v1568
      %1742 = vmatprep.subr.mxu0 %v1577
      %1743 = vmatpush1.msra.mxu0 %v1576
      %1744 = vmatprep.subr.mxu0 %v1585
      %1745 = vmatpush1.msra.mxu0 %v1584
      %1746 = vmatprep.subr.mxu0 %v1593
      %1747 = vmatpush1.msra.mxu0 %v1592
      %1748 = vmatprep.subr.mxu0 %v1601
      %1749 = vmatpush1.msra.mxu0 %v1600
      %1750 = vmatprep.subr.mxu0 %v1609
      %1751 = vmatpush1.msra.mxu0 %v1608
      %1752 = vmatprep.subr.mxu0 %v1617
      %1753 = vmatpush1.msra.mxu0 %v1616
      %1754 = vmatprep.subr.mxu0 %v1625
      %1755 = vmatpush1.msra.mxu0 %v1624
      %1756 = vmatprep.subr.mxu0 %v1633
      %1757 = vmatpush1.msra.mxu0 %v1632
      %1758 = vmatprep.subr.mxu0 %v1641
      %1759 = vmatpush1.msra.mxu0 %v1640
      %1760 = vmatprep.subr.mxu0 %v1649
      %1761 = vmatpush1.msra.mxu0 %v1648
      %1762 = vmatprep.subr.mxu0 %v1657
      %1763 = vmatpush1.msra.mxu0 %v1656
      %1764 = vmatprep.subr.mxu0 %v1665
      %1765 = vmatpush1.msra.mxu0 %v1664
      %1766 = vmatprep.subr.mxu0 %v1673
      %1767 = vmatpush1.msra.mxu0 %v1672
      %1768 = vmatprep.subr.mxu0 %v1681
      %1769 = vmatpush1.msra.mxu0 %v1680
      %1770 = vmatprep.subr.mxu0 %v1689
      %1771 = vmatpush1.msra.mxu0 %v1688
      %1772 = vmatprep.subr.mxu0 %v1697
      %1773 = vmatpush1.msra.mxu0 %v1696
      %1774 = vmatprep.subr.mxu0 %v1705
      %1775 = vmatpush1.msra.mxu0 %v1704
      %1776 = vmatprep.subr.mxu0 %v1713
      %1777 = vmatpush1.msra.mxu0 %v1712
      %1778 = vmatprep.subr.mxu0 0.0
      %1779 = vmatpush1.msra.mxu0 0.0
      %1780 = vmatprep.subr.mxu0 0.0
      %1781 = vmatpush1.msra.mxu0 0.0
      %1782 = vmatprep.subr.mxu0 0.0
      %1783 = vmatpush1.msra.mxu0 0.0
      %1784 = vmatprep.subr.mxu0 0.0
      %1785 = vmatpush1.msra.mxu0 0.0
      %1786 = vmatprep.subr.mxu0 0.0
      %1787 = vmatpush1.msra.mxu0 0.0
      %1788 = vmatprep.mubr.f32.mxu0 %v1722
      %1789 = vmatmul.mubr.f32.gmra.mrb[0].mxu0 %v1502
      %v1790 = vpop.f32.mrb[0].mxu0
      %v1791 = vadd.f32 0.0, %v1790
      %v1792 = vpop.f32.mrb[0].mxu0
      %v1793 = vadd.f32 0.0, %v1792
      %1794 = vdwg.mxu0
      %1795 = vmatprep.subr.mxu0 %v1507
      %1796 = vmatpush1.msra.mxu0 %v1506
      %1797 = vmatprep.subr.mxu0 %v1515
      %1798 = vmatpush1.msra.mxu0 %v1514
      %1799 = vmatprep.subr.mxu0 %v1523
      %1800 = vmatpush1.msra.mxu0 %v1522
      %1801 = vmatprep.subr.mxu0 %v1531
      %1802 = vmatpush1.msra.mxu0 %v1530
      %1803 = vmatprep.subr.mxu0 %v1539
      %1804 = vmatpush1.msra.mxu0 %v1538
      %1805 = vmatprep.subr.mxu0 %v1547
      %1806 = vmatpush1.msra.mxu0 %v1546
      %1807 = vmatprep.subr.mxu0 %v1555
      %1808 = vmatpush1.msra.mxu0 %v1554
      %1809 = vmatprep.subr.mxu0 %v1563
      %1810 = vmatpush1.msra.mxu0 %v1562
      %1811 = vmatprep.subr.mxu0 %v1571
      %1812 = vmatpush1.msra.mxu0 %v1570
      %1813 = vmatprep.subr.mxu0 %v1579
      %1814 = vmatpush1.msra.mxu0 %v1578
      %1815 = vmatprep.subr.mxu0 %v1587
      %1816 = vmatpush1.msra.mxu0 %v1586
      %1817 = vmatprep.subr.mxu0 %v1595
      %1818 = vmatpush1.msra.mxu0 %v1594
      %1819 = vmatprep.subr.mxu0 %v1603
      %1820 = vmatpush1.msra.mxu0 %v1602
      %1821 = vmatprep.subr.mxu0 %v1611
      %1822 = vmatpush1.msra.mxu0 %v1610
      %1823 = vmatprep.subr.mxu0 %v1619
      %1824 = vmatpush1.msra.mxu0 %v1618
      %1825 = vmatprep.subr.mxu0 %v1627
      %1826 = vmatpush1.msra.mxu0 %v1626
      %1827 = vmatprep.subr.mxu0 %v1635
      %1828 = vmatpush1.msra.mxu0 %v1634
      %1829 = vmatprep.subr.mxu0 %v1643
      %1830 = vmatpush1.msra.mxu0 %v1642
      %1831 = vmatprep.subr.mxu0 %v1651
      %1832 = vmatpush1.msra.mxu0 %v1650
      %1833 = vmatprep.subr.mxu0 %v1659
      %1834 = vmatpush1.msra.mxu0 %v1658
      %1835 = vmatprep.subr.mxu0 %v1667
      %1836 = vmatpush1.msra.mxu0 %v1666
      %1837 = vmatprep.subr.mxu0 %v1675
      %1838 = vmatpush1.msra.mxu0 %v1674
      %1839 = vmatprep.subr.mxu0 %v1683
      %1840 = vmatpush1.msra.mxu0 %v1682
      %1841 = vmatprep.subr.mxu0 %v1691
      %1842 = vmatpush1.msra.mxu0 %v1690
      %1843 = vmatprep.subr.mxu0 %v1699
      %1844 = vmatpush1.msra.mxu0 %v1698
      %1845 = vmatprep.subr.mxu0 %v1707
      %1846 = vmatpush1.msra.mxu0 %v1706
      %1847 = vmatprep.subr.mxu0 %v1715
      %1848 = vmatpush1.msra.mxu0 %v1714
      %1849 = vmatprep.subr.mxu0 0.0
      %1850 = vmatpush1.msra.mxu0 0.0
      %1851 = vmatprep.subr.mxu0 0.0
      %1852 = vmatpush1.msra.mxu0 0.0
      %1853 = vmatprep.subr.mxu0 0.0
      %1854 = vmatpush1.msra.mxu0 0.0
      %1855 = vmatprep.subr.mxu0 0.0
      %1856 = vmatpush1.msra.mxu0 0.0
      %1857 = vmatprep.subr.mxu0 0.0
      %1858 = vmatpush1.msra.mxu0 0.0
      %1859 = vmatprep.mubr.f32.mxu0 %v1722
      %1860 = vmatmul.mubr.f32.gmra.mrb[0].mxu0 %v1502
      %v1861 = vpop.f32.mrb[0].mxu0
      %v1862 = vadd.f32 0.0, %v1861
      %v1863 = vpop.f32.mrb[0].mxu0
      %v1864 = vadd.f32 0.0, %v1863
      %1865 = vdwg.mxu0
      %1866 = vmatprep.subr.mxu0 %v1509
      %1867 = vmatpush1.msra.mxu0 %v1508
      %1868 = vmatprep.subr.mxu0 %v1517
      %1869 = vmatpush1.msra.mxu0 %v1516
      %1870 = vmatprep.subr.mxu0 %v1525
      %1871 = vmatpush1.msra.mxu0 %v1524
      %1872 = vmatprep.subr.mxu0 %v1533
      %1873 = vmatpush1.msra.mxu0 %v1532
      %1874 = vmatprep.subr.mxu0 %v1541
      %1875 = vmatpush1.msra.mxu0 %v1540
      %1876 = vmatprep.subr.mxu0 %v1549
      %1877 = vmatpush1.msra.mxu0 %v1548
      %1878 = vmatprep.subr.mxu0 %v1557
      %1879 = vmatpush1.msra.mxu0 %v1556
      %1880 = vmatprep.subr.mxu0 %v1565
      %1881 = vmatpush1.msra.mxu0 %v1564
      %1882 = vmatprep.subr.mxu0 %v1573
      %1883 = vmatpush1.msra.mxu0 %v1572
      %1884 = vmatprep.subr.mxu0 %v1581
      %1885 = vmatpush1.msra.mxu0 %v1580
      %1886 = vmatprep.subr.mxu0 %v1589
      %1887 = vmatpush1.msra.mxu0 %v1588
      %1888 = vmatprep.subr.mxu0 %v1597
      %1889 = vmatpush1.msra.mxu0 %v1596
      %1890 = vmatprep.subr.mxu0 %v1605
      %1891 = vmatpush1.msra.mxu0 %v1604
      %1892 = vmatprep.subr.mxu0 %v1613
      %1893 = vmatpush1.msra.mxu0 %v1612
      %1894 = vmatprep.subr.mxu0 %v1621
      %1895 = vmatpush1.msra.mxu0 %v1620
      %1896 = vmatprep.subr.mxu0 %v1629
      %1897 = vmatpush1.msra.mxu0 %v1628
      %1898 = vmatprep.subr.mxu0 %v1637
      %1899 = vmatpush1.msra.mxu0 %v1636
      %1900 = vmatprep.subr.mxu0 %v1645
      %1901 = vmatpush1.msra.mxu0 %v1644
      %1902 = vmatprep.subr.mxu0 %v1653
      %1903 = vmatpush1.msra.mxu0 %v1652
      %1904 = vmatprep.subr.mxu0 %v1661
      %1905 = vmatpush1.msra.mxu0 %v1660
      %1906 = vmatprep.subr.mxu0 %v1669
      %1907 = vmatpush1.msra.mxu0 %v1668
      %1908 = vmatprep.subr.mxu0 %v1677
      %1909 = vmatpush1.msra.mxu0 %v1676
      %1910 = vmatprep.subr.mxu0 %v1685
      %1911 = vmatpush1.msra.mxu0 %v1684
      %1912 = vmatprep.subr.mxu0 %v1693
      %1913 = vmatpush1.msra.mxu0 %v1692
      %1914 = vmatprep.subr.mxu0 %v1701
      %1915 = vmatpush1.msra.mxu0 %v1700
      %1916 = vmatprep.subr.mxu0 %v1709
      %1917 = vmatpush1.msra.mxu0 %v1708
      %1918 = vmatprep.subr.mxu0 %v1717
      %1919 = vmatpush1.msra.mxu0 %v1716
      %1920 = vmatprep.subr.mxu0 0.0
      %1921 = vmatpush1.msra.mxu0 0.0
      %1922 = vmatprep.subr.mxu0 0.0
      %1923 = vmatpush1.msra.mxu0 0.0
      %1924 = vmatprep.subr.mxu0 0.0
      %1925 = vmatpush1.msra.mxu0 0.0
      %1926 = vmatprep.subr.mxu0 0.0
      %1927 = vmatpush1.msra.mxu0 0.0
      %1928 = vmatprep.subr.mxu0 0.0
      %1929 = vmatpush1.msra.mxu0 0.0
      %1930 = vmatprep.mubr.f32.mxu0 %v1722
      %1931 = vmatmul.mubr.f32.gmra.mrb[0].mxu0 %v1502
      %v1932 = vpop.f32.mrb[0].mxu0
      %v1933 = vadd.f32 0.0, %v1932
      %v1934 = vpop.f32.mrb[0].mxu0
      %v1935 = vadd.f32 0.0, %v1934
      %1936 = vdwg.mxu0
      %1937 = vmatprep.subr.mxu0 %v1511
      %1938 = vmatpush1.msra.mxu0 %v1510
      %1939 = vmatprep.subr.mxu0 %v1519
      %1940 = vmatpush1.msra.mxu0 %v1518
      %1941 = vmatprep.subr.mxu0 %v1527
      %1942 = vmatpush1.msra.mxu0 %v1526
      %1943 = vmatprep.subr.mxu0 %v1535
      %1944 = vmatpush1.msra.mxu0 %v1534
      %1945 = vmatprep.subr.mxu0 %v1543
      %1946 = vmatpush1.msra.mxu0 %v1542
      %1947 = vmatprep.subr.mxu0 %v1551
      %1948 = vmatpush1.msra.mxu0 %v1550
      %1949 = vmatprep.subr.mxu0 %v1559
      %1950 = vmatpush1.msra.mxu0 %v1558
      %1951 = vmatprep.subr.mxu0 %v1567
      %1952 = vmatpush1.msra.mxu0 %v1566
      %1953 = vmatprep.subr.mxu0 %v1575
      %1954 = vmatpush1.msra.mxu0 %v1574
      %1955 = vmatprep.subr.mxu0 %v1583
      %1956 = vmatpush1.msra.mxu0 %v1582
      %1957 = vmatprep.subr.mxu0 %v1591
      %1958 = vmatpush1.msra.mxu0 %v1590
      %1959 = vmatprep.subr.mxu0 %v1599
      %1960 = vmatpush1.msra.mxu0 %v1598
      %1961 = vmatprep.subr.mxu0 %v1607
      %1962 = vmatpush1.msra.mxu0 %v1606
      %1963 = vmatprep.subr.mxu0 %v1615
      %1964 = vmatpush1.msra.mxu0 %v1614
      %1965 = vmatprep.subr.mxu0 %v1623
      %1966 = vmatpush1.msra.mxu0 %v1622
      %1967 = vmatprep.subr.mxu0 %v1631
      %1968 = vmatpush1.msra.mxu0 %v1630
      %1969 = vmatprep.subr.mxu0 %v1639
      %1970 = vmatpush1.msra.mxu0 %v1638
      %1971 = vmatprep.subr.mxu0 %v1647
      %1972 = vmatpush1.msra.mxu0 %v1646
      %1973 = vmatprep.subr.mxu0 %v1655
      %1974 = vmatpush1.msra.mxu0 %v1654
      %1975 = vmatprep.subr.mxu0 %v1663
      %1976 = vmatpush1.msra.mxu0 %v1662
      %1977 = vmatprep.subr.mxu0 %v1671
      %1978 = vmatpush1.msra.mxu0 %v1670
      %1979 = vmatprep.subr.mxu0 %v1679
      %1980 = vmatpush1.msra.mxu0 %v1678
      %1981 = vmatprep.subr.mxu0 %v1687
      %1982 = vmatpush1.msra.mxu0 %v1686
      %1983 = vmatprep.subr.mxu0 %v1695
      %1984 = vmatpush1.msra.mxu0 %v1694
      %1985 = vmatprep.subr.mxu0 %v1703
      %1986 = vmatpush1.msra.mxu0 %v1702
      %1987 = vmatprep.subr.mxu0 %v1711
      %1988 = vmatpush1.msra.mxu0 %v1710
      %1989 = vmatprep.subr.mxu0 %v1719
      %1990 = vmatpush1.msra.mxu0 %v1718
      %1991 = vmatprep.subr.mxu0 0.0
      %1992 = vmatpush1.msra.mxu0 0.0
      %1993 = vmatprep.subr.mxu0 0.0
      %1994 = vmatpush1.msra.mxu0 0.0
      %1995 = vmatprep.subr.mxu0 0.0
      %1996 = vmatpush1.msra.mxu0 0.0
      %1997 = vmatprep.subr.mxu0 0.0
      %1998 = vmatpush1.msra.mxu0 0.0
      %1999 = vmatprep.subr.mxu0 0.0
      %2000 = vmatpush1.msra.mxu0 0.0
      %2001 = vmatprep.mubr.f32.mxu0 %v1722
      %2002 = vmatmul.mubr.f32.gmra.mrb[0].mxu0 %v1502
      %v2003 = vpop.f32.mrb[0].mxu0
      %v2004 = vadd.f32 0.0, %v2003
      %v2005 = vpop.f32.mrb[0].mxu0
      %v2006 = vadd.f32 0.0, %v2005
      %2007 = vdwg.mxu0
      %v2008 = vpack.c.bf16 %v1791, %v1791
      %v2009 = vpack.c.bf16 %v1793, %v1793
      %v2010 = vpack.c.bf16 %v1862, %v1862
      %v2011 = vpack.c.bf16 %v1864, %v1864
      %v2012 = vpack.c.bf16 %v1933, %v1933
      %v2013 = vpack.c.bf16 %v1935, %v1935
      %v2014 = vpack.c.bf16 %v2004, %v2004
      %v2015 = vpack.c.bf16 %v2006, %v2006
      %v2024 = vunpack.c.l.b16 %v2008
      %v2025 = vunpack.c.l.b16 %v2009
      %v2026 = vunpack.c.l.b16 %v2010
      %v2027 = vunpack.c.l.b16 %v2011
      %v2028 = vunpack.c.l.b16 %v2012
      %v2029 = vunpack.c.l.b16 %v2013
      %v2030 = vunpack.c.l.b16 %v2014
      %v2031 = vunpack.c.l.b16 %v2015
      %v2032 = vpack.c.b16 %v2025, %v2024
      %v2033 = vpack.c.b16 %v2027, %v2026
      %v2034 = vpack.c.b16 %v2029, %v2028
      %v2035 = vpack.c.b16 %v2031, %v2030
      %2040 = vst [vmem:[%s309] sm:$0xff] %v2032
      %2041 = vst [vmem:[%s309 + $0x8] sm:$0xff] %v2033
      %2042 = vst [vmem:[%s309 + $0x10] sm:$0xff] %v2034
      %2043 = vst [vmem:[%s309 + $0x18] sm:$0xff] %v2035
      %v2044 = vld [vmem:[%s303] sm:$0xff]
      %v2045 = vunpack.c.l.bf16 %v2044
      %v2046 = vunpack.c.h.bf16 %v2044
      %v2049 = vlaneseq
      %v2050 = vshrl.u32 %v2049, 7
      %v2051 = vsub.s32 0, %v2050
      %v2052 = vrot.slane %v2045, %v2051
      %v2053 = vlaneseq
      %v2054 = vshrl.u32 %v2053, 7
      %v2055 = vsub.s32 2, %v2054
      %v2056 = vrot.slane %v2045, %v2055
      %v2057 = vlaneseq
      %v2058 = vshrl.u32 %v2057, 7
      %v2059 = vsub.s32 4, %v2058
      %v2060 = vrot.slane %v2045, %v2059
      %v2061 = vlaneseq
      %v2062 = vshrl.u32 %v2061, 7
      %v2063 = vsub.s32 6, %v2062
      %v2064 = vrot.slane %v2045, %v2063
      %v2065 = vlaneseq
      %v2066 = vshrl.u32 %v2065, 7
      %v2067 = vsub.s32 0, %v2066
      %v2068 = vrot.slane %v2046, %v2067
      %v2069 = vlaneseq
      %v2070 = vshrl.u32 %v2069, 7
      %v2071 = vsub.s32 2, %v2070
      %v2072 = vrot.slane %v2046, %v2071
      %v2073 = vlaneseq
      %v2074 = vshrl.u32 %v2073, 7
      %v2075 = vsub.s32 4, %v2074
      %v2076 = vrot.slane %v2046, %v2075
      %v2077 = vlaneseq
      %v2078 = vshrl.u32 %v2077, 7
      %v2079 = vsub.s32 6, %v2078
      %v2080 = vrot.slane %v2046, %v2079
      %v2089 = vlaneseq
      %v2090 = vshrl.u32 %v2089, 7
      %v2091 = vsub.s32 0, %v2090
      %v2092 = vrot.slane %v2052, %v2091
      %v2093 = vlaneseq
      %v2094 = vshrl.u32 %v2093, 7
      %v2095 = vsub.s32 0, %v2094
      %v2096 = vrot.slane %v2056, %v2095
      %v2097 = vlaneseq
      %v2098 = vshrl.u32 %v2097, 7
      %v2099 = vsub.s32 0, %v2098
      %v2100 = vrot.slane %v2060, %v2099
      %v2101 = vlaneseq
      %v2102 = vshrl.u32 %v2101, 7
      %v2103 = vsub.s32 0, %v2102
      %v2104 = vrot.slane %v2064, %v2103
      %v2105 = vlaneseq
      %v2106 = vshrl.u32 %v2105, 7
      %v2107 = vsub.s32 0, %v2106
      %v2108 = vrot.slane %v2068, %v2107
      %v2109 = vlaneseq
      %v2110 = vshrl.u32 %v2109, 7
      %v2111 = vsub.s32 0, %v2110
      %v2112 = vrot.slane %v2072, %v2111
      %v2113 = vlaneseq
      %v2114 = vshrl.u32 %v2113, 7
      %v2115 = vsub.s32 0, %v2114
      %v2116 = vrot.slane %v2076, %v2115
      %v2117 = vlaneseq
      %v2118 = vshrl.u32 %v2117, 7
      %v2119 = vsub.s32 0, %v2118
      %v2120 = vrot.slane %v2080, %v2119
      %2121 = vmatprep.subr.mxu0 %v2096
      %2122 = vmatpush1.xpose.msra.mxu0 %v2092
      %2123 = vmatprep.subr.mxu0 0.0
      %2124 = vmatpush1.xpose.msra.mxu0 0.0
      %2125 = vmatprep.subr.mxu0 0.0
      %2126 = vmatpush1.xpose.msra.mxu0 0.0
      %2127 = vmatprep.subr.mxu0 0.0
      %2128 = vmatpush1.xpose.msra.mxu0 0.0
      %2129 = vmatprep.subr.mxu0 0.0
      %2130 = vmatpush1.xpose.msra.mxu0 0.0
      %2131 = vmatprep.subr.mxu0 0.0
      %2132 = vmatpush1.xpose.msra.mxu0 0.0
      %2133 = vmatprep.subr.mxu0 0.0
      %2134 = vmatpush1.xpose.msra.mxu0 0.0
      %2135 = vmatprep.subr.mxu0 0.0
      %2136 = vmatpush1.xpose.msra.mxu0 0.0
      %2137 = vmatprep.subr.mxu0 0.0
      %2138 = vmatpush1.xpose.msra.mxu0 0.0
      %2139 = vmatprep.subr.mxu0 0.0
      %2140 = vmatpush1.xpose.msra.mxu0 0.0
      %2141 = vmatprep.subr.mxu0 0.0
      %2142 = vmatpush1.xpose.msra.mxu0 0.0
      %2143 = vmatprep.subr.mxu0 0.0
      %2144 = vmatpush1.xpose.msra.mxu0 0.0
      %2145 = vmatprep.subr.mxu0 0.0
      %2146 = vmatpush1.xpose.msra.mxu0 0.0
      %2147 = vmatprep.subr.mxu0 0.0
      %2148 = vmatpush1.xpose.msra.mxu0 0.0
      %2149 = vmatprep.subr.mxu0 0.0
      %2150 = vmatpush1.xpose.msra.mxu0 0.0
      %2151 = vmatprep.subr.mxu0 0.0
      %2152 = vmatpush1.xpose.msra.mxu0 0.0
      %2153 = vmatprep.subr.mxu0 0.0
      %2154 = vmatpush1.xpose.msra.mxu0 0.0
      %2155 = vmatprep.subr.mxu0 0.0
      %2156 = vmatpush1.xpose.msra.mxu0 0.0
      %2157 = vmatprep.subr.mxu0 0.0
      %2158 = vmatpush1.xpose.msra.mxu0 0.0
      %2159 = vmatprep.subr.mxu0 0.0
      %2160 = vmatpush1.xpose.msra.mxu0 0.0
      %2161 = vmatprep.subr.mxu0 0.0
      %2162 = vmatpush1.xpose.msra.mxu0 0.0
      %2163 = vmatprep.subr.mxu0 0.0
      %2164 = vmatpush1.xpose.msra.mxu0 0.0
      %2165 = vmatprep.subr.mxu0 0.0
      %2166 = vmatpush1.xpose.msra.mxu0 0.0
      %2167 = vmatprep.subr.mxu0 0.0
      %2168 = vmatpush1.xpose.msra.mxu0 0.0
      %2169 = vmatprep.subr.mxu0 0.0
      %2170 = vmatpush1.xpose.msra.mxu0 0.0
      %2171 = vmatprep.subr.mxu0 0.0
      %2172 = vmatpush1.xpose.msra.mxu0 0.0
      %2173 = vmatprep.subr.mxu0 0.0
      %2174 = vmatpush1.xpose.msra.mxu0 0.0
      %2175 = vmatprep.subr.mxu0 0.0
      %2176 = vmatpush1.xpose.msra.mxu0 0.0
      %2177 = vmatprep.subr.mxu0 0.0
      %2178 = vmatpush1.xpose.msra.mxu0 0.0
      %2179 = vmatprep.subr.mxu0 0.0
      %2180 = vmatpush1.xpose.msra.mxu0 0.0
      %2181 = vmatprep.subr.mxu0 0.0
      %2182 = vmatpush1.xpose.msra.mxu0 0.0
      %2183 = vmatprep.subr.mxu0 0.0
      %2184 = vmatpush1.xpose.msra.mxu0 0.0
      %2185 = vmatprep.mubr.f32.mxu0 %v1793
      %2186 = vmatmul.mubr.f32.gmra.mrb[0].mxu0 %v1791
      %v2187 = vpop.f32.mrb[0].mxu0
      %v2188 = vadd.f32 0.0, %v2187
      %v2189 = vpop.f32.mrb[0].mxu0
      %2190 = vdwg.mxu0
      %2191 = vmatprep.subr.mxu0 %v2104
      %2192 = vmatpush1.xpose.msra.mxu0 %v2100
      %2193 = vmatprep.subr.mxu0 0.0
      %2194 = vmatpush1.xpose.msra.mxu0 0.0
      %2195 = vmatprep.subr.mxu0 0.0
      %2196 = vmatpush1.xpose.msra.mxu0 0.0
      %2197 = vmatprep.subr.mxu0 0.0
      %2198 = vmatpush1.xpose.msra.mxu0 0.0
      %2199 = vmatprep.subr.mxu0 0.0
      %2200 = vmatpush1.xpose.msra.mxu0 0.0
      %2201 = vmatprep.subr.mxu0 0.0
      %2202 = vmatpush1.xpose.msra.mxu0 0.0
      %2203 = vmatprep.subr.mxu0 0.0
      %2204 = vmatpush1.xpose.msra.mxu0 0.0
      %2205 = vmatprep.subr.mxu0 0.0
      %2206 = vmatpush1.xpose.msra.mxu0 0.0
      %2207 = vmatprep.subr.mxu0 0.0
      %2208 = vmatpush1.xpose.msra.mxu0 0.0
      %2209 = vmatprep.subr.mxu0 0.0
      %2210 = vmatpush1.xpose.msra.mxu0 0.0
      %2211 = vmatprep.subr.mxu0 0.0
      %2212 = vmatpush1.xpose.msra.mxu0 0.0
      %2213 = vmatprep.subr.mxu0 0.0
      %2214 = vmatpush1.xpose.msra.mxu0 0.0
      %2215 = vmatprep.subr.mxu0 0.0
      %2216 = vmatpush1.xpose.msra.mxu0 0.0
      %2217 = vmatprep.subr.mxu0 0.0
      %2218 = vmatpush1.xpose.msra.mxu0 0.0
      %2219 = vmatprep.subr.mxu0 0.0
      %2220 = vmatpush1.xpose.msra.mxu0 0.0
      %2221 = vmatprep.subr.mxu0 0.0
      %2222 = vmatpush1.xpose.msra.mxu0 0.0
      %2223 = vmatprep.subr.mxu0 0.0
      %2224 = vmatpush1.xpose.msra.mxu0 0.0
      %2225 = vmatprep.subr.mxu0 0.0
      %2226 = vmatpush1.xpose.msra.mxu0 0.0
      %2227 = vmatprep.subr.mxu0 0.0
      %2228 = vmatpush1.xpose.msra.mxu0 0.0
      %2229 = vmatprep.subr.mxu0 0.0
      %2230 = vmatpush1.xpose.msra.mxu0 0.0
      %2231 = vmatprep.subr.mxu0 0.0
      %2232 = vmatpush1.xpose.msra.mxu0 0.0
      %2233 = vmatprep.subr.mxu0 0.0
      %2234 = vmatpush1.xpose.msra.mxu0 0.0
      %2235 = vmatprep.subr.mxu0 0.0
      %2236 = vmatpush1.xpose.msra.mxu0 0.0
      %2237 = vmatprep.subr.mxu0 0.0
      %2238 = vmatpush1.xpose.msra.mxu0 0.0
      %2239 = vmatprep.subr.mxu0 0.0
      %2240 = vmatpush1.xpose.msra.mxu0 0.0
      %2241 = vmatprep.subr.mxu0 0.0
      %2242 = vmatpush1.xpose.msra.mxu0 0.0
      %2243 = vmatprep.subr.mxu0 0.0
      %2244 = vmatpush1.xpose.msra.mxu0 0.0
      %2245 = vmatprep.subr.mxu0 0.0
      %2246 = vmatpush1.xpose.msra.mxu0 0.0
      %2247 = vmatprep.subr.mxu0 0.0
      %2248 = vmatpush1.xpose.msra.mxu0 0.0
      %2249 = vmatprep.subr.mxu0 0.0
      %2250 = vmatpush1.xpose.msra.mxu0 0.0
      %2251 = vmatprep.subr.mxu0 0.0
      %2252 = vmatpush1.xpose.msra.mxu0 0.0
      %2253 = vmatprep.subr.mxu0 0.0
      %2254 = vmatpush1.xpose.msra.mxu0 0.0
      %2255 = vmatprep.mubr.f32.mxu0 %v1864
      %2256 = vmatmul.mubr.f32.gmra.mrb[0].mxu0 %v1862
      %v2257 = vpop.f32.mrb[0].mxu0
      %v2258 = vadd.f32 %v2188, %v2257
      %v2259 = vpop.f32.mrb[0].mxu0
      %2260 = vdwg.mxu0
      %2261 = vmatprep.subr.mxu0 %v2112
      %2262 = vmatpush1.xpose.msra.mxu0 %v2108
      %2263 = vmatprep.subr.mxu0 0.0
      %2264 = vmatpush1.xpose.msra.mxu0 0.0
      %2265 = vmatprep.subr.mxu0 0.0
      %2266 = vmatpush1.xpose.msra.mxu0 0.0
      %2267 = vmatprep.subr.mxu0 0.0
      %2268 = vmatpush1.xpose.msra.mxu0 0.0
      %2269 = vmatprep.subr.mxu0 0.0
      %2270 = vmatpush1.xpose.msra.mxu0 0.0
      %2271 = vmatprep.subr.mxu0 0.0
      %2272 = vmatpush1.xpose.msra.mxu0 0.0
      %2273 = vmatprep.subr.mxu0 0.0
      %2274 = vmatpush1.xpose.msra.mxu0 0.0
      %2275 = vmatprep.subr.mxu0 0.0
      %2276 = vmatpush1.xpose.msra.mxu0 0.0
      %2277 = vmatprep.subr.mxu0 0.0
      %2278 = vmatpush1.xpose.msra.mxu0 0.0
      %2279 = vmatprep.subr.mxu0 0.0
      %2280 = vmatpush1.xpose.msra.mxu0 0.0
      %2281 = vmatprep.subr.mxu0 0.0
      %2282 = vmatpush1.xpose.msra.mxu0 0.0
      %2283 = vmatprep.subr.mxu0 0.0
      %2284 = vmatpush1.xpose.msra.mxu0 0.0
      %2285 = vmatprep.subr.mxu0 0.0
      %2286 = vmatpush1.xpose.msra.mxu0 0.0
      %2287 = vmatprep.subr.mxu0 0.0
      %2288 = vmatpush1.xpose.msra.mxu0 0.0
      %2289 = vmatprep.subr.mxu0 0.0
      %2290 = vmatpush1.xpose.msra.mxu0 0.0
      %2291 = vmatprep.subr.mxu0 0.0
      %2292 = vmatpush1.xpose.msra.mxu0 0.0
      %2293 = vmatprep.subr.mxu0 0.0
      %2294 = vmatpush1.xpose.msra.mxu0 0.0
      %2295 = vmatprep.subr.mxu0 0.0
      %2296 = vmatpush1.xpose.msra.mxu0 0.0
      %2297 = vmatprep.subr.mxu0 0.0
      %2298 = vmatpush1.xpose.msra.mxu0 0.0
      %2299 = vmatprep.subr.mxu0 0.0
      %2300 = vmatpush1.xpose.msra.mxu0 0.0
      %2301 = vmatprep.subr.mxu0 0.0
      %2302 = vmatpush1.xpose.msra.mxu0 0.0
      %2303 = vmatprep.subr.mxu0 0.0
      %2304 = vmatpush1.xpose.msra.mxu0 0.0
      %2305 = vmatprep.subr.mxu0 0.0
      %2306 = vmatpush1.xpose.msra.mxu0 0.0
      %2307 = vmatprep.subr.mxu0 0.0
      %2308 = vmatpush1.xpose.msra.mxu0 0.0
      %2309 = vmatprep.subr.mxu0 0.0
      %2310 = vmatpush1.xpose.msra.mxu0 0.0
      %2311 = vmatprep.subr.mxu0 0.0
      %2312 = vmatpush1.xpose.msra.mxu0 0.0
      %2313 = vmatprep.subr.mxu0 0.0
      %2314 = vmatpush1.xpose.msra.mxu0 0.0
      %2315 = vmatprep.subr.mxu0 0.0
      %2316 = vmatpush1.xpose.msra.mxu0 0.0
      %2317 = vmatprep.subr.mxu0 0.0
      %2318 = vmatpush1.xpose.msra.mxu0 0.0
      %2319 = vmatprep.subr.mxu0 0.0
      %2320 = vmatpush1.xpose.msra.mxu0 0.0
      %2321 = vmatprep.subr.mxu0 0.0
      %2322 = vmatpush1.xpose.msra.mxu0 0.0
      %2323 = vmatprep.subr.mxu0 0.0
      %2324 = vmatpush1.xpose.msra.mxu0 0.0
      %2325 = vmatprep.mubr.f32.mxu0 %v1935
      %2326 = vmatmul.mubr.f32.gmra.mrb[0].mxu0 %v1933
      %v2327 = vpop.f32.mrb[0].mxu0
      %v2328 = vadd.f32 %v2258, %v2327
      %v2329 = vpop.f32.mrb[0].mxu0
      %2330 = vdwg.mxu0
      %2331 = vmatprep.subr.mxu0 %v2120
      %2332 = vmatpush1.xpose.msra.mxu0 %v2116
      %2333 = vmatprep.subr.mxu0 0.0
      %2334 = vmatpush1.xpose.msra.mxu0 0.0
      %2335 = vmatprep.subr.mxu0 0.0
      %2336 = vmatpush1.xpose.msra.mxu0 0.0
      %2337 = vmatprep.subr.mxu0 0.0
      %2338 = vmatpush1.xpose.msra.mxu0 0.0
      %2339 = vmatprep.subr.mxu0 0.0
      %2340 = vmatpush1.xpose.msra.mxu0 0.0
      %2341 = vmatprep.subr.mxu0 0.0
      %2342 = vmatpush1.xpose.msra.mxu0 0.0
      %2343 = vmatprep.subr.mxu0 0.0
      %2344 = vmatpush1.xpose.msra.mxu0 0.0
      %2345 = vmatprep.subr.mxu0 0.0
      %2346 = vmatpush1.xpose.msra.mxu0 0.0
      %2347 = vmatprep.subr.mxu0 0.0
      %2348 = vmatpush1.xpose.msra.mxu0 0.0
      %2349 = vmatprep.subr.mxu0 0.0
      %2350 = vmatpush1.xpose.msra.mxu0 0.0
      %2351 = vmatprep.subr.mxu0 0.0
      %2352 = vmatpush1.xpose.msra.mxu0 0.0
      %2353 = vmatprep.subr.mxu0 0.0
      %2354 = vmatpush1.xpose.msra.mxu0 0.0
      %2355 = vmatprep.subr.mxu0 0.0
      %2356 = vmatpush1.xpose.msra.mxu0 0.0
      %2357 = vmatprep.subr.mxu0 0.0
      %2358 = vmatpush1.xpose.msra.mxu0 0.0
      %2359 = vmatprep.subr.mxu0 0.0
      %2360 = vmatpush1.xpose.msra.mxu0 0.0
      %2361 = vmatprep.subr.mxu0 0.0
      %2362 = vmatpush1.xpose.msra.mxu0 0.0
      %2363 = vmatprep.subr.mxu0 0.0
      %2364 = vmatpush1.xpose.msra.mxu0 0.0
      %2365 = vmatprep.subr.mxu0 0.0
      %2366 = vmatpush1.xpose.msra.mxu0 0.0
      %2367 = vmatprep.subr.mxu0 0.0
      %2368 = vmatpush1.xpose.msra.mxu0 0.0
      %2369 = vmatprep.subr.mxu0 0.0
      %2370 = vmatpush1.xpose.msra.mxu0 0.0
      %2371 = vmatprep.subr.mxu0 0.0
      %2372 = vmatpush1.xpose.msra.mxu0 0.0
      %2373 = vmatprep.subr.mxu0 0.0
      %2374 = vmatpush1.xpose.msra.mxu0 0.0
      %2375 = vmatprep.subr.mxu0 0.0
      %2376 = vmatpush1.xpose.msra.mxu0 0.0
      %2377 = vmatprep.subr.mxu0 0.0
      %2378 = vmatpush1.xpose.msra.mxu0 0.0
      %2379 = vmatprep.subr.mxu0 0.0
      %2380 = vmatpush1.xpose.msra.mxu0 0.0
      %2381 = vmatprep.subr.mxu0 0.0
      %2382 = vmatpush1.xpose.msra.mxu0 0.0
      %2383 = vmatprep.subr.mxu0 0.0
      %2384 = vmatpush1.xpose.msra.mxu0 0.0
      %2385 = vmatprep.subr.mxu0 0.0
      %2386 = vmatpush1.xpose.msra.mxu0 0.0
      %2387 = vmatprep.subr.mxu0 0.0
      %2388 = vmatpush1.xpose.msra.mxu0 0.0
      %2389 = vmatprep.subr.mxu0 0.0
      %2390 = vmatpush1.xpose.msra.mxu0 0.0
      %2391 = vmatprep.subr.mxu0 0.0
      %2392 = vmatpush1.xpose.msra.mxu0 0.0
      %2393 = vmatprep.subr.mxu0 0.0
      %2394 = vmatpush1.xpose.msra.mxu0 0.0
      %2395 = vmatprep.mubr.f32.mxu0 %v2006
      %2396 = vmatmul.mubr.f32.gmra.mrb[0].mxu0 %v2004
      %v2397 = vpop.f32.mrb[0].mxu0
      %v2398 = vadd.f32 %v2328, %v2397
      %v2399 = vpop.f32.mrb[0].mxu0
      %2400 = vdwg.mxu0
      %v2401 = vmul.f32 %v1791, %v1791
      %v2402 = vmul.f32 %v1793, %v1793
      %v2403 = vmul.f32 %v1862, %v1862
      %v2404 = vmul.f32 %v1864, %v1864
      %v2405 = vmul.f32 %v1933, %v1933
      %v2406 = vmul.f32 %v1935, %v1935
      %v2407 = vmul.f32 %v2004, %v2004
      %v2408 = vmul.f32 %v2006, %v2006
      %2409 = vmatprep.subr.mxu0 %v2096
      %2410 = vmatpush1.xpose.msra.mxu0 %v2092
      %2411 = vmatprep.subr.mxu0 0.0
      %2412 = vmatpush1.xpose.msra.mxu0 0.0
      %2413 = vmatprep.subr.mxu0 0.0
      %2414 = vmatpush1.xpose.msra.mxu0 0.0
      %2415 = vmatprep.subr.mxu0 0.0
      %2416 = vmatpush1.xpose.msra.mxu0 0.0
      %2417 = vmatprep.subr.mxu0 0.0
      %2418 = vmatpush1.xpose.msra.mxu0 0.0
      %2419 = vmatprep.subr.mxu0 0.0
      %2420 = vmatpush1.xpose.msra.mxu0 0.0
      %2421 = vmatprep.subr.mxu0 0.0
      %2422 = vmatpush1.xpose.msra.mxu0 0.0
      %2423 = vmatprep.subr.mxu0 0.0
      %2424 = vmatpush1.xpose.msra.mxu0 0.0
      %2425 = vmatprep.subr.mxu0 0.0
      %2426 = vmatpush1.xpose.msra.mxu0 0.0
      %2427 = vmatprep.subr.mxu0 0.0
      %2428 = vmatpush1.xpose.msra.mxu0 0.0
      %2429 = vmatprep.subr.mxu0 0.0
      %2430 = vmatpush1.xpose.msra.mxu0 0.0
      %2431 = vmatprep.subr.mxu0 0.0
      %2432 = vmatpush1.xpose.msra.mxu0 0.0
      %2433 = vmatprep.subr.mxu0 0.0
      %2434 = vmatpush1.xpose.msra.mxu0 0.0
      %2435 = vmatprep.subr.mxu0 0.0
      %2436 = vmatpush1.xpose.msra.mxu0 0.0
      %2437 = vmatprep.subr.mxu0 0.0
      %2438 = vmatpush1.xpose.msra.mxu0 0.0
      %2439 = vmatprep.subr.mxu0 0.0
      %2440 = vmatpush1.xpose.msra.mxu0 0.0
      %2441 = vmatprep.subr.mxu0 0.0
      %2442 = vmatpush1.xpose.msra.mxu0 0.0
      %2443 = vmatprep.subr.mxu0 0.0
      %2444 = vmatpush1.xpose.msra.mxu0 0.0
      %2445 = vmatprep.subr.mxu0 0.0
      %2446 = vmatpush1.xpose.msra.mxu0 0.0
      %2447 = vmatprep.subr.mxu0 0.0
      %2448 = vmatpush1.xpose.msra.mxu0 0.0
      %2449 = vmatprep.subr.mxu0 0.0
      %2450 = vmatpush1.xpose.msra.mxu0 0.0
      %2451 = vmatprep.subr.mxu0 0.0
      %2452 = vmatpush1.xpose.msra.mxu0 0.0
      %2453 = vmatprep.subr.mxu0 0.0
      %2454 = vmatpush1.xpose.msra.mxu0 0.0
      %2455 = vmatprep.subr.mxu0 0.0
      %2456 = vmatpush1.xpose.msra.mxu0 0.0
      %2457 = vmatprep.subr.mxu0 0.0
      %2458 = vmatpush1.xpose.msra.mxu0 0.0
      %2459 = vmatprep.subr.mxu0 0.0
      %2460 = vmatpush1.xpose.msra.mxu0 0.0
      %2461 = vmatprep.subr.mxu0 0.0
      %2462 = vmatpush1.xpose.msra.mxu0 0.0
      %2463 = vmatprep.subr.mxu0 0.0
      %2464 = vmatpush1.xpose.msra.mxu0 0.0
      %2465 = vmatprep.subr.mxu0 0.0
      %2466 = vmatpush1.xpose.msra.mxu0 0.0
      %2467 = vmatprep.subr.mxu0 0.0
      %2468 = vmatpush1.xpose.msra.mxu0 0.0
      %2469 = vmatprep.subr.mxu0 0.0
      %2470 = vmatpush1.xpose.msra.mxu0 0.0
      %2471 = vmatprep.subr.mxu0 0.0
      %2472 = vmatpush1.xpose.msra.mxu0 0.0
      %2473 = vmatprep.mubr.f32.mxu0 %v2402
      %2474 = vmatmul.mubr.f32.gmra.mrb[0].mxu0 %v2401
      %v2475 = vpop.f32.mrb[0].mxu0
      %v2476 = vadd.f32 0.0, %v2475
      %v2477 = vpop.f32.mrb[0].mxu0
      %2478 = vdwg.mxu0
      %2479 = vmatprep.subr.mxu0 %v2104
      %2480 = vmatpush1.xpose.msra.mxu0 %v2100
      %2481 = vmatprep.subr.mxu0 0.0
      %2482 = vmatpush1.xpose.msra.mxu0 0.0
      %2483 = vmatprep.subr.mxu0 0.0
      %2484 = vmatpush1.xpose.msra.mxu0 0.0
      %2485 = vmatprep.subr.mxu0 0.0
      %2486 = vmatpush1.xpose.msra.mxu0 0.0
      %2487 = vmatprep.subr.mxu0 0.0
      %2488 = vmatpush1.xpose.msra.mxu0 0.0
      %2489 = vmatprep.subr.mxu0 0.0
      %2490 = vmatpush1.xpose.msra.mxu0 0.0
      %2491 = vmatprep.subr.mxu0 0.0
      %2492 = vmatpush1.xpose.msra.mxu0 0.0
      %2493 = vmatprep.subr.mxu0 0.0
      %2494 = vmatpush1.xpose.msra.mxu0 0.0
      %2495 = vmatprep.subr.mxu0 0.0
      %2496 = vmatpush1.xpose.msra.mxu0 0.0
      %2497 = vmatprep.subr.mxu0 0.0
      %2498 = vmatpush1.xpose.msra.mxu0 0.0
      %2499 = vmatprep.subr.mxu0 0.0
      %2500 = vmatpush1.xpose.msra.mxu0 0.0
      %2501 = vmatprep.subr.mxu0 0.0
      %2502 = vmatpush1.xpose.msra.mxu0 0.0
      %2503 = vmatprep.subr.mxu0 0.0
      %2504 = vmatpush1.xpose.msra.mxu0 0.0
      %2505 = vmatprep.subr.mxu0 0.0
      %2506 = vmatpush1.xpose.msra.mxu0 0.0
      %2507 = vmatprep.subr.mxu0 0.0
      %2508 = vmatpush1.xpose.msra.mxu0 0.0
      %2509 = vmatprep.subr.mxu0 0.0
      %2510 = vmatpush1.xpose.msra.mxu0 0.0
      %2511 = vmatprep.subr.mxu0 0.0
      %2512 = vmatpush1.xpose.msra.mxu0 0.0
      %2513 = vmatprep.subr.mxu0 0.0
      %2514 = vmatpush1.xpose.msra.mxu0 0.0
      %2515 = vmatprep.subr.mxu0 0.0
      %2516 = vmatpush1.xpose.msra.mxu0 0.0
      %2517 = vmatprep.subr.mxu0 0.0
      %2518 = vmatpush1.xpose.msra.mxu0 0.0
      %2519 = vmatprep.subr.mxu0 0.0
      %2520 = vmatpush1.xpose.msra.mxu0 0.0
      %2521 = vmatprep.subr.mxu0 0.0
      %2522 = vmatpush1.xpose.msra.mxu0 0.0
      %2523 = vmatprep.subr.mxu0 0.0
      %2524 = vmatpush1.xpose.msra.mxu0 0.0
      %2525 = vmatprep.subr.mxu0 0.0
      %2526 = vmatpush1.xpose.msra.mxu0 0.0
      %2527 = vmatprep.subr.mxu0 0.0
      %2528 = vmatpush1.xpose.msra.mxu0 0.0
      %2529 = vmatprep.subr.mxu0 0.0
      %2530 = vmatpush1.xpose.msra.mxu0 0.0
      %2531 = vmatprep.subr.mxu0 0.0
      %2532 = vmatpush1.xpose.msra.mxu0 0.0
      %2533 = vmatprep.subr.mxu0 0.0
      %2534 = vmatpush1.xpose.msra.mxu0 0.0
      %2535 = vmatprep.subr.mxu0 0.0
      %2536 = vmatpush1.xpose.msra.mxu0 0.0
      %2537 = vmatprep.subr.mxu0 0.0
      %2538 = vmatpush1.xpose.msra.mxu0 0.0
      %2539 = vmatprep.subr.mxu0 0.0
      %2540 = vmatpush1.xpose.msra.mxu0 0.0
      %2541 = vmatprep.subr.mxu0 0.0
      %2542 = vmatpush1.xpose.msra.mxu0 0.0
      %2543 = vmatprep.mubr.f32.mxu0 %v2404
      %2544 = vmatmul.mubr.f32.gmra.mrb[0].mxu0 %v2403
      %v2545 = vpop.f32.mrb[0].mxu0
      %v2546 = vadd.f32 %v2476, %v2545
      %v2547 = vpop.f32.mrb[0].mxu0
      %2548 = vdwg.mxu0
      %2549 = vmatprep.subr.mxu0 %v2112
      %2550 = vmatpush1.xpose.msra.mxu0 %v2108
      %2551 = vmatprep.subr.mxu0 0.0
      %2552 = vmatpush1.xpose.msra.mxu0 0.0
      %2553 = vmatprep.subr.mxu0 0.0
      %2554 = vmatpush1.xpose.msra.mxu0 0.0
      %2555 = vmatprep.subr.mxu0 0.0
      %2556 = vmatpush1.xpose.msra.mxu0 0.0
      %2557 = vmatprep.subr.mxu0 0.0
      %2558 = vmatpush1.xpose.msra.mxu0 0.0
      %2559 = vmatprep.subr.mxu0 0.0
      %2560 = vmatpush1.xpose.msra.mxu0 0.0
      %2561 = vmatprep.subr.mxu0 0.0
      %2562 = vmatpush1.xpose.msra.mxu0 0.0
      %2563 = vmatprep.subr.mxu0 0.0
      %2564 = vmatpush1.xpose.msra.mxu0 0.0
      %2565 = vmatprep.subr.mxu0 0.0
      %2566 = vmatpush1.xpose.msra.mxu0 0.0
      %2567 = vmatprep.subr.mxu0 0.0
      %2568 = vmatpush1.xpose.msra.mxu0 0.0
      %2569 = vmatprep.subr.mxu0 0.0
      %2570 = vmatpush1.xpose.msra.mxu0 0.0
      %2571 = vmatprep.subr.mxu0 0.0
      %2572 = vmatpush1.xpose.msra.mxu0 0.0
      %2573 = vmatprep.subr.mxu0 0.0
      %2574 = vmatpush1.xpose.msra.mxu0 0.0
      %2575 = vmatprep.subr.mxu0 0.0
      %2576 = vmatpush1.xpose.msra.mxu0 0.0
      %2577 = vmatprep.subr.mxu0 0.0
      %2578 = vmatpush1.xpose.msra.mxu0 0.0
      %2579 = vmatprep.subr.mxu0 0.0
      %2580 = vmatpush1.xpose.msra.mxu0 0.0
      %2581 = vmatprep.subr.mxu0 0.0
      %2582 = vmatpush1.xpose.msra.mxu0 0.0
      %2583 = vmatprep.subr.mxu0 0.0
      %2584 = vmatpush1.xpose.msra.mxu0 0.0
      %2585 = vmatprep.subr.mxu0 0.0
      %2586 = vmatpush1.xpose.msra.mxu0 0.0
      %2587 = vmatprep.subr.mxu0 0.0
      %2588 = vmatpush1.xpose.msra.mxu0 0.0
      %2589 = vmatprep.subr.mxu0 0.0
      %2590 = vmatpush1.xpose.msra.mxu0 0.0
      %2591 = vmatprep.subr.mxu0 0.0
      %2592 = vmatpush1.xpose.msra.mxu0 0.0
      %2593 = vmatprep.subr.mxu0 0.0
      %2594 = vmatpush1.xpose.msra.mxu0 0.0
      %2595 = vmatprep.subr.mxu0 0.0
      %2596 = vmatpush1.xpose.msra.mxu0 0.0
      %2597 = vmatprep.subr.mxu0 0.0
      %2598 = vmatpush1.xpose.msra.mxu0 0.0
      %2599 = vmatprep.subr.mxu0 0.0
      %2600 = vmatpush1.xpose.msra.mxu0 0.0
      %2601 = vmatprep.subr.mxu0 0.0
      %2602 = vmatpush1.xpose.msra.mxu0 0.0
      %2603 = vmatprep.subr.mxu0 0.0
      %2604 = vmatpush1.xpose.msra.mxu0 0.0
      %2605 = vmatprep.subr.mxu0 0.0
      %2606 = vmatpush1.xpose.msra.mxu0 0.0
      %2607 = vmatprep.subr.mxu0 0.0
      %2608 = vmatpush1.xpose.msra.mxu0 0.0
      %2609 = vmatprep.subr.mxu0 0.0
      %2610 = vmatpush1.xpose.msra.mxu0 0.0
      %2611 = vmatprep.subr.mxu0 0.0
      %2612 = vmatpush1.xpose.msra.mxu0 0.0
      %2613 = vmatprep.mubr.f32.mxu0 %v2406
      %2614 = vmatmul.mubr.f32.gmra.mrb[0].mxu0 %v2405
      %v2615 = vpop.f32.mrb[0].mxu0
      %v2616 = vadd.f32 %v2546, %v2615
      %v2617 = vpop.f32.mrb[0].mxu0
      %2618 = vdwg.mxu0
      %2619 = vmatprep.subr.mxu0 %v2120
      %2620 = vmatpush1.xpose.msra.mxu0 %v2116
      %2621 = vmatprep.subr.mxu0 0.0
      %2622 = vmatpush1.xpose.msra.mxu0 0.0
      %2623 = vmatprep.subr.mxu0 0.0
      %2624 = vmatpush1.xpose.msra.mxu0 0.0
      %2625 = vmatprep.subr.mxu0 0.0
      %2626 = vmatpush1.xpose.msra.mxu0 0.0
      %2627 = vmatprep.subr.mxu0 0.0
      %2628 = vmatpush1.xpose.msra.mxu0 0.0
      %2629 = vmatprep.subr.mxu0 0.0
      %2630 = vmatpush1.xpose.msra.mxu0 0.0
      %2631 = vmatprep.subr.mxu0 0.0
      %2632 = vmatpush1.xpose.msra.mxu0 0.0
      %2633 = vmatprep.subr.mxu0 0.0
      %2634 = vmatpush1.xpose.msra.mxu0 0.0
      %2635 = vmatprep.subr.mxu0 0.0
      %2636 = vmatpush1.xpose.msra.mxu0 0.0
      %2637 = vmatprep.subr.mxu0 0.0
      %2638 = vmatpush1.xpose.msra.mxu0 0.0
      %2639 = vmatprep.subr.mxu0 0.0
      %2640 = vmatpush1.xpose.msra.mxu0 0.0
      %2641 = vmatprep.subr.mxu0 0.0
      %2642 = vmatpush1.xpose.msra.mxu0 0.0
      %2643 = vmatprep.subr.mxu0 0.0
      %2644 = vmatpush1.xpose.msra.mxu0 0.0
      %2645 = vmatprep.subr.mxu0 0.0
      %2646 = vmatpush1.xpose.msra.mxu0 0.0
      %2647 = vmatprep.subr.mxu0 0.0
      %2648 = vmatpush1.xpose.msra.mxu0 0.0
      %2649 = vmatprep.subr.mxu0 0.0
      %2650 = vmatpush1.xpose.msra.mxu0 0.0
      %2651 = vmatprep.subr.mxu0 0.0
      %2652 = vmatpush1.xpose.msra.mxu0 0.0
      %2653 = vmatprep.subr.mxu0 0.0
      %2654 = vmatpush1.xpose.msra.mxu0 0.0
      %2655 = vmatprep.subr.mxu0 0.0
      %2656 = vmatpush1.xpose.msra.mxu0 0.0
      %2657 = vmatprep.subr.mxu0 0.0
      %2658 = vmatpush1.xpose.msra.mxu0 0.0
      %2659 = vmatprep.subr.mxu0 0.0
      %2660 = vmatpush1.xpose.msra.mxu0 0.0
      %2661 = vmatprep.subr.mxu0 0.0
      %2662 = vmatpush1.xpose.msra.mxu0 0.0
      %2663 = vmatprep.subr.mxu0 0.0
      %2664 = vmatpush1.xpose.msra.mxu0 0.0
      %2665 = vmatprep.subr.mxu0 0.0
      %2666 = vmatpush1.xpose.msra.mxu0 0.0
      %2667 = vmatprep.subr.mxu0 0.0
      %2668 = vmatpush1.xpose.msra.mxu0 0.0
      %2669 = vmatprep.subr.mxu0 0.0
      %2670 = vmatpush1.xpose.msra.mxu0 0.0
      %2671 = vmatprep.subr.mxu0 0.0
      %2672 = vmatpush1.xpose.msra.mxu0 0.0
      %2673 = vmatprep.subr.mxu0 0.0
      %2674 = vmatpush1.xpose.msra.mxu0 0.0
      %2675 = vmatprep.subr.mxu0 0.0
      %2676 = vmatpush1.xpose.msra.mxu0 0.0
      %2677 = vmatprep.subr.mxu0 0.0
      %2678 = vmatpush1.xpose.msra.mxu0 0.0
      %2679 = vmatprep.subr.mxu0 0.0
      %2680 = vmatpush1.xpose.msra.mxu0 0.0
      %2681 = vmatprep.subr.mxu0 0.0
      %2682 = vmatpush1.xpose.msra.mxu0 0.0
      %2683 = vmatprep.mubr.f32.mxu0 %v2408
      %2684 = vmatmul.mubr.f32.gmra.mrb[0].mxu0 %v2407
      %v2685 = vpop.f32.mrb[0].mxu0
      %v2686 = vadd.f32 %v2616, %v2685
      %v2687 = vpop.f32.mrb[0].mxu0
      %2688 = vdwg.mxu0
      %vm2689 = vcmask 7168
      %2690 = vst.msk [vmem:[%s315] sm:$0xff] %vm2689, %v2398
      %s2691 = scalar_lea.vmem %s315, 8
      %2692 = vst.msk [vmem:[%s2691] sm:$0xff] %vm2689, %v2686
      %s2693 = smul.u32 8, %s17
      %p2694 = scmp.lt.s32.totalorder %s2693, 15
      %s2695 = scalar_select %p2694, %s2693, 15
      %s2696 = smul.addr %s2695, 4
      %s2697 = scalar_lea.vmem %s4, %s2696
      %p2698 = scmp.lt.s32.totalorder %s17, 1
      %s2699 = scalar_select %p2698, %s17, 1
      %s2700 = smul.addr %s2699, 2
      %s2701 = smul.addr %s2700, 8
      %s2702 = scalar_lea.vmem %s5, %s2701
      // Predicated region
      $region37: #{deconv3d_bn_relu.2} parent=35 // pred_check
        %p2703 = pneg %p138
      $region38: #{deconv3d_bn_relu.2} parent=35 // pred_check_branch
        %2705 = sbr.rel (%p2703) target = $region40
      $region39: #{deconv3d_bn_relu.2} parent=35 // pred_region
        %s2706 = smul.u32 8, %s17
      $region40: #{deconv3d_bn_relu.2} parent=35 // pred_fallthru
        _
      // Predicated region
      $region41: #{deconv3d_bn_relu.2} parent=35 // pred_check
        %p2707 = pneg %p164
      $region42: #{deconv3d_bn_relu.2} parent=35 // pred_check_branch
        %2709 = sbr.rel (%p2707) target = $region44
      $region43: #{deconv3d_bn_relu.2} parent=35 // pred_region
        _
      $region44: #{deconv3d_bn_relu.2} parent=35 // pred_fallthru
        _
    $region36: #{deconv3d_bn_relu.2} parent=5 // pred_fallthru
      _
    %p2710 = scmp.le.s32.totalorder 2, %s12
    // Predicated region
    $region45: #{deconv3d_bn_relu.2} parent=5 // pred_check
      %p2711 = pneg %p2710
    $region46: #{deconv3d_bn_relu.2} parent=5 // pred_check_branch
      %2713 = sbr.rel (%p2711) target = $region48
    $region47: #{deconv3d_bn_relu.2} parent=5 // pred_region
      %s2714 = ssub.s32 %s12, 2
      // Predicated region
      $region49: #{deconv3d_bn_relu.2} parent=47 // pred_check
        %p2715 = pneg %p144
      $region50: #{deconv3d_bn_relu.2} parent=47 // pred_check_branch
        %2717 = sbr.rel (%p2715) target = $region52
      $region51: #{deconv3d_bn_relu.2} parent=47 // pred_region
        %s2718 = smul.u32 8, %s18
        %p2719 = scmp.lt.s32.totalorder %s2718, 15
        %s2720 = scalar_select %p2719, %s2718, 15
        %s2721 = smul.addr %s2720, 4
        %s2722 = scalar_lea.vmem %s4, %s2721
      $region52: #{deconv3d_bn_relu.2} parent=47 // pred_fallthru
        _
      // Predicated region
      $region53: #{deconv3d_bn_relu.2} parent=47 // pred_check
        %p2723 = pneg %p170
      $region54: #{deconv3d_bn_relu.2} parent=47 // pred_check_branch
        %2725 = sbr.rel (%p2723) target = $region56
      $region55: #{deconv3d_bn_relu.2} parent=47 // pred_region
        %p2726 = scmp.lt.s32.totalorder %s18, 1
        %s2727 = scalar_select %p2726, %s18, 1
        %s2728 = smul.addr %s2727, 2
        %s2729 = smul.addr %s2728, 8
        %s2730 = scalar_lea.vmem %s5, %s2729
      $region56: #{deconv3d_bn_relu.2} parent=47 // pred_fallthru
        _
    $region48: #{deconv3d_bn_relu.2} parent=5 // pred_fallthru
      _
  $region6: #{deconv3d_bn_relu.2} parent=0 // loop_footer
    %s16 = sadd.s32 1, %s12
  $region7: #{deconv3d_bn_relu.2} parent=0 // loop_footer_branch
    %11 = sbr.rel target = $region3
  $region8: #{deconv3d_bn_relu.2} parent=0 // loop_exit
    _

</llo_original>
